<compile_context>
chip_gen: v7x
topology: tpu7x:2x2x1
jax: 0.10.0
libtpu: 0.0.40
codegen_flags: <defaults>
</compile_context>

<pallas_src>
import numpy as np
import jax
import jax.numpy as jnp
from jax.experimental import pallas as pl
from jax.experimental.pallas import tpu as pltpu

CONV_DEFS = [(3, 1), (3, 2), (3, 3), (1, 1)]   # (kernel_size, dilation)
CONV_STRIDE = 4
NQ = sum(k for k, _ in CONV_DEFS)              # 10 conv taps total
LN_EPS = 1e-5
MXU_DTYPE = jnp.bfloat16                       # learned-weight MXU operand dtype


# --------------------- static operator construction (numpy) ---------------------

def _adaptive_pool_matrix(L, out):
    """[out, L] matrix replicating nn.AdaptiveAvgPool1d bin semantics."""
    P = np.zeros((out, L), np.float64)
    for i in range(out):
        s = (i * L) // out
        e = -((-(i + 1) * L) // out)        # ceil((i+1)*L/out)
        P[i, s:e] = 1.0 / (e - s)
    return P


def _overlap_selection(seq_len, shot_num, overlap_ratio):
    """0/1 matrix E [L_ov, seq_len]: seq_overlap = E @ seq (overlapSeqGenerate)."""
    sc = seq_len // shot_num
    of = max(int(overlap_ratio * sc), 1)
    L_ov = seq_len + of * shot_num
    E = np.zeros((L_ov, seq_len), np.float64)
    for i in range(shot_num):
        base = i * (sc + of)
        src = (list(range(seq_len - of, seq_len)) if i == 0
               else list(range(i * sc - of, i * sc)))
        for r, s in enumerate(src):
            E[base + r, s] = 1.0
        for r in range(sc):
            E[base + of + r, i * sc + r] = 1.0
    base = (sc + of) * shot_num
    for r, s in enumerate(range(sc * shot_num, seq_len)):
        E[base + r, s] = 1.0
    return E


def _conv_out_lengths(shot_channel):
    return [(shot_channel - d * (K - 1) - 1) // CONV_STRIDE + 1 for K, d in CONV_DEFS]


def _conv_pool_operators(shot_channel):
    """Q[q][c, p]: conv-tap selection (conv j, tap k) folded with pool2.

    pooled_branch = sum_q W[j,k] @ shots @ Q[q]  (+ bias via colsum).
    Also returns colsum[j, p] = sum over pool2 columns of conv-j's segment.
    """
    louts = _conv_out_lengths(shot_channel)
    L_cat = int(np.sum(louts))
    P2 = _adaptive_pool_matrix(L_cat, shot_channel)       # [SC, L_cat]
    offs = np.concatenate([[0], np.cumsum(louts)]).astype(int)
    qs = []
    colsum = np.zeros((len(CONV_DEFS), shot_channel), np.float64)
    for j, (K, d) in enumerate(CONV_DEFS):
        Lo = louts[j]
        seg = P2[:, offs[j]:offs[j] + Lo]                 # [SC, Lo]
        colsum[j] = seg.sum(axis=1)
        for k in range(K):
            q = np.zeros((shot_channel, shot_channel), np.float64)
            for l in range(Lo):
                q[CONV_STRIDE * l + k * d, :] = seg[:, l]
            qs.append(q)
    return np.stack(qs, axis=0), colsum                   # [NQ, SC, SC], [4, SC]


def _merge_matrix(seq_len, rows):
    """0/1 matrix M [seq_len, rows]: mergePooling(x) = M @ x."""
    split = seq_len // rows
    M = np.zeros((seq_len, rows), np.float64)
    for i in range(rows - 1):
        M[i * split:(i + 1) * split, i] = 1.0
    M[(rows - 1) * split:, rows - 1] = 1.0
    return M


# ------------------------------- fused group kernel -------------------------------

def _make_group_kernel(branch_channels, shot_channel, input_channel):
    offs = [0]
    for c in branch_channels:
        offs.append(offs[-1] + c)
    R = offs[-1]
    nb = len(branch_channels)

    def kernel(seq_ref, pseq_ref, q_ref, merge_ref,
               wup_ref, bup_ref, atall_ref, biaspool_ref,
               wdown_ref, bdown_ref, gamma_ref, beta_ref,
               o_ref, act_ref):
        f32 = jnp.float32
        l = pl.program_id(0)

        # Activation carried across the layer grid entirely in VMEM.
        @pl.when(l == 0)
        def _():
            act_ref[...] = seq_ref[...]

        seq = act_ref[...]                                                   # [S, IC]

        # overlapSeqGenerate + the three AdaptiveAvgPool1d's folded into one
        # exact f32 selection/pool operator (layer-invariant, resident).
        frames = jnp.dot(pseq_ref[...], seq, preferred_element_type=f32)     # [R, IC]

        # fc_up (learned, bf16 MXU operands, f32 accumulation).
        shots = jnp.dot(frames.astype(MXU_DTYPE), wup_ref[...],
                        preferred_element_type=f32) + bup_ref[...]           # [R, SC]

        # All conv taps of all branches folded into one block-structured matmul.
        v = jnp.dot(atall_ref[...], shots.astype(MXU_DTYPE),
                    preferred_element_type=f32)                              # [NQ*R, SC]

        # Conv tap placement + concat + pool2 as exact f32 operators Q[q]:
        # 10 accumulating M=R matmuls (was 30 tiny matmuls + 30 concats).
        pooled = biaspool_ref[...]                                           # [R, SC]
        for q in range(NQ):
            pooled = pooled + jnp.dot(v[q * R:(q + 1) * R, :], q_ref[q],
                                      preferred_element_type=f32)

        # All three fc_down's as ONE matmul: route each row to its branch's
        # weight block with a 0/1 row mask on a lane-wide slab.
        row = jax.lax.broadcasted_iota(jnp.int32, (R, 1), 0)
        parts = []
        for g in range(nb):
            m = ((row >= offs[g]) & (row < offs[g + 1])).astype(f32)
            parts.append(pooled * m)
        pw = jnp.concatenate(parts, axis=-1).astype(MXU_DTYPE)               # [R, nb*SC]
        h = jnp.dot(pw, wdown_ref[...], preferred_element_type=f32) + bdown_ref[...]

        # ReLU + LayerNorm (single fused epilogue over all branches).
        h = jnp.maximum(h, 0.0)
        mu = jnp.mean(h, axis=-1, keepdims=True)
        var = jnp.mean((h - mu) ** 2, axis=-1, keepdims=True)
        h = (h - mu) * jax.lax.rsqrt(var + LN_EPS) * gamma_ref[...] + beta_ref[...]

        # mergePooling (0/1 row-replication matmul) + residual add.
        merged = jnp.dot(merge_ref[...], h, preferred_element_type=f32)      # [S, IC]
        new_seq = seq + merged
        act_ref[...] = new_seq

        @pl.when(l == pl.num_programs(0) - 1)
        def _():
            o_ref[...] = new_seq

    return kernel


# --------------------------------- parameter prep ---------------------------------

def init_layer_params(key, shot_num, shot_channel, input_channel):
    params = {}
    keys = jax.random.split(key, 64)
    it = iter(keys)

    def nrm(shape, scale=0.02):
        return (scale * jax.random.normal(next(it), shape)).astype(jnp.float32)

    params["fc_up_w"] = nrm((input_channel, shot_channel))
    params["fc_up_b"] = nrm((shot_channel,))
    branch_channels = [shot_num, int(shot_num * 1.5), int(shot_num * 0.5)]
    for g, C in enumerate(branch_channels):
        for j, (K, _d) in enumerate(CONV_DEFS):
            params[f"conv_w_{g}_{j}"] = nrm((C, C, K))
            params[f"conv_b_{g}_{j}"] = nrm((C,))
        params[f"fc_down_w_{g}"] = nrm((shot_channel, input_channel))
        params[f"fc_down_b_{g}"] = nrm((input_channel,))
        params[f"ln_g_{g}"] = jnp.ones((input_channel,), jnp.float32)
        params[f"ln_b_{g}"] = jnp.zeros((input_channel,), jnp.float32)
    return params


def prepare_encoder(layer_params, shot_num, shot_channels, input_channel,
                    overlap_ratio, seq_len):
    """Fold all static index bookkeeping into dense operators and stack the
    learned per-layer weights along a leading layer axis.  Consecutive layers
    sharing shot_channel are grouped so each group runs as ONE gridded
    pallas_call (grid = number of layers in the group)."""
    branch_channels = [shot_num, int(shot_num * 1.5), int(shot_num * 0.5)]
    offs = np.concatenate([[0], np.cumsum(branch_channels)]).astype(int)
    R = int(offs[-1])

    # Layer-invariant structural operators (exact f32, DMA'd once per call).
    E = _overlap_selection(seq_len, shot_num, overlap_ratio)          # [L_ov, S]
    L_ov = E.shape[0]
    P_all = np.concatenate(
        [_adaptive_pool_matrix(L_ov, C) for C in branch_channels], axis=0)
    pseq = jnp.asarray((P_all @ E).astype(np.float32))                # [R, S]
    merge = jnp.asarray(_merge_matrix(seq_len, R).astype(np.float32)) # [S, R]

    # Group consecutive layers with identical shot_channel.
    groups, i = [], 0
    while i < len(shot_channels):
        j = i
        while j < len(shot_channels) and shot_channels[j] == shot_channels[i]:
            j += 1
        groups.append((i, j))
        i = j

    preps = []
    for (lo_l, hi_l) in groups:
        sc = shot_channels[lo_l]
        Q, colsum = _conv_pool_operators(sc)                          # [NQ,SC,SC],[4,SC]
        colsum_j = jnp.asarray(colsum.astype(np.float32))
        wup, bup, atall, biaspool = [], [], [], []
        wdown, bdown, gamma, beta = [], [], [], []
        for li in range(lo_l, hi_l):
            p = layer_params[li]
            wup.append(p["fc_up_w"].astype(MXU_DTYPE))
            bup.append(p["fc_up_b"].reshape(1, sc))

            # Block-structured conv-tap operator: A[q*R+offs_g : ..., offs_g : ...]
            # holds conv weight tap k of conv j of branch g (q = flat (j,k) index).
            A = np.zeros((NQ * R, R), np.float32)
            for g, C in enumerate(branch_channels):
                o = int(offs[g])
                qi = 0
                for j, (K, _d) in enumerate(CONV_DEFS):
                    w = np.asarray(p[f"conv_w_{g}_{j}"], np.float32)  # [C, C, K]
                    for k in range(K):
                        A[qi * R + o:qi * R + o + C, o:o + C] = w[:, :, k]
                        qi += 1
            atall.append(jnp.asarray(A).astype(MXU_DTYPE))

            bp = []
            for g, C in enumerate(branch_channels):
                bstack = jnp.stack([p[f"conv_b_{g}_{j}"]
                                    for j in range(len(CONV_DEFS))], axis=1)  # [C,4]
                bp.append(bstack @ colsum_j)                                  # [C,SC]
            biaspool.append(jnp.concatenate(bp, axis=0))                      # [R,SC]

            wdown.append(jnp.concatenate(
                [p[f"fc_down_w_{g}"] for g in range(len(branch_channels))],
                axis=0).astype(MXU_DTYPE))                                    # [nb*SC,IC]
            bdown.append(jnp.concatenate(
                [jnp.broadcast_to(p[f"fc_down_b_{g}"], (C, input_channel))
                 for g, C in enumerate(branch_channels)], axis=0))            # [R,IC]
            gamma.append(jnp.concatenate(
                [jnp.broadcast_to(p[f"ln_g_{g}"], (C, input_channel))
                 for g, C in enumerate(branch_channels)], axis=0))
            beta.append(jnp.concatenate(
                [jnp.broadcast_to(p[f"ln_b_{g}"], (C, input_channel))
                 for g, C in enumerate(branch_channels)], axis=0))

        preps.append({
            "branch_channels": branch_channels,
            "shot_channel": sc,
            "num_layers": hi_l - lo_l,
            "pseq": pseq, "merge": merge,
            "q": jnp.asarray(Q.astype(np.float32)),
            "wup": jnp.stack(wup), "bup": jnp.stack(bup),
            "atall": jnp.stack(atall), "biaspool": jnp.stack(biaspool),
            "wdown": jnp.stack(wdown), "bdown": jnp.stack(bdown),
            "gamma": jnp.stack(gamma), "beta": jnp.stack(beta),
        })
    return preps


# ----------------------------------- forward -----------------------------------

def _run_group(seq, prep):
    S, IC = seq.shape
    SC = prep["shot_channel"]
    bc = prep["branch_channels"]
    R = sum(bc)
    L = prep["num_layers"]
    nb = len(bc)
    kernel = _make_group_kernel(bc, SC, IC)

    def fixed(*shape):           # layer-invariant: DMA'd once, VMEM-resident
        return pl.BlockSpec(shape, lambda l, _s=shape: (0,) * len(_s))

    def per_layer(*shape):       # per-layer weights: pipelined across the grid
        return pl.BlockSpec((None,) + shape,
                            lambda l, _s=shape: (l,) + (0,) * len(_s))

    grid_spec = pltpu.PrefetchScalarGridSpec(
        num_scalar_prefetch=0,
        grid=(L,),
        in_specs=[
            fixed(S, IC),                 # seq (only read at l == 0)
            fixed(R, S),                  # pseq
            fixed(NQ, SC, SC),            # q
            fixed(S, R),                  # merge
            per_layer(IC, SC),            # wup
            per_layer(1, SC),             # bup
            per_layer(NQ * R, R),         # atall
            per_layer(R, SC),             # biaspool
            per_layer(nb * SC, IC),       # wdown
            per_layer(R, IC),             # bdown
            per_layer(R, IC),             # gamma
            per_layer(R, IC),             # beta
        ],
        out_specs=pl.BlockSpec((S, IC), lambda l: (0, 0)),
        scratch_shapes=[pltpu.VMEM((S, IC), jnp.float32)],
    )
    return pl.pallas_call(
        kernel,
        out_shape=jax.ShapeDtypeStruct((S, IC), jnp.float32),
        grid_spec=grid_spec,
        compiler_params=pltpu.CompilerParams(
            dimension_semantics=("arbitrary",)),
    )(seq, prep["pseq"], prep["q"], prep["merge"],
      prep["wup"], prep["bup"], prep["atall"], prep["biaspool"],
      prep["wdown"], prep["bdown"], prep["gamma"], prep["beta"])


def shot_level_encoder_overlap(x, preps):
    """x: [1, S, IC] -> [1, S, IC].  One fused gridded pallas_call per group of
    layers sharing shot_channel (a single call when channels are uniform)."""
    seq = x[0]
    for prep in preps:
        seq = _run_group(seq, prep)
    return seq[None]


# --------------- plain-JAX reference (op-for-op restatement, for check) ---------------

def _reference_layer(seq, params, shot_num, shot_channel, input_channel,
                     overlap_ratio):
    seq0 = seq
    S = seq.shape[1]
    sc = S // shot_num
    of = max(int(overlap_ratio * sc), 1)
    segs = []
    for i in range(shot_num):
        if i == 0:
            segs.append(seq[:, S - of:, :])
        else:
            segs.append(seq[:, i * sc - of:i * sc, :])
        segs.append(seq[:, i * sc:(i + 1) * sc, :])
    segs.append(seq[:, sc * shot_num:, :])
    sov = jnp.concatenate(segs, axis=1)[0]
    up = sov @ params["fc_up_w"] + params["fc_up_b"]
    L_ov = up.shape[0]
    branch_channels = [shot_num, int(shot_num * 1.5), int(shot_num * 0.5)]
    louts = _conv_out_lengths(shot_channel)
    outs = []
    for g, C in enumerate(branch_channels):
        P1 = jnp.asarray(_adaptive_pool_matrix(L_ov, C).astype(np.float32))
        shots = P1 @ up
        convs = []
        for j, (K, d) in enumerate(CONV_DEFS):
            w = params[f"conv_w_{g}_{j}"]
            b = params[f"conv_b_{g}_{j}"]
            Lo = louts[j]
            taps = jnp.stack(
                [shots[:, k * d:k * d + CONV_STRIDE * (Lo - 1) + 1:CONV_STRIDE]
                 for k in range(K)], axis=0)                          # [K, C, Lo]
            convs.append(jnp.einsum('oik,kil->ol', w, taps) + b[:, None])
        cat = jnp.concatenate(convs, axis=1)
        P2 = jnp.asarray(
            _adaptive_pool_matrix(cat.shape[1], shot_channel).astype(np.float32))
        pooled = cat @ P2.T
        h = pooled @ params[f"fc_down_w_{g}"] + params[f"fc_down_b_{g}"]
        h = jnp.maximum(h, 0.0)
        mu = jnp.mean(h, axis=-1, keepdims=True)
        var = jnp.mean((h - mu) ** 2, axis=-1, keepdims=True)
        h = (h - mu) * jax.lax.rsqrt(var + LN_EPS) * params[f"ln_g_{g}"] + params[f"ln_b_{g}"]
        outs.append(h)
    cross = jnp.concatenate(outs, axis=0)
    R = cross.shape[0]
    split = S // R
    idx = np.minimum(np.arange(S) // split, R - 1)
    merged = cross[idx]
    return seq0 + merged[None]


def _reference_encoder(x, layer_params, shot_num, shot_channels, input_channel,
                       overlap_ratio):
    for params, sch in zip(layer_params, shot_channels):
        x = _reference_layer(x, params, shot_num, sch, input_channel,
                             overlap_ratio)
    return x


def _quantize_learned(params):
    """bf16-roundtrip the learned matmul weights (same rounding the kernel uses)
    so the reference comparison isolates kernel math from the deliberate
    mixed-precision choice.  Biases / LN / pooling operators stay exact f32."""
    out = dict(params)
    for k, v in params.items():
        if k.startswith(("fc_up_w", "fc_down_w", "conv_w")):
            out[k] = v.astype(jnp.bfloat16).astype(jnp.float32)
    return out


# ------------------------------------- main -------------------------------------

if __name__ == "__main__":
    layer_nums = 2
    shot_num = 16
    shot_channel = [128, 128]
    input_channel = 128
    overlap_ratio = 0.25
    seq_len = 96

    key = jax.random.PRNGKey(0)
    kx, kp = jax.random.split(key)
    x = jax.random.normal(kx, (1, seq_len, input_channel), dtype=jnp.float32)
    layer_params = [
        init_layer_params(jax.random.fold_in(kp, i), shot_num, shot_channel[i],
                          input_channel)
        for i in range(layer_nums)
    ]
    preps = prepare_encoder(layer_params, shot_num, shot_channel, input_channel,
                            overlap_ratio, seq_len)

    out = jax.block_until_ready(shot_level_encoder_overlap(x, preps))
    assert out.shape == (1, seq_len, input_channel), out.shape
    assert bool(jnp.all(jnp.isfinite(out)))

    # Validate against a plain-JAX op-for-op restatement of the PyTorch forward,
    # using the same bf16-rounded learned weights the kernel consumes.
    qparams = [_quantize_learned(p) for p in layer_params]
    with jax.default_matmul_precision("highest"):
        ref = _reference_encoder(x, qparams, shot_num, shot_channel,
                                 input_channel, overlap_ratio)
    err = float(jnp.max(jnp.abs(out - ref)))
    tol = 0.15 * layer_nums   # dominated by bf16 activation casts amplified by LayerNorm
    assert err < tol, f"max abs err {err} exceeds {tol}"
    print("KERNEL_OK")
</pallas_src>

<mosaic_0001>
module attributes {stable_mosaic.version = 11 : i64} {
  func.func @kernel(%arg0: i32, %arg1: memref<96x128xf32, #tpu.memory_space<vmem>>, %arg2: memref<48x96xf32, #tpu.memory_space<vmem>>, %arg3: memref<10x128x128xf32, #tpu.memory_space<vmem>>, %arg4: memref<96x48xf32, #tpu.memory_space<vmem>>, %arg5: memref<1x128x128xbf16, #tpu.memory_space<vmem>>, %arg6: memref<1x1x128xf32, #tpu.memory_space<vmem>>, %arg7: memref<1x480x48xbf16, #tpu.memory_space<vmem>>, %arg8: memref<1x48x128xf32, #tpu.memory_space<vmem>>, %arg9: memref<1x384x128xbf16, #tpu.memory_space<vmem>>, %arg10: memref<1x48x128xf32, #tpu.memory_space<vmem>>, %arg11: memref<1x48x128xf32, #tpu.memory_space<vmem>>, %arg12: memref<1x48x128xf32, #tpu.memory_space<vmem>>, %arg13: memref<96x128xf32, #tpu.memory_space<vmem>>, %arg14: memref<96x128xf32, #tpu.memory_space<vmem>>) attributes {dimension_semantics = [#tpu.dimension_semantics<arbitrary>], iteration_bounds = array<i64: 2>, scalar_prefetch = 0 : i64, scratch_operands = 1 : i64, tpu.core_type = #tpu.core_type<tc>, window_params = [{pipeline_mode = #tpu.pipeline_mode<synchronous>, transform_indices = @transform_0, window_bounds = array<i64: 96, 128>}, {pipeline_mode = #tpu.pipeline_mode<synchronous>, transform_indices = @transform_1, window_bounds = array<i64: 48, 96>}, {pipeline_mode = #tpu.pipeline_mode<synchronous>, transform_indices = @transform_2, window_bounds = array<i64: 10, 128, 128>}, {pipeline_mode = #tpu.pipeline_mode<synchronous>, transform_indices = @transform_3, window_bounds = array<i64: 96, 48>}, {transform_indices = @transform_4, window_bounds = array<i64: 1, 128, 128>}, {transform_indices = @transform_5, window_bounds = array<i64: 1, 1, 128>}, {transform_indices = @transform_6, window_bounds = array<i64: 1, 480, 48>}, {transform_indices = @transform_7, window_bounds = array<i64: 1, 48, 128>}, {transform_indices = @transform_8, window_bounds = array<i64: 1, 384, 128>}, {transform_indices = @transform_9, window_bounds = array<i64: 1, 48, 128>}, {transform_indices = @transform_10, window_bounds = array<i64: 1, 48, 128>}, {transform_indices = @transform_11, window_bounds = array<i64: 1, 48, 128>}, {pipeline_mode = #tpu.pipeline_mode<synchronous>, transform_indices = @transform_12, window_bounds = array<i64: 96, 128>}]} {
    %c0_i32 = arith.constant 0 : i32
    %0 = arith.cmpi eq, %arg0, %c0_i32 : i32
    %1 = arith.extui %0 : i1 to i32
    %c0_i32_0 = arith.constant 0 : i32
    %2 = arith.cmpi ne, %1, %c0_i32_0 : i32
    scf.if %2 {
      %c0_77 = arith.constant 0 : index
      %c0_78 = arith.constant 0 : index
      %139 = vector.load %arg1[%c0_77, %c0_78] : memref<96x128xf32, #tpu.memory_space<vmem>>, vector<96x128xf32>
      %c0_79 = arith.constant 0 : index
      %c0_80 = arith.constant 0 : index
      %140 = vector.load %arg14[%c0_79, %c0_80] : memref<96x128xf32, #tpu.memory_space<vmem>>, vector<96x128xf32>
      tpu.vector_store %arg14[%c0_79, %c0_80], %139 {strides = array<i32>} : memref<96x128xf32, #tpu.memory_space<vmem>>, vector<96x128xf32>,
    } else {
    }
    %c0 = arith.constant 0 : index
    %c0_1 = arith.constant 0 : index
    %3 = vector.load %arg14[%c0, %c0_1] : memref<96x128xf32, #tpu.memory_space<vmem>>, vector<96x128xf32>
    %c0_2 = arith.constant 0 : index
    %c0_3 = arith.constant 0 : index
    %4 = vector.load %arg2[%c0_2, %c0_3] : memref<48x96xf32, #tpu.memory_space<vmem>>, vector<48x96xf32>
    %cst = arith.constant dense<0.000000e+00> : vector<48x128xf32>
    %5 = tpu.matmul %4, %3, %cst {dimension_numbers = #tpu.dot_dimension_numbers<[1], [0], [0], [1], [0, 0, 1, 1], [], []>} : vector<48x96xf32>, vector<96x128xf32>, vector<48x128xf32> -> vector<48x128xf32>
    %6 = arith.truncf %5 : vector<48x128xf32> to vector<48x128xbf16>
    %c0_4 = arith.constant 0 : index
    %c0_5 = arith.constant 0 : index
    %c0_6 = arith.constant 0 : index
    %7 = vector.load %arg5[%c0_4, %c0_5, %c0_6] : memref<1x128x128xbf16, #tpu.memory_space<vmem>>, vector<1x128x128xbf16>
    %8 = vector.shape_cast %7 : vector<1x128x128xbf16> to vector<128x128xbf16>
    %cst_7 = arith.constant dense<0.000000e+00> : vector<48x128xf32>
    %9 = tpu.matmul %6, %8, %cst_7 {dimension_numbers = #tpu.dot_dimension_numbers<[1], [0], [0], [1], [0, 0, 1, 1], [], []>} : vector<48x128xbf16>, vector<128x128xbf16>, vector<48x128xf32> -> vector<48x128xf32>
    %c0_8 = arith.constant 0 : index
    %c0_9 = arith.constant 0 : index
    %c0_10 = arith.constant 0 : index
    %10 = vector.load %arg6[%c0_8, %c0_9, %c0_10] : memref<1x1x128xf32, #tpu.memory_space<vmem>>, vector<1x1x128xf32>
    %11 = vector.shape_cast %10 : vector<1x1x128xf32> to vector<1x128xf32>
    %12 = vector.broadcast %11 : vector<1x128xf32> to vector<48x128xf32>
    %13 = arith.addf %9, %12 : vector<48x128xf32>
    %c0_11 = arith.constant 0 : index
    %c0_12 = arith.constant 0 : index
    %c0_13 = arith.constant 0 : index
    %14 = vector.load %arg7[%c0_11, %c0_12, %c0_13] : memref<1x480x48xbf16, #tpu.memory_space<vmem>>, vector<1x480x48xbf16>
    %15 = vector.shape_cast %14 : vector<1x480x48xbf16> to vector<480x48xbf16>
    %16 = arith.truncf %13 : vector<48x128xf32> to vector<48x128xbf16>
    %cst_14 = arith.constant dense<0.000000e+00> : vector<480x128xf32>
    %17 = tpu.matmul %15, %16, %cst_14 {dimension_numbers = #tpu.dot_dimension_numbers<[1], [0], [0], [1], [0, 0, 1, 1], [], []>} : vector<480x48xbf16>, vector<48x128xbf16>, vector<480x128xf32> -> vector<480x128xf32>
    %c0_15 = arith.constant 0 : index
    %c0_16 = arith.constant 0 : index
    %c0_17 = arith.constant 0 : index
    %18 = vector.load %arg8[%c0_15, %c0_16, %c0_17] : memref<1x48x128xf32, #tpu.memory_space<vmem>>, vector<1x48x128xf32>
    %19 = vector.shape_cast %18 : vector<1x48x128xf32> to vector<48x128xf32>
    %20 = vector.extract_strided_slice %17 {offsets = [0, 0], sizes = [48, 128], strides = [1, 1]} : vector<480x128xf32> to vector<48x128xf32>
    %c0_18 = arith.constant 0 : index
    %c0_19 = arith.constant 0 : index
    %c0_20 = arith.constant 0 : index
    %21 = vector.load %arg3[%c0_18, %c0_19, %c0_20] : memref<10x128x128xf32, #tpu.memory_space<vmem>>, vector<1x128x128xf32>
    %22 = vector.shape_cast %21 : vector<1x128x128xf32> to vector<128x128xf32>
    %cst_21 = arith.constant dense<0.000000e+00> : vector<48x128xf32>
    %23 = tpu.matmul %20, %22, %cst_21 {dimension_numbers = #tpu.dot_dimension_numbers<[1], [0], [0], [1], [0, 0, 1, 1], [], []>} : vector<48x128xf32>, vector<128x128xf32>, vector<48x128xf32> -> vector<48x128xf32>
    %24 = arith.addf %19, %23 : vector<48x128xf32>
    %25 = vector.extract_strided_slice %17 {offsets = [48, 0], sizes = [48, 128], strides = [1, 1]} : vector<480x128xf32> to vector<48x128xf32>
    %c1 = arith.constant 1 : index
    %c0_22 = arith.constant 0 : index
    %c0_23 = arith.constant 0 : index
    %26 = vector.load %arg3[%c1, %c0_22, %c0_23] : memref<10x128x128xf32, #tpu.memory_space<vmem>>, vector<1x128x128xf32>
    %27 = vector.shape_cast %26 : vector<1x128x128xf32> to vector<128x128xf32>
    %cst_24 = arith.constant dense<0.000000e+00> : vector<48x128xf32>
    %28 = tpu.matmul %25, %27, %cst_24 {dimension_numbers = #tpu.dot_dimension_numbers<[1], [0], [0], [1], [0, 0, 1, 1], [], []>} : vector<48x128xf32>, vector<128x128xf32>, vector<48x128xf32> -> vector<48x128xf32>
    %29 = arith.addf %24, %28 : vector<48x128xf32>
    %30 = vector.extract_strided_slice %17 {offsets = [96, 0], sizes = [48, 128], strides = [1, 1]} : vector<480x128xf32> to vector<48x128xf32>
    %c2 = arith.constant 2 : index
    %c0_25 = arith.constant 0 : index
    %c0_26 = arith.constant 0 : index
    %31 = vector.load %arg3[%c2, %c0_25, %c0_26] : memref<10x128x128xf32, #tpu.memory_space<vmem>>, vector<1x128x128xf32>
    %32 = vector.shape_cast %31 : vector<1x128x128xf32> to vector<128x128xf32>
    %cst_27 = arith.constant dense<0.000000e+00> : vector<48x128xf32>
    %33 = tpu.matmul %30, %32, %cst_27 {dimension_numbers = #tpu.dot_dimension_numbers<[1], [0], [0], [1], [0, 0, 1, 1], [], []>} : vector<48x128xf32>, vector<128x128xf32>, vector<48x128xf32> -> vector<48x128xf32>
    %34 = arith.addf %29, %33 : vector<48x128xf32>
    %35 = vector.extract_strided_slice %17 {offsets = [144, 0], sizes = [48, 128], strides = [1, 1]} : vector<480x128xf32> to vector<48x128xf32>
    %c3 = arith.constant 3 : index
    %c0_28 = arith.constant 0 : index
    %c0_29 = arith.constant 0 : index
    %36 = vector.load %arg3[%c3, %c0_28, %c0_29] : memref<10x128x128xf32, #tpu.memory_space<vmem>>, vector<1x128x128xf32>
    %37 = vector.shape_cast %36 : vector<1x128x128xf32> to vector<128x128xf32>
    %cst_30 = arith.constant dense<0.000000e+00> : vector<48x128xf32>
    %38 = tpu.matmul %35, %37, %cst_30 {dimension_numbers = #tpu.dot_dimension_numbers<[1], [0], [0], [1], [0, 0, 1, 1], [], []>} : vector<48x128xf32>, vector<128x128xf32>, vector<48x128xf32> -> vector<48x128xf32>
    %39 = arith.addf %34, %38 : vector<48x128xf32>
    %40 = vector.extract_strided_slice %17 {offsets = [192, 0], sizes = [48, 128], strides = [1, 1]} : vector<480x128xf32> to vector<48x128xf32>
    %c4 = arith.constant 4 : index
    %c0_31 = arith.constant 0 : index
    %c0_32 = arith.constant 0 : index
    %41 = vector.load %arg3[%c4, %c0_31, %c0_32] : memref<10x128x128xf32, #tpu.memory_space<vmem>>, vector<1x128x128xf32>
    %42 = vector.shape_cast %41 : vector<1x128x128xf32> to vector<128x128xf32>
    %cst_33 = arith.constant dense<0.000000e+00> : vector<48x128xf32>
    %43 = tpu.matmul %40, %42, %cst_33 {dimension_numbers = #tpu.dot_dimension_numbers<[1], [0], [0], [1], [0, 0, 1, 1], [], []>} : vector<48x128xf32>, vector<128x128xf32>, vector<48x128xf32> -> vector<48x128xf32>
    %44 = arith.addf %39, %43 : vector<48x128xf32>
    %45 = vector.extract_strided_slice %17 {offsets = [240, 0], sizes = [48, 128], strides = [1, 1]} : vector<480x128xf32> to vector<48x128xf32>
    %c5 = arith.constant 5 : index
    %c0_34 = arith.constant 0 : index
    %c0_35 = arith.constant 0 : index
    %46 = vector.load %arg3[%c5, %c0_34, %c0_35] : memref<10x128x128xf32, #tpu.memory_space<vmem>>, vector<1x128x128xf32>
    %47 = vector.shape_cast %46 : vector<1x128x128xf32> to vector<128x128xf32>
    %cst_36 = arith.constant dense<0.000000e+00> : vector<48x128xf32>
    %48 = tpu.matmul %45, %47, %cst_36 {dimension_numbers = #tpu.dot_dimension_numbers<[1], [0], [0], [1], [0, 0, 1, 1], [], []>} : vector<48x128xf32>, vector<128x128xf32>, vector<48x128xf32> -> vector<48x128xf32>
    %49 = arith.addf %44, %48 : vector<48x128xf32>
    %50 = vector.extract_strided_slice %17 {offsets = [288, 0], sizes = [48, 128], strides = [1, 1]} : vector<480x128xf32> to vector<48x128xf32>
    %c6 = arith.constant 6 : index
    %c0_37 = arith.constant 0 : index
    %c0_38 = arith.constant 0 : index
    %51 = vector.load %arg3[%c6, %c0_37, %c0_38] : memref<10x128x128xf32, #tpu.memory_space<vmem>>, vector<1x128x128xf32>
    %52 = vector.shape_cast %51 : vector<1x128x128xf32> to vector<128x128xf32>
    %cst_39 = arith.constant dense<0.000000e+00> : vector<48x128xf32>
    %53 = tpu.matmul %50, %52, %cst_39 {dimension_numbers = #tpu.dot_dimension_numbers<[1], [0], [0], [1], [0, 0, 1, 1], [], []>} : vector<48x128xf32>, vector<128x128xf32>, vector<48x128xf32> -> vector<48x128xf32>
    %54 = arith.addf %49, %53 : vector<48x128xf32>
    %55 = vector.extract_strided_slice %17 {offsets = [336, 0], sizes = [48, 128], strides = [1, 1]} : vector<480x128xf32> to vector<48x128xf32>
    %c7 = arith.constant 7 : index
    %c0_40 = arith.constant 0 : index
    %c0_41 = arith.constant 0 : index
    %56 = vector.load %arg3[%c7, %c0_40, %c0_41] : memref<10x128x128xf32, #tpu.memory_space<vmem>>, vector<1x128x128xf32>
    %57 = vector.shape_cast %56 : vector<1x128x128xf32> to vector<128x128xf32>
    %cst_42 = arith.constant dense<0.000000e+00> : vector<48x128xf32>
    %58 = tpu.matmul %55, %57, %cst_42 {dimension_numbers = #tpu.dot_dimension_numbers<[1], [0], [0], [1], [0, 0, 1, 1], [], []>} : vector<48x128xf32>, vector<128x128xf32>, vector<48x128xf32> -> vector<48x128xf32>
    %59 = arith.addf %54, %58 : vector<48x128xf32>
    %60 = vector.extract_strided_slice %17 {offsets = [384, 0], sizes = [48, 128], strides = [1, 1]} : vector<480x128xf32> to vector<48x128xf32>
    %c8 = arith.constant 8 : index
    %c0_43 = arith.constant 0 : index
    %c0_44 = arith.constant 0 : index
    %61 = vector.load %arg3[%c8, %c0_43, %c0_44] : memref<10x128x128xf32, #tpu.memory_space<vmem>>, vector<1x128x128xf32>
    %62 = vector.shape_cast %61 : vector<1x128x128xf32> to vector<128x128xf32>
    %cst_45 = arith.constant dense<0.000000e+00> : vector<48x128xf32>
    %63 = tpu.matmul %60, %62, %cst_45 {dimension_numbers = #tpu.dot_dimension_numbers<[1], [0], [0], [1], [0, 0, 1, 1], [], []>} : vector<48x128xf32>, vector<128x128xf32>, vector<48x128xf32> -> vector<48x128xf32>
    %64 = arith.addf %59, %63 : vector<48x128xf32>
    %65 = vector.extract_strided_slice %17 {offsets = [432, 0], sizes = [48, 128], strides = [1, 1]} : vector<480x128xf32> to vector<48x128xf32>
    %c9 = arith.constant 9 : index
    %c0_46 = arith.constant 0 : index
    %c0_47 = arith.constant 0 : index
    %66 = vector.load %arg3[%c9, %c0_46, %c0_47] : memref<10x128x128xf32, #tpu.memory_space<vmem>>, vector<1x128x128xf32>
    %67 = vector.shape_cast %66 : vector<1x128x128xf32> to vector<128x128xf32>
    %cst_48 = arith.constant dense<0.000000e+00> : vector<48x128xf32>
    %68 = tpu.matmul %65, %67, %cst_48 {dimension_numbers = #tpu.dot_dimension_numbers<[1], [0], [0], [1], [0, 0, 1, 1], [], []>} : vector<48x128xf32>, vector<128x128xf32>, vector<48x128xf32> -> vector<48x128xf32>
    %69 = arith.addf %64, %68 : vector<48x128xf32>
    %70 = tpu.iota {dimensions = array<i32: 0>} : vector<48x1xi32>
    %c0_i32_49 = arith.constant 0 : i32
    %71 = vector.broadcast %c0_i32_49 : i32 to vector<48x1xi32>
    %72 = arith.cmpi sge, %70, %71 : vector<48x1xi32>
    %c16_i32 = arith.constant 16 : i32
    %73 = vector.broadcast %c16_i32 : i32 to vector<48x1xi32>
    %74 = arith.cmpi slt, %70, %73 : vector<48x1xi32>
    %75 = arith.andi %72, %74 : vector<48x1xi1>
    %76 = arith.extui %75 : vector<48x1xi1> to vector<48x1xi32>
    %77 = arith.sitofp %76 : vector<48x1xi32> to vector<48x1xf32>
    %78 = vector.broadcast %77 : vector<48x1xf32> to vector<48x128xf32>
    %79 = arith.mulf %69, %78 : vector<48x128xf32>
    %c16_i32_50 = arith.constant 16 : i32
    %80 = vector.broadcast %c16_i32_50 : i32 to vector<48x1xi32>
    %81 = arith.cmpi sge, %70, %80 : vector<48x1xi32>
    %c40_i32 = arith.constant 40 : i32
    %82 = vector.broadcast %c40_i32 : i32 to vector<48x1xi32>
    %83 = arith.cmpi slt, %70, %82 : vector<48x1xi32>
    %84 = arith.andi %81, %83 : vector<48x1xi1>
    %85 = arith.extui %84 : vector<48x1xi1> to vector<48x1xi32>
    %86 = arith.sitofp %85 : vector<48x1xi32> to vector<48x1xf32>
    %87 = vector.broadcast %86 : vector<48x1xf32> to vector<48x128xf32>
    %88 = arith.mulf %69, %87 : vector<48x128xf32>
    %c40_i32_51 = arith.constant 40 : i32
    %89 = vector.broadcast %c40_i32_51 : i32 to vector<48x1xi32>
    %90 = arith.cmpi sge, %70, %89 : vector<48x1xi32>
    %c48_i32 = arith.constant 48 : i32
    %91 = vector.broadcast %c48_i32 : i32 to vector<48x1xi32>
    %92 = arith.cmpi slt, %70, %91 : vector<48x1xi32>
    %93 = arith.andi %90, %92 : vector<48x1xi1>
    %94 = arith.extui %93 : vector<48x1xi1> to vector<48x1xi32>
    %95 = arith.sitofp %94 : vector<48x1xi32> to vector<48x1xf32>
    %96 = vector.broadcast %95 : vector<48x1xf32> to vector<48x128xf32>
    %97 = arith.mulf %69, %96 : vector<48x128xf32>
    %98 = tpu.concatenate %79, %88, %97 in 1 : vector<48x128xf32>, vector<48x128xf32>, vector<48x128xf32> -> vector<48x384xf32>
    %99 = arith.truncf %98 : vector<48x384xf32> to vector<48x384xbf16>
    %c0_52 = arith.constant 0 : index
    %c0_53 = arith.constant 0 : index
    %c0_54 = arith.constant 0 : index
    %100 = vector.load %arg9[%c0_52, %c0_53, %c0_54] : memref<1x384x128xbf16, #tpu.memory_space<vmem>>, vector<1x384x128xbf16>
    %101 = vector.shape_cast %100 : vector<1x384x128xbf16> to vector<384x128xbf16>
    %cst_55 = arith.constant dense<0.000000e+00> : vector<48x128xf32>
    %102 = tpu.matmul %99, %101, %cst_55 {dimension_numbers = #tpu.dot_dimension_numbers<[1], [0], [0], [1], [0, 0, 1, 1], [], []>} : vector<48x384xbf16>, vector<384x128xbf16>, vector<48x128xf32> -> vector<48x128xf32>
    %c0_56 = arith.constant 0 : index
    %c0_57 = arith.constant 0 : index
    %c0_58 = arith.constant 0 : index
    %103 = vector.load %arg10[%c0_56, %c0_57, %c0_58] : memref<1x48x128xf32, #tpu.memory_space<vmem>>, vector<1x48x128xf32>
    %104 = vector.shape_cast %103 : vector<1x48x128xf32> to vector<48x128xf32>
    %105 = arith.addf %102, %104 : vector<48x128xf32>
    %cst_59 = arith.constant 0.000000e+00 : f32
    %106 = vector.broadcast %cst_59 : f32 to vector<48x128xf32>
    %107 = arith.maximumf %105, %106 : vector<48x128xf32>
    %cst_60 = arith.constant dense<0.000000e+00> : vector<48xf32>
    %108 = vector.multi_reduction <add>, %107, %cst_60 [1] : vector<48x128xf32> to vector<48xf32>
    %109 = vector.shape_cast %108 : vector<48xf32> to vector<48x1xf32>
    %cst_61 = arith.constant 1.280000e+02 : f32
    %110 = vector.broadcast %cst_61 : f32 to vector<48x1xf32>
    %111 = arith.divf %109, %110 : vector<48x1xf32>
    %112 = vector.broadcast %111 : vector<48x1xf32> to vector<48x128xf32>
    %113 = arith.subf %107, %112 : vector<48x128xf32>
    %114 = arith.mulf %113, %113 : vector<48x128xf32>
    %cst_62 = arith.constant dense<0.000000e+00> : vector<48xf32>
    %115 = vector.multi_reduction <add>, %114, %cst_62 [1] : vector<48x128xf32> to vector<48xf32>
    %116 = vector.shape_cast %115 : vector<48xf32> to vector<48x1xf32>
    %cst_63 = arith.constant 1.280000e+02 : f32
    %117 = vector.broadcast %cst_63 : f32 to vector<48x1xf32>
    %118 = arith.divf %116, %117 : vector<48x1xf32>
    %119 = vector.broadcast %111 : vector<48x1xf32> to vector<48x128xf32>
    %120 = arith.subf %107, %119 : vector<48x128xf32>
    %cst_64 = arith.constant 9.99999974E-6 : f32
    %121 = vector.broadcast %cst_64 : f32 to vector<48x1xf32>
    %122 = arith.addf %118, %121 : vector<48x1xf32>
    %123 = math.rsqrt %122 : vector<48x1xf32>
    %124 = vector.broadcast %123 : vector<48x1xf32> to vector<48x128xf32>
    %125 = arith.mulf %120, %124 : vector<48x128xf32>
    %c0_65 = arith.constant 0 : index
    %c0_66 = arith.constant 0 : index
    %c0_67 = arith.constant 0 : index
    %126 = vector.load %arg11[%c0_65, %c0_66, %c0_67] : memref<1x48x128xf32, #tpu.memory_space<vmem>>, vector<1x48x128xf32>
    %127 = vector.shape_cast %126 : vector<1x48x128xf32> to vector<48x128xf32>
    %128 = arith.mulf %125, %127 : vector<48x128xf32>
    %c0_68 = arith.constant 0 : index
    %c0_69 = arith.constant 0 : index
    %c0_70 = arith.constant 0 : index
    %129 = vector.load %arg12[%c0_68, %c0_69, %c0_70] : memref<1x48x128xf32, #tpu.memory_space<vmem>>, vector<1x48x128xf32>
    %130 = vector.shape_cast %129 : vector<1x48x128xf32> to vector<48x128xf32>
    %131 = arith.addf %128, %130 : vector<48x128xf32>
    %c0_71 = arith.constant 0 : index
    %c0_72 = arith.constant 0 : index
    %132 = vector.load %arg4[%c0_71, %c0_72] : memref<96x48xf32, #tpu.memory_space<vmem>>, vector<96x48xf32>
    %cst_73 = arith.constant dense<0.000000e+00> : vector<96x128xf32>
    %133 = tpu.matmul %132, %131, %cst_73 {dimension_numbers = #tpu.dot_dimension_numbers<[1], [0], [0], [1], [0, 0, 1, 1], [], []>} : vector<96x48xf32>, vector<48x128xf32>, vector<96x128xf32> -> vector<96x128xf32>
    %134 = arith.addf %3, %133 : vector<96x128xf32>
    %c0_74 = arith.constant 0 : index
    %c0_75 = arith.constant 0 : index
    %135 = vector.load %arg14[%c0_74, %c0_75] : memref<96x128xf32, #tpu.memory_space<vmem>>, vector<96x128xf32>
    tpu.vector_store %arg14[%c0_74, %c0_75], %134 {strides = array<i32>} : memref<96x128xf32, #tpu.memory_space<vmem>>, vector<96x128xf32>,
    %c1_i32 = arith.constant 1 : i32
    %136 = arith.cmpi eq, %arg0, %c1_i32 : i32
    %137 = arith.extui %136 : i1 to i32
    %c0_i32_76 = arith.constant 0 : i32
    %138 = arith.cmpi ne, %137, %c0_i32_76 : i32
    scf.if %138 {
      %c0_77 = arith.constant 0 : index
      %c0_78 = arith.constant 0 : index
      %139 = vector.load %arg13[%c0_77, %c0_78] : memref<96x128xf32, #tpu.memory_space<vmem>>, vector<96x128xf32>
      tpu.vector_store %arg13[%c0_77, %c0_78], %134 {strides = array<i32>} : memref<96x128xf32, #tpu.memory_space<vmem>>, vector<96x128xf32>,
    } else {
    }
    return
  }
  func.func @transform_0(%arg0: i32) -> (i32, i32) {
    %c0_i32 = arith.constant 0 : i32
    %c0_i32_0 = arith.constant 0 : i32
    %c0_i32_1 = arith.constant 0 : i32
    return %c0_i32, %c0_i32_0 : i32, i32
  }
  func.func @transform_1(%arg0: i32) -> (i32, i32) {
    %c0_i32 = arith.constant 0 : i32
    %c0_i32_0 = arith.constant 0 : i32
    %c0_i32_1 = arith.constant 0 : i32
    return %c0_i32, %c0_i32_0 : i32, i32
  }
  func.func @transform_2(%arg0: i32) -> (i32, i32, i32) {
    %c0_i32 = arith.constant 0 : i32
    %c0_i32_0 = arith.constant 0 : i32
    %c0_i32_1 = arith.constant 0 : i32
    %c0_i32_2 = arith.constant 0 : i32
    return %c0_i32, %c0_i32_0, %c0_i32_1 : i32, i32, i32
  }
  func.func @transform_3(%arg0: i32) -> (i32, i32) {
    %c0_i32 = arith.constant 0 : i32
    %c0_i32_0 = arith.constant 0 : i32
    %c0_i32_1 = arith.constant 0 : i32
    return %c0_i32, %c0_i32_0 : i32, i32
  }
  func.func @transform_4(%arg0: i32) -> (i32, i32, i32) {
    %c0_i32 = arith.constant 0 : i32
    %c0_i32_0 = arith.constant 0 : i32
    %c0_i32_1 = arith.constant 0 : i32
    return %arg0, %c0_i32, %c0_i32_0 : i32, i32, i32
  }
  func.func @transform_5(%arg0: i32) -> (i32, i32, i32) {
    %c0_i32 = arith.constant 0 : i32
    %c0_i32_0 = arith.constant 0 : i32
    %c0_i32_1 = arith.constant 0 : i32
    return %arg0, %c0_i32, %c0_i32_0 : i32, i32, i32
  }
  func.func @transform_6(%arg0: i32) -> (i32, i32, i32) {
    %c0_i32 = arith.constant 0 : i32
    %c0_i32_0 = arith.constant 0 : i32
    %c0_i32_1 = arith.constant 0 : i32
    return %arg0, %c0_i32, %c0_i32_0 : i32, i32, i32
  }
  func.func @transform_7(%arg0: i32) -> (i32, i32, i32) {
    %c0_i32 = arith.constant 0 : i32
    %c0_i32_0 = arith.constant 0 : i32
    %c0_i32_1 = arith.constant 0 : i32
    return %arg0, %c0_i32, %c0_i32_0 : i32, i32, i32
  }
  func.func @transform_8(%arg0: i32) -> (i32, i32, i32) {
    %c0_i32 = arith.constant 0 : i32
    %c0_i32_0 = arith.constant 0 : i32
    %c0_i32_1 = arith.constant 0 : i32
    return %arg0, %c0_i32, %c0_i32_0 : i32, i32, i32
  }
  func.func @transform_9(%arg0: i32) -> (i32, i32, i32) {
    %c0_i32 = arith.constant 0 : i32
    %c0_i32_0 = arith.constant 0 : i32
    %c0_i32_1 = arith.constant 0 : i32
    return %arg0, %c0_i32, %c0_i32_0 : i32, i32, i32
  }
  func.func @transform_10(%arg0: i32) -> (i32, i32, i32) {
    %c0_i32 = arith.constant 0 : i32
    %c0_i32_0 = arith.constant 0 : i32
    %c0_i32_1 = arith.constant 0 : i32
    return %arg0, %c0_i32, %c0_i32_0 : i32, i32, i32
  }
  func.func @transform_11(%arg0: i32) -> (i32, i32, i32) {
    %c0_i32 = arith.constant 0 : i32
    %c0_i32_0 = arith.constant 0 : i32
    %c0_i32_1 = arith.constant 0 : i32
    return %arg0, %c0_i32, %c0_i32_0 : i32, i32, i32
  }
  func.func @transform_12(%arg0: i32) -> (i32, i32) {
    %c0_i32 = arith.constant 0 : i32
    %c0_i32_0 = arith.constant 0 : i32
    %c0_i32_1 = arith.constant 0 : i32
    return %c0_i32, %c0_i32_0 : i32, i32
  }
}

</mosaic_0001>

<llo_original>
// kernel: tpu_custom_call.1
$region0: #{tpu_custom_call.1}
  #allocation0 [shape = 'u32[]', space=smem, size = 0x4, offset = 0x4, fixed_abs, tag = 'smem constant byte address 0x4 - core index']
  #allocation1 [shape = 'u32[144,128]{1,0:T(1,128)}', space=vmem, size = 0x12000, scoped, tag = 'internal scratch']
  #allocation2 [shape = 'f32[96,128]{1,0:T(8,128)}', space=vmem, size = 0xc000, scoped, tag = 'scratch operand']
  %s0 = inlined_call_operand.vmem [shape: f32[96,128], index: 0, kind: input, shape index: {}]
  %s1 = inlined_call_operand.hbm [shape: f32[48,96], index: 1, kind: input, shape index: {}]
  %s2 = inlined_call_operand.hbm [shape: f32[10,128,128], index: 2, kind: input, shape index: {}]
  %s3 = inlined_call_operand.vmem [shape: f32[96,48], index: 3, kind: input, shape index: {}]
  %s4 = inlined_call_operand.vmem [shape: bf16[2,128,128], index: 4, kind: input, shape index: {}]
  %s5 = inlined_call_operand.vmem [shape: f32[2,1,128], index: 5, kind: input, shape index: {}]
  %s6 = inlined_call_operand.vmem [shape: bf16[2,480,48], index: 6, kind: input, shape index: {}]
  %s7 = inlined_call_operand.vmem [shape: f32[2,48,128], index: 7, kind: input, shape index: {}]
  %s8 = inlined_call_operand.vmem [shape: bf16[2,384,128], index: 8, kind: input, shape index: {}]
  %s9 = inlined_call_operand.vmem [shape: f32[2,48,128], index: 9, kind: input, shape index: {}]
  %s10 = inlined_call_operand.hbm [shape: f32[2,48,128], index: 10, kind: input, shape index: {}]
  %s11 = inlined_call_operand.hbm [shape: f32[2,48,128], index: 11, kind: input, shape index: {}]
  %s12 = inlined_call_operand.hbm [shape: f32[96,128], index: 12, kind: output, shape index: {}]
  %s13 = sld [smem:[#allocation0]]
  $region105: #{tpu_custom_call.1} parent=0
    _
  %s15 = ssub.s32 1, %s13
  %s16 = scalar_select 0, %s15, %s13
  $region1: #{tpu_custom_call.1} parent=0
    #allocation3 [shape = 'u8[24576]{0}', space=vmem, size = 0x6000, scoped, tag = 'input window, operand 1, single buffered']
    #allocation4 [shape = 's32[2]{0}', space=sflag, size = 0x8, scoped, tag = 'scoped memory for tpu_custom_call.1']
    #allocation5 [shape = 's32[2]{0}', space=sflag, size = 0x8, scoped, tag = 'scoped memory for tpu_custom_call.1']
    #allocation6 [shape = 'u8[655360]{0}', space=vmem, size = 0xa0000, scoped, tag = 'input window, operand 2, single buffered']
    #allocation7 [shape = 's32[1]{0}', space=sflag, size = 0x4, scoped, tag = 'scoped memory for tpu_custom_call.1']
    #allocation8 [shape = 'u8[49152]{0}', space=vmem, size = 0xc000, scoped, tag = 'input window, operand 10']
    #allocation9 [shape = 'u8[49152]{0}', space=vmem, size = 0xc000, scoped, tag = 'input window, operand 11']
    #allocation10 [shape = 'u8[49152]{0}', space=vmem, size = 0xc000, scoped, tag = 'output window, operand 0, single buffered']
    %17 = vsyncpa [#allocation4], 0
    %18 = vsyncpa [#allocation7], 0
    %19 = vsyncpa [#allocation5], 0
    loop: start=0, step=1, limit=4
    $region2: #{tpu_custom_call.1} parent=1 // loop_pre_header
      _
    $region3: #{tpu_custom_call.1} parent=1 // loop_header
      %s21 = sphi 0, %s25
      %p22 = scmp.ge.s32.totalorder %s21, 4
      %s29 = sphi 0, %s29
      %s31 = sphi 0, %s29
      %s32 = sphi 0, %s31
      %s46 = sphi 0, %s32
      %s50 = sphi 0, %s50
      %s52 = sphi 0, %s50
      %s53 = sphi 0, %s52
      %s67 = sphi 0, %s53
      %s71 = sphi 0, %s71
      %s73 = sphi 0, %s71
      %s74 = sphi 0, %s73
      %s88 = sphi 0, %s74
      %s92 = sphi 0, %s92
      %s94 = sphi 0, %s92
      %s95 = sphi 0, %s94
      %s109 = sphi 0, %s95
      %s115 = sphi 0, %s117
      %s118 = sphi 0, %s115
      %s119 = sphi 0, %s118
      %s135 = sphi 0, %s119
      %s141 = sphi 0, %s143
      %s144 = sphi 0, %s141
      %s145 = sphi 0, %s144
      %s161 = sphi 0, %s145
      %s167 = sphi 0, %s169
      %s170 = sphi 0, %s167
      %s171 = sphi 0, %s170
      %s187 = sphi 0, %s171
      %s193 = sphi 0, %s195
      %s196 = sphi 0, %s193
      %s197 = sphi 0, %s196
      %s213 = sphi 0, %s197
      %s219 = sphi 0, %s221
      %s222 = sphi 0, %s219
      %s223 = sphi 0, %s222
      %s239 = sphi 0, %s223
      %s245 = sphi 0, %s247
      %s248 = sphi 0, %s245
      %s249 = sphi 0, %s248
      %s265 = sphi 0, %s249
      %s271 = sphi 0, %s273
      %s274 = sphi 0, %s271
      %s275 = sphi 0, %s274
      %s291 = sphi 0, %s275
      %s297 = sphi 0, %s299
      %s300 = sphi 0, %s297
      %s301 = sphi 0, %s300
      %s317 = sphi 0, %s301
      %s321 = sphi 0, %s321
      %s323 = sphi 0, %s321
      %s324 = sphi 0, %s323
      %s338 = sphi 0, %s324
    $region4: #{tpu_custom_call.1} parent=1 // loop_header_branch
      %24 = sbr.rel (%p22) target = $region8
    $region5: #{tpu_custom_call.1} parent=1 // loop_body
      %s26 = ssub.s32 %s21, 1
      %s27 = ssub.s32 %s21, 2
      %s28 = sadd.s32 %s21, 1
      %s30 = sadd.s32 %s29, 1
      %p33 = scmp.eq.s32.totalorder %s21, 1
      %p34 = scmp.ne.s32.totalorder %s29, %s31
      %p35 = scmp.eq.s32.totalorder %s21, 0
      %p36 = por %p34, %p35
      %p37 = scmp.ne.s32.totalorder %s29, %s31
      %p38 = scmp.eq.s32.totalorder %s26, 1
      %p39 = por %p37, %p38
      %p40 = scmp.ne.s32.totalorder %s31, %s32
      %p41 = scmp.eq.s32.totalorder %s26, 0
      %p42 = por %p40, %p41
      %p43 = scmp.ne.s32.totalorder %s31, %s32
      %p44 = scmp.eq.s32.totalorder %s27, 1
      %p45 = por %p43, %p44
      %p47 = scmp.ne.s32.totalorder %s32, %s46
      %p48 = scmp.eq.s32.totalorder %s27, 0
      %p49 = por %p47, %p48
      %s51 = sadd.s32 %s50, 1
      %p54 = scmp.eq.s32.totalorder %s21, 1
      %p55 = scmp.ne.s32.totalorder %s50, %s52
      %p56 = scmp.eq.s32.totalorder %s21, 0
      %p57 = por %p55, %p56
      %p58 = scmp.ne.s32.totalorder %s50, %s52
      %p59 = scmp.eq.s32.totalorder %s26, 1
      %p60 = por %p58, %p59
      %p61 = scmp.ne.s32.totalorder %s52, %s53
      %p62 = scmp.eq.s32.totalorder %s26, 0
      %p63 = por %p61, %p62
      %p64 = scmp.ne.s32.totalorder %s52, %s53
      %p65 = scmp.eq.s32.totalorder %s27, 1
      %p66 = por %p64, %p65
      %p68 = scmp.ne.s32.totalorder %s53, %s67
      %p69 = scmp.eq.s32.totalorder %s27, 0
      %p70 = por %p68, %p69
      %s72 = sadd.s32 %s71, 1
      %p75 = scmp.eq.s32.totalorder %s21, 1
      %p76 = scmp.ne.s32.totalorder %s71, %s73
      %p77 = scmp.eq.s32.totalorder %s21, 0
      %p78 = por %p76, %p77
      %p79 = scmp.ne.s32.totalorder %s71, %s73
      %p80 = scmp.eq.s32.totalorder %s26, 1
      %p81 = por %p79, %p80
      %p82 = scmp.ne.s32.totalorder %s73, %s74
      %p83 = scmp.eq.s32.totalorder %s26, 0
      %p84 = por %p82, %p83
      %p85 = scmp.ne.s32.totalorder %s73, %s74
      %p86 = scmp.eq.s32.totalorder %s27, 1
      %p87 = por %p85, %p86
      %p89 = scmp.ne.s32.totalorder %s74, %s88
      %p90 = scmp.eq.s32.totalorder %s27, 0
      %p91 = por %p89, %p90
      %s93 = sadd.s32 %s92, 1
      %p96 = scmp.eq.s32.totalorder %s21, 1
      %p97 = scmp.ne.s32.totalorder %s92, %s94
      %p98 = scmp.eq.s32.totalorder %s21, 0
      %p99 = por %p97, %p98
      %p100 = scmp.ne.s32.totalorder %s92, %s94
      %p101 = scmp.eq.s32.totalorder %s26, 1
      %p102 = por %p100, %p101
      %p103 = scmp.ne.s32.totalorder %s94, %s95
      %p104 = scmp.eq.s32.totalorder %s26, 0
      %p105 = por %p103, %p104
      %p106 = scmp.ne.s32.totalorder %s94, %s95
      %p107 = scmp.eq.s32.totalorder %s27, 1
      %p108 = por %p106, %p107
      %p110 = scmp.ne.s32.totalorder %s95, %s109
      %p111 = scmp.eq.s32.totalorder %s27, 0
      %p112 = por %p110, %p111
      %s113 = ssub.s32 %s21, %s28
      %p114 = scmp.eq.s32.totalorder %s113, 0
      %s116 = sadd.s32 %s115, 1
      %s117 = scalar_select %p114, %s115, %s116
      %p120 = pneg %p114
      %p121 = scmp.eq.s32.totalorder %s21, 1
      %p122 = por %p120, %p121
      %p123 = scmp.ne.s32.totalorder %s115, %s118
      %p124 = scmp.eq.s32.totalorder %s21, 0
      %p125 = por %p123, %p124
      %p126 = scmp.ne.s32.totalorder %s115, %s118
      %p127 = scmp.eq.s32.totalorder %s26, 1
      %p128 = por %p126, %p127
      %p129 = scmp.ne.s32.totalorder %s118, %s119
      %p130 = scmp.eq.s32.totalorder %s26, 0
      %p131 = por %p129, %p130
      %p132 = scmp.ne.s32.totalorder %s118, %s119
      %p133 = scmp.eq.s32.totalorder %s27, 1
      %p134 = por %p132, %p133
      %p136 = scmp.ne.s32.totalorder %s119, %s135
      %p137 = scmp.eq.s32.totalorder %s27, 0
      %p138 = por %p136, %p137
      %s139 = ssub.s32 %s21, %s28
      %p140 = scmp.eq.s32.totalorder %s139, 0
      %s142 = sadd.s32 %s141, 1
      %s143 = scalar_select %p140, %s141, %s142
      %p146 = pneg %p140
      %p147 = scmp.eq.s32.totalorder %s21, 1
      %p148 = por %p146, %p147
      %p149 = scmp.ne.s32.totalorder %s141, %s144
      %p150 = scmp.eq.s32.totalorder %s21, 0
      %p151 = por %p149, %p150
      %p152 = scmp.ne.s32.totalorder %s141, %s144
      %p153 = scmp.eq.s32.totalorder %s26, 1
      %p154 = por %p152, %p153
      %p155 = scmp.ne.s32.totalorder %s144, %s145
      %p156 = scmp.eq.s32.totalorder %s26, 0
      %p157 = por %p155, %p156
      %p158 = scmp.ne.s32.totalorder %s144, %s145
      %p159 = scmp.eq.s32.totalorder %s27, 1
      %p160 = por %p158, %p159
      %p162 = scmp.ne.s32.totalorder %s145, %s161
      %p163 = scmp.eq.s32.totalorder %s27, 0
      %p164 = por %p162, %p163
      %s165 = ssub.s32 %s21, %s28
      %p166 = scmp.eq.s32.totalorder %s165, 0
      %s168 = sadd.s32 %s167, 1
      %s169 = scalar_select %p166, %s167, %s168
      %p172 = pneg %p166
      %p173 = scmp.eq.s32.totalorder %s21, 1
      %p174 = por %p172, %p173
      %p175 = scmp.ne.s32.totalorder %s167, %s170
      %p176 = scmp.eq.s32.totalorder %s21, 0
      %p177 = por %p175, %p176
      %p178 = scmp.ne.s32.totalorder %s167, %s170
      %p179 = scmp.eq.s32.totalorder %s26, 1
      %p180 = por %p178, %p179
      %p181 = scmp.ne.s32.totalorder %s170, %s171
      %p182 = scmp.eq.s32.totalorder %s26, 0
      %p183 = por %p181, %p182
      %p184 = scmp.ne.s32.totalorder %s170, %s171
      %p185 = scmp.eq.s32.totalorder %s27, 1
      %p186 = por %p184, %p185
      %p188 = scmp.ne.s32.totalorder %s171, %s187
      %p189 = scmp.eq.s32.totalorder %s27, 0
      %p190 = por %p188, %p189
      %s191 = ssub.s32 %s21, %s28
      %p192 = scmp.eq.s32.totalorder %s191, 0
      %s194 = sadd.s32 %s193, 1
      %s195 = scalar_select %p192, %s193, %s194
      %p198 = pneg %p192
      %p199 = scmp.eq.s32.totalorder %s21, 1
      %p200 = por %p198, %p199
      %p201 = scmp.ne.s32.totalorder %s193, %s196
      %p202 = scmp.eq.s32.totalorder %s21, 0
      %p203 = por %p201, %p202
      %p204 = scmp.ne.s32.totalorder %s193, %s196
      %p205 = scmp.eq.s32.totalorder %s26, 1
      %p206 = por %p204, %p205
      %p207 = scmp.ne.s32.totalorder %s196, %s197
      %p208 = scmp.eq.s32.totalorder %s26, 0
      %p209 = por %p207, %p208
      %p210 = scmp.ne.s32.totalorder %s196, %s197
      %p211 = scmp.eq.s32.totalorder %s27, 1
      %p212 = por %p210, %p211
      %p214 = scmp.ne.s32.totalorder %s197, %s213
      %p215 = scmp.eq.s32.totalorder %s27, 0
      %p216 = por %p214, %p215
      %s217 = ssub.s32 %s21, %s28
      %p218 = scmp.eq.s32.totalorder %s217, 0
      %s220 = sadd.s32 %s219, 1
      %s221 = scalar_select %p218, %s219, %s220
      %p224 = pneg %p218
      %p225 = scmp.eq.s32.totalorder %s21, 1
      %p226 = por %p224, %p225
      %p227 = scmp.ne.s32.totalorder %s219, %s222
      %p228 = scmp.eq.s32.totalorder %s21, 0
      %p229 = por %p227, %p228
      %p230 = scmp.ne.s32.totalorder %s219, %s222
      %p231 = scmp.eq.s32.totalorder %s26, 1
      %p232 = por %p230, %p231
      %p233 = scmp.ne.s32.totalorder %s222, %s223
      %p234 = scmp.eq.s32.totalorder %s26, 0
      %p235 = por %p233, %p234
      %p236 = scmp.ne.s32.totalorder %s222, %s223
      %p237 = scmp.eq.s32.totalorder %s27, 1
      %p238 = por %p236, %p237
      %p240 = scmp.ne.s32.totalorder %s223, %s239
      %p241 = scmp.eq.s32.totalorder %s27, 0
      %p242 = por %p240, %p241
      %s243 = ssub.s32 %s21, %s28
      %p244 = scmp.eq.s32.totalorder %s243, 0
      %s246 = sadd.s32 %s245, 1
      %s247 = scalar_select %p244, %s245, %s246
      %p250 = pneg %p244
      %p251 = scmp.eq.s32.totalorder %s21, 1
      %p252 = por %p250, %p251
      %p253 = scmp.ne.s32.totalorder %s245, %s248
      %p254 = scmp.eq.s32.totalorder %s21, 0
      %p255 = por %p253, %p254
      %p256 = scmp.ne.s32.totalorder %s245, %s248
      %p257 = scmp.eq.s32.totalorder %s26, 1
      %p258 = por %p256, %p257
      %p259 = scmp.ne.s32.totalorder %s248, %s249
      %p260 = scmp.eq.s32.totalorder %s26, 0
      %p261 = por %p259, %p260
      %p262 = scmp.ne.s32.totalorder %s248, %s249
      %p263 = scmp.eq.s32.totalorder %s27, 1
      %p264 = por %p262, %p263
      %p266 = scmp.ne.s32.totalorder %s249, %s265
      %p267 = scmp.eq.s32.totalorder %s27, 0
      %p268 = por %p266, %p267
      %s269 = ssub.s32 %s21, %s28
      %p270 = scmp.eq.s32.totalorder %s269, 0
      %s272 = sadd.s32 %s271, 1
      %s273 = scalar_select %p270, %s271, %s272
      %p276 = pneg %p270
      %p277 = scmp.eq.s32.totalorder %s21, 1
      %p278 = por %p276, %p277
      %p279 = scmp.ne.s32.totalorder %s271, %s274
      %p280 = scmp.eq.s32.totalorder %s21, 0
      %p281 = por %p279, %p280
      %p282 = scmp.ne.s32.totalorder %s271, %s274
      %p283 = scmp.eq.s32.totalorder %s26, 1
      %p284 = por %p282, %p283
      %p285 = scmp.ne.s32.totalorder %s274, %s275
      %p286 = scmp.eq.s32.totalorder %s26, 0
      %p287 = por %p285, %p286
      %p288 = scmp.ne.s32.totalorder %s274, %s275
      %p289 = scmp.eq.s32.totalorder %s27, 1
      %p290 = por %p288, %p289
      %p292 = scmp.ne.s32.totalorder %s275, %s291
      %p293 = scmp.eq.s32.totalorder %s27, 0
      %p294 = por %p292, %p293
      %s295 = ssub.s32 %s21, %s28
      %p296 = scmp.eq.s32.totalorder %s295, 0
      %s298 = sadd.s32 %s297, 1
      %s299 = scalar_select %p296, %s297, %s298
      %p302 = pneg %p296
      %p303 = scmp.eq.s32.totalorder %s21, 1
      %p304 = por %p302, %p303
      %p305 = scmp.ne.s32.totalorder %s297, %s300
      %p306 = scmp.eq.s32.totalorder %s21, 0
      %p307 = por %p305, %p306
      %p308 = scmp.ne.s32.totalorder %s297, %s300
      %p309 = scmp.eq.s32.totalorder %s26, 1
      %p310 = por %p308, %p309
      %p311 = scmp.ne.s32.totalorder %s300, %s301
      %p312 = scmp.eq.s32.totalorder %s26, 0
      %p313 = por %p311, %p312
      %p314 = scmp.ne.s32.totalorder %s300, %s301
      %p315 = scmp.eq.s32.totalorder %s27, 1
      %p316 = por %p314, %p315
      %p318 = scmp.ne.s32.totalorder %s301, %s317
      %p319 = scmp.eq.s32.totalorder %s27, 0
      %p320 = por %p318, %p319
      %s322 = sadd.s32 %s321, 1
      %p325 = scmp.eq.s32.totalorder %s21, 1
      %p326 = scmp.ne.s32.totalorder %s321, %s323
      %p327 = scmp.eq.s32.totalorder %s21, 0
      %p328 = por %p326, %p327
      %p329 = scmp.ne.s32.totalorder %s321, %s323
      %p330 = scmp.eq.s32.totalorder %s26, 1
      %p331 = por %p329, %p330
      %p332 = scmp.ne.s32.totalorder %s323, %s324
      %p333 = scmp.eq.s32.totalorder %s26, 0
      %p334 = por %p332, %p333
      %p335 = scmp.ne.s32.totalorder %s323, %s324
      %p336 = scmp.eq.s32.totalorder %s27, 1
      %p337 = por %p335, %p336
      %p339 = scmp.ne.s32.totalorder %s324, %s338
      %p340 = scmp.eq.s32.totalorder %s27, 0
      %p341 = por %p339, %p340
      %p342 = scmp.le.s32.totalorder 1, %s21
      %p343 = scmp.lt.s32.totalorder %s21, 3
      %p344 = pnand %p342, %p343
      %p345 = pneg %p344
      // Predicated region
      $region9: #{tpu_custom_call.1} parent=5 // pred_check
        _
      $region10: #{tpu_custom_call.1} parent=5 // pred_check_branch
        %347 = sbr.rel (%p344) target = $region12
      $region11: #{tpu_custom_call.1} parent=5 // pred_region
        %s348 = ssub.s32 %s21, 1
        // Predicated region
        $region13: #{tpu_custom_call.1} parent=11 // pred_check
          %p349 = pneg %p42
        $region14: #{tpu_custom_call.1} parent=11 // pred_check_branch
          %351 = sbr.rel (%p349) target = $region16
        $region15: #{tpu_custom_call.1} parent=11 // pred_region
          _
        $region16: #{tpu_custom_call.1} parent=11 // pred_fallthru
          _
        // Predicated region
        $region17: #{tpu_custom_call.1} parent=11 // pred_check
          %p352 = pneg %p63
        $region18: #{tpu_custom_call.1} parent=11 // pred_check_branch
          %354 = sbr.rel (%p352) target = $region20
        $region19: #{tpu_custom_call.1} parent=11 // pred_region
          %s356 = ssub.s32 768, 768
          %357 = vsyncadd [#allocation4], %s356
          %s358 = sshll.u32 [#allocation3], 4
          %s359 = int_to_ptr.vmem [resolvable:$true] %s358
          %364 = dma.hbm_to_vmem [thread:$0]  %s1, 768, %s359, [#allocation4], 128, 128, 8
        $region20: #{tpu_custom_call.1} parent=11 // pred_fallthru
          _
        // Predicated region
        $region21: #{tpu_custom_call.1} parent=11 // pred_check
          %p365 = pneg %p84
        $region22: #{tpu_custom_call.1} parent=11 // pred_check_branch
          %367 = sbr.rel (%p365) target = $region24
        $region23: #{tpu_custom_call.1} parent=11 // pred_region
          %s369 = ssub.s32 20480, 20480
          %370 = vsyncadd [#allocation7], %s369
          %s371 = sshll.u32 [#allocation6], 4
          %s372 = int_to_ptr.vmem [resolvable:$true] %s371
          %377 = dma.hbm_to_vmem [thread:$0]  %s2, 20480, %s372, [#allocation7], 128, 128, 8
        $region24: #{tpu_custom_call.1} parent=11 // pred_fallthru
          _
        // Predicated region
        $region25: #{tpu_custom_call.1} parent=11 // pred_check
          %p378 = pneg %p105
        $region26: #{tpu_custom_call.1} parent=11 // pred_check_branch
          %380 = sbr.rel (%p378) target = $region28
        $region27: #{tpu_custom_call.1} parent=11 // pred_region
          _
        $region28: #{tpu_custom_call.1} parent=11 // pred_fallthru
          _
      $region12: #{tpu_custom_call.1} parent=5 // pred_fallthru
        _
      %p381 = scmp.lt.s32.totalorder %s21, 2
      // Predicated region
      $region29: #{tpu_custom_call.1} parent=5 // pred_check
        %p382 = pneg %p381
      $region30: #{tpu_custom_call.1} parent=5 // pred_check_branch
        %384 = sbr.rel (%p382) target = $region32
      $region31: #{tpu_custom_call.1} parent=5 // pred_region
        // Predicated region
        $region33: #{tpu_custom_call.1} parent=31 // pred_check
          %p385 = pneg %p125
        $region34: #{tpu_custom_call.1} parent=31 // pred_check_branch
          %387 = sbr.rel (%p385) target = $region36
        $region35: #{tpu_custom_call.1} parent=31 // pred_region
          %p388 = scmp.lt.s32.totalorder %s21, 1
          %s389 = scalar_select %p388, %s21, 1
          %s390 = smul.addr %s389, 16
          %s391 = smul.addr %s390, 4
          %s392 = scalar_lea.vmem %s4, %s391
        $region36: #{tpu_custom_call.1} parent=31 // pred_fallthru
          _
        // Predicated region
        $region37: #{tpu_custom_call.1} parent=31 // pred_check
          %p393 = pneg %p151
        $region38: #{tpu_custom_call.1} parent=31 // pred_check_branch
          %395 = sbr.rel (%p393) target = $region40
        $region39: #{tpu_custom_call.1} parent=31 // pred_region
          %p396 = scmp.lt.s32.totalorder %s21, 1
          %s397 = scalar_select %p396, %s21, 1
          %s398 = scalar_lea.vmem %s5, %s397
        $region40: #{tpu_custom_call.1} parent=31 // pred_fallthru
          _
        // Predicated region
        $region41: #{tpu_custom_call.1} parent=31 // pred_check
          %p399 = pneg %p177
        $region42: #{tpu_custom_call.1} parent=31 // pred_check_branch
          %401 = sbr.rel (%p399) target = $region44
        $region43: #{tpu_custom_call.1} parent=31 // pred_region
          %p402 = scmp.lt.s32.totalorder %s21, 1
          %s403 = scalar_select %p402, %s21, 1
          %s404 = smul.addr %s403, 60
          %s405 = smul.addr %s404, 4
          %s406 = scalar_lea.vmem %s6, %s405
        $region44: #{tpu_custom_call.1} parent=31 // pred_fallthru
          _
        // Predicated region
        $region45: #{tpu_custom_call.1} parent=31 // pred_check
          %p407 = pneg %p203
        $region46: #{tpu_custom_call.1} parent=31 // pred_check_branch
          %409 = sbr.rel (%p407) target = $region48
        $region47: #{tpu_custom_call.1} parent=31 // pred_region
          %p410 = scmp.lt.s32.totalorder %s21, 1
          %s411 = scalar_select %p410, %s21, 1
          %s412 = smul.addr %s411, 6
          %s413 = smul.addr %s412, 8
          %s414 = scalar_lea.vmem %s7, %s413
        $region48: #{tpu_custom_call.1} parent=31 // pred_fallthru
          _
        // Predicated region
        $region49: #{tpu_custom_call.1} parent=31 // pred_check
          %p415 = pneg %p229
        $region50: #{tpu_custom_call.1} parent=31 // pred_check_branch
          %417 = sbr.rel (%p415) target = $region52
        $region51: #{tpu_custom_call.1} parent=31 // pred_region
          %p418 = scmp.lt.s32.totalorder %s21, 1
          %s419 = scalar_select %p418, %s21, 1
          %s420 = smul.addr %s419, 48
          %s421 = smul.addr %s420, 4
          %s422 = scalar_lea.vmem %s8, %s421
        $region52: #{tpu_custom_call.1} parent=31 // pred_fallthru
          _
        // Predicated region
        $region53: #{tpu_custom_call.1} parent=31 // pred_check
          %p423 = pneg %p255
        $region54: #{tpu_custom_call.1} parent=31 // pred_check_branch
          %425 = sbr.rel (%p423) target = $region56
        $region55: #{tpu_custom_call.1} parent=31 // pred_region
          %p426 = scmp.lt.s32.totalorder %s21, 1
          %s427 = scalar_select %p426, %s21, 1
          %s428 = smul.addr %s427, 6
          %s429 = smul.addr %s428, 8
          %s430 = scalar_lea.vmem %s9, %s429
        $region56: #{tpu_custom_call.1} parent=31 // pred_fallthru
          _
        // Predicated region
        $region57: #{tpu_custom_call.1} parent=31 // pred_check
          %p431 = pneg %p281
        $region58: #{tpu_custom_call.1} parent=31 // pred_check_branch
          %433 = sbr.rel (%p431) target = $region60
        $region59: #{tpu_custom_call.1} parent=31 // pred_region
          %s434 = sand.u32 %s21, 1
          %s435 = scalar_lea.sflag [#allocation4], %s434
          %s436 = sand.u32 %s271, 1
          %s437 = smul.addr %s436, 48
          %s438 = scalar_lea.vmem [#allocation8], %s437
          %s440 = ssub.s32 768, 768
          %441 = vsyncadd %s435, %s440
          %s442 = smul.addr %s21, 6
          %s443 = smul.addr %s442, 128
          %s444 = scalar_lea.hbm %s10, %s443
          %s445 = sshll.u32 %s438, 4
          %s446 = int_to_ptr.vmem [resolvable:$true] %s445
          %451 = dma.hbm_to_vmem [thread:$0]  %s444, 768, %s446, %s435, 128, 128, 8
        $region60: #{tpu_custom_call.1} parent=31 // pred_fallthru
          _
        // Predicated region
        $region61: #{tpu_custom_call.1} parent=31 // pred_check
          %p452 = pneg %p307
        $region62: #{tpu_custom_call.1} parent=31 // pred_check_branch
          %454 = sbr.rel (%p452) target = $region64
        $region63: #{tpu_custom_call.1} parent=31 // pred_region
          %s455 = sand.u32 %s21, 1
          %s456 = scalar_lea.sflag [#allocation4], %s455
          %s457 = sand.u32 %s297, 1
          %s458 = smul.addr %s457, 48
          %s459 = scalar_lea.vmem [#allocation9], %s458
          %s461 = ssub.s32 768, 768
          %462 = vsyncadd %s456, %s461
          %s463 = smul.addr %s21, 6
          %s464 = smul.addr %s463, 128
          %s465 = scalar_lea.hbm %s11, %s464
          %s466 = sshll.u32 %s459, 4
          %s467 = int_to_ptr.vmem [resolvable:$true] %s466
          %472 = dma.hbm_to_vmem [thread:$0]  %s465, 768, %s467, %s456, 128, 128, 8
        $region64: #{tpu_custom_call.1} parent=31 // pred_fallthru
          _
      $region32: #{tpu_custom_call.1} parent=5 // pred_fallthru
        _
      %p473 = scmp.le.s32.totalorder 1, %s21
      %p474 = scmp.lt.s32.totalorder %s21, 3
      %p475 = pnand %p473, %p474
      %p476 = pneg %p475
      // Predicated region
      $region65: #{tpu_custom_call.1} parent=5 // pred_check
        _
      $region66: #{tpu_custom_call.1} parent=5 // pred_check_branch
        %478 = sbr.rel (%p475) target = $region68
      $region67: #{tpu_custom_call.1} parent=5 // pred_region
        %s479 = ssub.s32 %s21, 1
        // Predicated region
        $region69: #{tpu_custom_call.1} parent=67 // pred_check
          %p480 = pneg %p63
        $region70: #{tpu_custom_call.1} parent=67 // pred_check_branch
          %482 = sbr.rel (%p480) target = $region72
        $region71: #{tpu_custom_call.1} parent=67 // pred_region
          %483 = dma.done [#allocation4], 768
        $region72: #{tpu_custom_call.1} parent=67 // pred_fallthru
          _
        // Predicated region
        $region73: #{tpu_custom_call.1} parent=67 // pred_check
          %p484 = pneg %p84
        $region74: #{tpu_custom_call.1} parent=67 // pred_check_branch
          %486 = sbr.rel (%p484) target = $region76
        $region75: #{tpu_custom_call.1} parent=67 // pred_region
          %487 = dma.done [#allocation7], 20480
        $region76: #{tpu_custom_call.1} parent=67 // pred_fallthru
          _
        %s488 = sand.u32 %s26, 1
        %s489 = scalar_lea.sflag [#allocation4], %s488
        %s490 = sand.u32 %s274, 1
        %s491 = smul.addr %s490, 48
        %s492 = scalar_lea.vmem [#allocation8], %s491
        // Predicated region
        $region77: #{tpu_custom_call.1} parent=67 // pred_check
          %p493 = pneg %p287
        $region78: #{tpu_custom_call.1} parent=67 // pred_check_branch
          %495 = sbr.rel (%p493) target = $region80
        $region79: #{tpu_custom_call.1} parent=67 // pred_region
          %496 = dma.done %s489, 768
        $region80: #{tpu_custom_call.1} parent=67 // pred_fallthru
          _
        %s497 = sand.u32 %s26, 1
        %s498 = scalar_lea.sflag [#allocation4], %s497
        %s499 = sand.u32 %s300, 1
        %s500 = smul.addr %s499, 48
        %s501 = scalar_lea.vmem [#allocation9], %s500
        // Predicated region
        $region81: #{tpu_custom_call.1} parent=67 // pred_check
          %p502 = pneg %p313
        $region82: #{tpu_custom_call.1} parent=67 // pred_check_branch
          %504 = sbr.rel (%p502) target = $region84
        $region83: #{tpu_custom_call.1} parent=67 // pred_region
          %505 = dma.done %s498, 768
        $region84: #{tpu_custom_call.1} parent=67 // pred_fallthru
          _
        %p506 = pneg %p42
        %p507 = pneg %p39
        %p508 = pneg %p63
        %p509 = pneg %p60
        %p510 = pneg %p84
        %p511 = pneg %p81
        %p512 = pneg %p105
        %p513 = pneg %p102
        %p514 = scmp.lt.s32.totalorder %s26, 1
        %s515 = scalar_select %p514, %s26, 1
        %s516 = smul.addr %s515, 16
        %s517 = smul.addr %s516, 4
        %s518 = scalar_lea.vmem %s4, %s517
        %p519 = pneg %p131
        %p520 = pneg %p128
        %p521 = scmp.lt.s32.totalorder %s26, 1
        %s522 = scalar_select %p521, %s26, 1
        %s523 = scalar_lea.vmem %s5, %s522
        %p524 = pneg %p157
        %p525 = pneg %p154
        %p526 = scmp.lt.s32.totalorder %s26, 1
        %s527 = scalar_select %p526, %s26, 1
        %s528 = smul.addr %s527, 60
        %s529 = smul.addr %s528, 4
        %s530 = scalar_lea.vmem %s6, %s529
        %p531 = pneg %p183
        %p532 = pneg %p180
        %p533 = scmp.lt.s32.totalorder %s26, 1
        %s534 = scalar_select %p533, %s26, 1
        %s535 = smul.addr %s534, 6
        %s536 = smul.addr %s535, 8
        %s537 = scalar_lea.vmem %s7, %s536
        %p538 = pneg %p209
        %p539 = pneg %p206
        %p540 = scmp.lt.s32.totalorder %s26, 1
        %s541 = scalar_select %p540, %s26, 1
        %s542 = smul.addr %s541, 48
        %s543 = smul.addr %s542, 4
        %s544 = scalar_lea.vmem %s8, %s543
        %p545 = pneg %p235
        %p546 = pneg %p232
        %p547 = scmp.lt.s32.totalorder %s26, 1
        %s548 = scalar_select %p547, %s26, 1
        %s549 = smul.addr %s548, 6
        %s550 = smul.addr %s549, 8
        %s551 = scalar_lea.vmem %s9, %s550
        %p552 = pneg %p261
        %p553 = pneg %p258
        %s554 = sand.u32 %s26, 1
        %s555 = scalar_lea.sflag [#allocation4], %s554
        %s556 = sand.u32 %s274, 1
        %s557 = smul.addr %s556, 48
        %s558 = scalar_lea.vmem [#allocation8], %s557
        %p559 = pneg %p287
        %p560 = pneg %p284
        %s561 = sand.u32 %s26, 1
        %s562 = scalar_lea.sflag [#allocation4], %s561
        %s563 = sand.u32 %s300, 1
        %s564 = smul.addr %s563, 48
        %s565 = scalar_lea.vmem [#allocation9], %s564
        %p566 = pneg %p313
        %p567 = pneg %p310
        %p568 = pneg %p334
        %p569 = pneg %p331
        %p570 = scmp.lt.s32.totalorder %s26, 1
        %s571 = scalar_select %p570, %s26, 1
        %s572 = smul.addr %s571, 16
        %s573 = smul.addr %s572, 4
        %s574 = scalar_lea.vmem %s4, %s573
        %p575 = scmp.lt.s32.totalorder %s26, 1
        %s576 = scalar_select %p575, %s26, 1
        %s577 = scalar_lea.vmem %s5, %s576
        %p578 = scmp.lt.s32.totalorder %s26, 1
        %s579 = scalar_select %p578, %s26, 1
        %s580 = smul.addr %s579, 60
        %s581 = smul.addr %s580, 4
        %s582 = scalar_lea.vmem %s6, %s581
        %p583 = scmp.lt.s32.totalorder %s26, 1
        %s584 = scalar_select %p583, %s26, 1
        %s585 = smul.addr %s584, 6
        %s586 = smul.addr %s585, 8
        %s587 = scalar_lea.vmem %s7, %s586
        %p588 = scmp.lt.s32.totalorder %s26, 1
        %s589 = scalar_select %p588, %s26, 1
        %s590 = smul.addr %s589, 48
        %s591 = smul.addr %s590, 4
        %s592 = scalar_lea.vmem %s8, %s591
        %p593 = scmp.lt.s32.totalorder %s26, 1
        %s594 = scalar_select %p593, %s26, 1
        %s595 = smul.addr %s594, 6
        %s596 = smul.addr %s595, 8
        %s597 = scalar_lea.vmem %s9, %s596
        %p599 = scmp.eq.s32.totalorder %s26, 0
        // Predicated region
        $region85: #{tpu_custom_call.1} parent=67 // pred_check
          %p600 = pneg %p599
        $region86: #{tpu_custom_call.1} parent=67 // pred_check_branch
          %602 = sbr.rel (%p600) target = $region88
        $region87: #{tpu_custom_call.1} parent=67 // pred_region
          %v603 = vld [vmem:[%s0] sm:$0xff]
          %v604 = vld [vmem:[%s0 + $0x8] sm:$0xff]
          %v605 = vld [vmem:[%s0 + $0x10] sm:$0xff]
          %v606 = vld [vmem:[%s0 + $0x18] sm:$0xff]
          %v607 = vld [vmem:[%s0 + $0x20] sm:$0xff]
          %v608 = vld [vmem:[%s0 + $0x28] sm:$0xff]
          %v609 = vld [vmem:[%s0 + $0x30] sm:$0xff]
          %v610 = vld [vmem:[%s0 + $0x38] sm:$0xff]
          %v611 = vld [vmem:[%s0 + $0x40] sm:$0xff]
          %v612 = vld [vmem:[%s0 + $0x48] sm:$0xff]
          %v613 = vld [vmem:[%s0 + $0x50] sm:$0xff]
          %v614 = vld [vmem:[%s0 + $0x58] sm:$0xff]
          %615 = vst [vmem:[#allocation2] sm:$0xff] %v603
          %616 = vst [vmem:[#allocation2 + $0x8] sm:$0xff] %v604
          %617 = vst [vmem:[#allocation2 + $0x10] sm:$0xff] %v605
          %618 = vst [vmem:[#allocation2 + $0x18] sm:$0xff] %v606
          %619 = vst [vmem:[#allocation2 + $0x20] sm:$0xff] %v607
          %620 = vst [vmem:[#allocation2 + $0x28] sm:$0xff] %v608
          %621 = vst [vmem:[#allocation2 + $0x30] sm:$0xff] %v609
          %622 = vst [vmem:[#allocation2 + $0x38] sm:$0xff] %v610
          %623 = vst [vmem:[#allocation2 + $0x40] sm:$0xff] %v611
          %624 = vst [vmem:[#allocation2 + $0x48] sm:$0xff] %v612
          %625 = vst [vmem:[#allocation2 + $0x50] sm:$0xff] %v613
          %626 = vst [vmem:[#allocation2 + $0x58] sm:$0xff] %v614
        $region88: #{tpu_custom_call.1} parent=67 // pred_fallthru
          _
        %v627 = vld [vmem:[#allocation2] sm:$0xff]
        %v628 = vld [vmem:[#allocation2 + $0x8] sm:$0xff]
        %v629 = vld [vmem:[#allocation2 + $0x10] sm:$0xff]
        %v630 = vld [vmem:[#allocation2 + $0x18] sm:$0xff]
        %v631 = vld [vmem:[#allocation2 + $0x20] sm:$0xff]
        %v632 = vld [vmem:[#allocation2 + $0x28] sm:$0xff]
        %v633 = vld [vmem:[#allocation2 + $0x30] sm:$0xff]
        %v634 = vld [vmem:[#allocation2 + $0x38] sm:$0xff]
        %v635 = vld [vmem:[#allocation2 + $0x40] sm:$0xff]
        %v636 = vld [vmem:[#allocation2 + $0x48] sm:$0xff]
        %v637 = vld [vmem:[#allocation2 + $0x50] sm:$0xff]
        %v638 = vld [vmem:[#allocation2 + $0x58] sm:$0xff]
        %v639 = vld [vmem:[#allocation3] sm:$0xff]
        %v640 = vld [vmem:[#allocation3 + $0x8] sm:$0xff]
        %v641 = vld [vmem:[#allocation3 + $0x10] sm:$0xff]
        %v642 = vld [vmem:[#allocation3 + $0x18] sm:$0xff]
        %v643 = vld [vmem:[#allocation3 + $0x20] sm:$0xff]
        %v644 = vld [vmem:[#allocation3 + $0x28] sm:$0xff]
        %vm645 = vcmask 785408
        %v647 = vsel %vm645, %v639, 0
        %v650 = vsel %vm645, %v640, 0
        %v653 = vsel %vm645, %v641, 0
        %v656 = vsel %vm645, %v642, 0
        %v659 = vsel %vm645, %v643, 0
        %v662 = vsel %vm645, %v644, 0
        %664 = vmatprep.subr.mxu0 0.0
        %665 = vmatpush1.msra.mxu0 %v627
        %666 = vmatprep.subr.mxu0 0.0
        %667 = vmatpush1.msra.mxu0 %v628
        %668 = vmatprep.subr.mxu0 0.0
        %669 = vmatpush1.msra.mxu0 %v629
        %670 = vmatprep.subr.mxu0 0.0
        %671 = vmatpush1.msra.mxu0 %v630
        %672 = vmatprep.subr.mxu0 0.0
        %673 = vmatpush1.msra.mxu0 %v631
        %674 = vmatprep.subr.mxu0 0.0
        %675 = vmatpush1.msra.mxu0 %v632
        %676 = vmatprep.subr.mxu0 0.0
        %677 = vmatpush1.msra.mxu0 %v633
        %678 = vmatprep.subr.mxu0 0.0
        %679 = vmatpush1.msra.mxu0 %v634
        %680 = vmatprep.subr.mxu0 0.0
        %681 = vmatpush1.msra.mxu0 %v635
        %682 = vmatprep.subr.mxu0 0.0
        %683 = vmatpush1.msra.mxu0 %v636
        %684 = vmatprep.subr.mxu0 0.0
        %685 = vmatpush1.msra.mxu0 %v637
        %686 = vmatprep.subr.mxu0 0.0
        %687 = vmatpush1.msra.mxu0 %v638
        %688 = vmatprep.subr.mxu0 0.0
        %689 = vmatpush1.msra.mxu0 0.0
        %690 = vmatprep.subr.mxu0 0.0
        %691 = vmatpush1.msra.mxu0 0.0
        %692 = vmatprep.subr.mxu0 0.0
        %693 = vmatpush1.msra.mxu0 0.0
        %694 = vmatprep.subr.mxu0 0.0
        %695 = vmatpush1.msra.mxu0 0.0
        %696 = vmatprep.subr.mxu0 0.0
        %697 = vmatpush1.msra.mxu0 0.0
        %698 = vmatprep.subr.mxu0 0.0
        %699 = vmatpush1.msra.mxu0 0.0
        %700 = vmatprep.subr.mxu0 0.0
        %701 = vmatpush1.msra.mxu0 0.0
        %702 = vmatprep.subr.mxu0 0.0
        %703 = vmatpush1.msra.mxu0 0.0
        %704 = vmatprep.subr.mxu0 0.0
        %705 = vmatpush1.msra.mxu0 0.0
        %706 = vmatprep.subr.mxu0 0.0
        %707 = vmatpush1.msra.mxu0 0.0
        %708 = vmatprep.subr.mxu0 0.0
        %709 = vmatpush1.msra.mxu0 0.0
        %710 = vmatprep.subr.mxu0 0.0
        %711 = vmatpush1.msra.mxu0 0.0
        %712 = vmatprep.subr.mxu0 0.0
        %713 = vmatpush1.msra.mxu0 0.0
        %714 = vmatprep.subr.mxu0 0.0
        %715 = vmatpush1.msra.mxu0 0.0
        %716 = vmatprep.subr.mxu0 0.0
        %717 = vmatpush1.msra.mxu0 0.0
        %718 = vmatprep.subr.mxu0 0.0
        %719 = vmatpush1.msra.mxu0 0.0
        %720 = vmatprep.subr.mxu0 0.0
        %721 = vmatpush1.msra.mxu0 0.0
        %722 = vmatprep.subr.mxu0 0.0
        %723 = vmatpush1.msra.mxu0 0.0
        %724 = vmatprep.subr.mxu0 0.0
        %725 = vmatpush1.msra.mxu0 0.0
        %726 = vmatprep.subr.mxu0 0.0
        %727 = vmatpush1.msra.mxu0 0.0
        %728 = vmatprep.mubr.f32.mxu0 0.0
        %729 = vmatmul.mubr.f32.gmra.mrb[0].mxu0 %v647
        %v730 = vpop.f32.mrb[0].mxu0
        %v731 = vadd.f32 0.0, %v730
        %v732 = vpop.f32.mrb[0].mxu0
        %733 = vmatprep.mubr.f32.mxu0 0.0
        %734 = vmatmul.mubr.f32.gmra.mrb[0].mxu0 %v650
        %v735 = vpop.f32.mrb[0].mxu0
        %v736 = vadd.f32 0.0, %v735
        %v737 = vpop.f32.mrb[0].mxu0
        %738 = vmatprep.mubr.f32.mxu0 0.0
        %739 = vmatmul.mubr.f32.gmra.mrb[0].mxu0 %v653
        %v740 = vpop.f32.mrb[0].mxu0
        %v741 = vadd.f32 0.0, %v740
        %v742 = vpop.f32.mrb[0].mxu0
        %743 = vmatprep.mubr.f32.mxu0 0.0
        %744 = vmatmul.mubr.f32.gmra.mrb[0].mxu0 %v656
        %v745 = vpop.f32.mrb[0].mxu0
        %v746 = vadd.f32 0.0, %v745
        %v747 = vpop.f32.mrb[0].mxu0
        %748 = vmatprep.mubr.f32.mxu0 0.0
        %749 = vmatmul.mubr.f32.gmra.mrb[0].mxu0 %v659
        %v750 = vpop.f32.mrb[0].mxu0
        %v751 = vadd.f32 0.0, %v750
        %v752 = vpop.f32.mrb[0].mxu0
        %753 = vmatprep.mubr.f32.mxu0 0.0
        %754 = vmatmul.mubr.f32.gmra.mrb[0].mxu0 %v662
        %v755 = vpop.f32.mrb[0].mxu0
        %v756 = vadd.f32 0.0, %v755
        %v757 = vpop.f32.mrb[0].mxu0
        %758 = vdwg.mxu0
        %v759 = vpack.c.bf16 %v736, %v731
        %v760 = vpack.c.bf16 %v746, %v741
        %v761 = vpack.c.bf16 %v756, %v751
        %v762 = vld [vmem:[%s574] sm:$0xf]
        %v763 = vld [vmem:[%s574 + $0x4] sm:$0xf]
        %v764 = vld [vmem:[%s574 + $0x8] sm:$0xf]
        %v765 = vld [vmem:[%s574 + $0xc] sm:$0xf]
        %v766 = vld [vmem:[%s574 + $0x10] sm:$0xf]
        %v767 = vld [vmem:[%s574 + $0x14] sm:$0xf]
        %v768 = vld [vmem:[%s574 + $0x18] sm:$0xf]
        %v769 = vld [vmem:[%s574 + $0x1c] sm:$0xf]
        %v770 = vld [vmem:[%s574 + $0x20] sm:$0xf]
        %v771 = vld [vmem:[%s574 + $0x24] sm:$0xf]
        %v772 = vld [vmem:[%s574 + $0x28] sm:$0xf]
        %v773 = vld [vmem:[%s574 + $0x2c] sm:$0xf]
        %v774 = vld [vmem:[%s574 + $0x30] sm:$0xf]
        %v775 = vld [vmem:[%s574 + $0x34] sm:$0xf]
        %v776 = vld [vmem:[%s574 + $0x38] sm:$0xf]
        %v777 = vld [vmem:[%s574 + $0x3c] sm:$0xf]
        %v778 = vld [vmem:[%s577] sm:$0x1]
        %v780 = vlaneseq
        %v781 = vshrl.u32 %v780, 7
        %v782 = vsub.s32 0, %v781
        %v783 = vrot.slane %v778, %v782
        %v801 = vunpack.c.l.b16 %v762
        %v802 = vunpack.c.l.b16 %v763
        %v803 = vunpack.c.l.b16 %v764
        %v804 = vunpack.c.l.b16 %v765
        %v805 = vunpack.c.l.b16 %v766
        %v806 = vunpack.c.l.b16 %v767
        %v807 = vunpack.c.l.b16 %v768
        %v808 = vunpack.c.l.b16 %v769
        %v809 = vunpack.c.l.b16 %v770
        %v810 = vunpack.c.l.b16 %v771
        %v811 = vunpack.c.l.b16 %v772
        %v812 = vunpack.c.l.b16 %v773
        %v813 = vunpack.c.l.b16 %v774
        %v814 = vunpack.c.l.b16 %v775
        %v815 = vunpack.c.l.b16 %v776
        %v816 = vunpack.c.l.b16 %v777
        %v817 = vpack.c.b16 %v802, %v801
        %v818 = vpack.c.b16 %v804, %v803
        %v819 = vpack.c.b16 %v806, %v805
        %v820 = vpack.c.b16 %v808, %v807
        %v821 = vpack.c.b16 %v810, %v809
        %v822 = vpack.c.b16 %v812, %v811
        %v823 = vpack.c.b16 %v814, %v813
        %v824 = vpack.c.b16 %v816, %v815
        %833 = vmatprep.subr.bf16.mxu0 0
        %834 = vmatpush1.bf16.msra.mxu0 %v817
        %835 = vmatprep.subr.bf16.mxu0 0
        %836 = vmatpush1.bf16.msra.mxu0 %v818
        %837 = vmatprep.subr.bf16.mxu0 0
        %838 = vmatpush1.bf16.msra.mxu0 %v819
        %839 = vmatprep.subr.bf16.mxu0 0
        %840 = vmatpush1.bf16.msra.mxu0 %v820
        %841 = vmatprep.subr.bf16.mxu0 0
        %842 = vmatpush1.bf16.msra.mxu0 %v821
        %843 = vmatprep.subr.bf16.mxu0 0
        %844 = vmatpush1.bf16.msra.mxu0 %v822
        %845 = vmatprep.subr.bf16.mxu0 0
        %846 = vmatpush1.bf16.msra.mxu0 %v823
        %847 = vmatprep.subr.bf16.mxu0 0
        %848 = vmatpush1.bf16.msra.mxu0 %v824
        %849 = vmatprep.subr.bf16.mxu0 0
        %850 = vmatpush1.bf16.msra.mxu0 0
        %851 = vmatprep.subr.bf16.mxu0 0
        %852 = vmatpush1.bf16.msra.mxu0 0
        %853 = vmatprep.subr.bf16.mxu0 0
        %854 = vmatpush1.bf16.msra.mxu0 0
        %855 = vmatprep.subr.bf16.mxu0 0
        %856 = vmatpush1.bf16.msra.mxu0 0
        %857 = vmatprep.subr.bf16.mxu0 0
        %858 = vmatpush1.bf16.msra.mxu0 0
        %859 = vmatprep.subr.bf16.mxu0 0
        %860 = vmatpush1.bf16.msra.mxu0 0
        %861 = vmatprep.subr.bf16.mxu0 0
        %862 = vmatpush1.bf16.msra.mxu0 0
        %863 = vmatprep.subr.bf16.mxu0 0
        %864 = vmatpush1.bf16.msra.mxu0 0
        %865 = vmatprep.mubr.bf16.mxu0 0
        %866 = vmatmul.mubr.bf16.gmra.mrb[0].mxu0 %v759
        %v867 = vpop.f32.mrb[0].mxu0
        %v868 = vadd.f32 %v783, %v867
        %v869 = vpop.f32.mrb[0].mxu0
        %v870 = vpop.f32.mrb[0].mxu0
        %v871 = vadd.f32 %v783, %v870
        %v872 = vpop.f32.mrb[0].mxu0
        %873 = vmatprep.mubr.bf16.mxu0 0
        %874 = vmatmul.mubr.bf16.gmra.mrb[0].mxu0 %v760
        %v875 = vpop.f32.mrb[0].mxu0
        %v876 = vadd.f32 %v783, %v875
        %v877 = vpop.f32.mrb[0].mxu0
        %v878 = vpop.f32.mrb[0].mxu0
        %v879 = vadd.f32 %v783, %v878
        %v880 = vpop.f32.mrb[0].mxu0
        %881 = vmatprep.mubr.bf16.mxu0 0
        %882 = vmatmul.mubr.bf16.gmra.mrb[0].mxu0 %v761
        %v883 = vpop.f32.mrb[0].mxu0
        %v884 = vadd.f32 %v783, %v883
        %v885 = vpop.f32.mrb[0].mxu0
        %v886 = vpop.f32.mrb[0].mxu0
        %v887 = vadd.f32 %v783, %v886
        %v888 = vpop.f32.mrb[0].mxu0
        %889 = vdwg.mxu0
        %v890 = vld [vmem:[%s582] sm:$0xf]
        %v891 = vld [vmem:[%s582 + $0x4] sm:$0xf]
        %v892 = vld [vmem:[%s582 + $0x8] sm:$0xf]
        %v893 = vld [vmem:[%s582 + $0xc] sm:$0xf]
        %v894 = vld [vmem:[%s582 + $0x10] sm:$0xf]
        %v895 = vld [vmem:[%s582 + $0x14] sm:$0xf]
        %v896 = vld [vmem:[%s582 + $0x18] sm:$0xf]
        %v897 = vld [vmem:[%s582 + $0x1c] sm:$0xf]
        %v898 = vld [vmem:[%s582 + $0x20] sm:$0xf]
        %v899 = vld [vmem:[%s582 + $0x24] sm:$0xf]
        %v900 = vld [vmem:[%s582 + $0x28] sm:$0xf]
        %v901 = vld [vmem:[%s582 + $0x2c] sm:$0xf]
        %v902 = vld [vmem:[%s582 + $0x30] sm:$0xf]
        %v903 = vld [vmem:[%s582 + $0x34] sm:$0xf]
        %v904 = vld [vmem:[%s582 + $0x38] sm:$0xf]
        %v905 = vld [vmem:[%s582 + $0x3c] sm:$0xf]
        %v906 = vld [vmem:[%s582 + $0x40] sm:$0xf]
        %v907 = vld [vmem:[%s582 + $0x44] sm:$0xf]
        %v908 = vld [vmem:[%s582 + $0x48] sm:$0xf]
        %v909 = vld [vmem:[%s582 + $0x4c] sm:$0xf]
        %v910 = vld [vmem:[%s582 + $0x50] sm:$0xf]
        %v911 = vld [vmem:[%s582 + $0x54] sm:$0xf]
        %v912 = vld [vmem:[%s582 + $0x58] sm:$0xf]
        %v913 = vld [vmem:[%s582 + $0x5c] sm:$0xf]
        %v914 = vld [vmem:[%s582 + $0x60] sm:$0xf]
        %v915 = vld [vmem:[%s582 + $0x64] sm:$0xf]
        %v916 = vld [vmem:[%s582 + $0x68] sm:$0xf]
        %v917 = vld [vmem:[%s582 + $0x6c] sm:$0xf]
        %v918 = vld [vmem:[%s582 + $0x70] sm:$0xf]
        %v919 = vld [vmem:[%s582 + $0x74] sm:$0xf]
        %v920 = vld [vmem:[%s582 + $0x78] sm:$0xf]
        %v921 = vld [vmem:[%s582 + $0x7c] sm:$0xf]
        %v922 = vld [vmem:[%s582 + $0x80] sm:$0xf]
        %v923 = vld [vmem:[%s582 + $0x84] sm:$0xf]
        %v924 = vld [vmem:[%s582 + $0x88] sm:$0xf]
        %v925 = vld [vmem:[%s582 + $0x8c] sm:$0xf]
        %v926 = vld [vmem:[%s582 + $0x90] sm:$0xf]
        %v927 = vld [vmem:[%s582 + $0x94] sm:$0xf]
        %v928 = vld [vmem:[%s582 + $0x98] sm:$0xf]
        %v929 = vld [vmem:[%s582 + $0x9c] sm:$0xf]
        %v930 = vld [vmem:[%s582 + $0xa0] sm:$0xf]
        %v931 = vld [vmem:[%s582 + $0xa4] sm:$0xf]
        %v932 = vld [vmem:[%s582 + $0xa8] sm:$0xf]
        %v933 = vld [vmem:[%s582 + $0xac] sm:$0xf]
        %v934 = vld [vmem:[%s582 + $0xb0] sm:$0xf]
        %v935 = vld [vmem:[%s582 + $0xb4] sm:$0xf]
        %v936 = vld [vmem:[%s582 + $0xb8] sm:$0xf]
        %v937 = vld [vmem:[%s582 + $0xbc] sm:$0xf]
        %v938 = vld [vmem:[%s582 + $0xc0] sm:$0xf]
        %v939 = vld [vmem:[%s582 + $0xc4] sm:$0xf]
        %v940 = vld [vmem:[%s582 + $0xc8] sm:$0xf]
        %v941 = vld [vmem:[%s582 + $0xcc] sm:$0xf]
        %v942 = vld [vmem:[%s582 + $0xd0] sm:$0xf]
        %v943 = vld [vmem:[%s582 + $0xd4] sm:$0xf]
        %v944 = vld [vmem:[%s582 + $0xd8] sm:$0xf]
        %v945 = vld [vmem:[%s582 + $0xdc] sm:$0xf]
        %v946 = vld [vmem:[%s582 + $0xe0] sm:$0xf]
        %v947 = vld [vmem:[%s582 + $0xe4] sm:$0xf]
        %v948 = vld [vmem:[%s582 + $0xe8] sm:$0xf]
        %v949 = vld [vmem:[%s582 + $0xec] sm:$0xf]
        %v950 = vpack.c.bf16 %v871, %v868
        %v951 = vpack.c.bf16 %v879, %v876
        %v952 = vpack.c.bf16 %v887, %v884
        %v1013 = vunpack.c.l.b16 %v890
        %v1014 = vunpack.c.l.b16 %v891
        %v1015 = vunpack.c.l.b16 %v892
        %v1016 = vunpack.c.l.b16 %v893
        %v1017 = vunpack.c.l.b16 %v894
        %v1018 = vunpack.c.l.b16 %v895
        %v1019 = vunpack.c.l.b16 %v896
        %v1020 = vunpack.c.l.b16 %v897
        %v1021 = vunpack.c.l.b16 %v898
        %v1022 = vunpack.c.l.b16 %v899
        %v1023 = vunpack.c.l.b16 %v900
        %v1024 = vunpack.c.l.b16 %v901
        %v1025 = vunpack.c.l.b16 %v902
        %v1026 = vunpack.c.l.b16 %v903
        %v1027 = vunpack.c.l.b16 %v904
        %v1028 = vunpack.c.l.b16 %v905
        %v1029 = vunpack.c.l.b16 %v906
        %v1030 = vunpack.c.l.b16 %v907
        %v1031 = vunpack.c.l.b16 %v908
        %v1032 = vunpack.c.l.b16 %v909
        %v1033 = vunpack.c.l.b16 %v910
        %v1034 = vunpack.c.l.b16 %v911
        %v1035 = vunpack.c.l.b16 %v912
        %v1036 = vunpack.c.l.b16 %v913
        %v1037 = vunpack.c.l.b16 %v914
        %v1038 = vunpack.c.l.b16 %v915
        %v1039 = vunpack.c.l.b16 %v916
        %v1040 = vunpack.c.l.b16 %v917
        %v1041 = vunpack.c.l.b16 %v918
        %v1042 = vunpack.c.l.b16 %v919
        %v1043 = vunpack.c.l.b16 %v920
        %v1044 = vunpack.c.l.b16 %v921
        %v1045 = vunpack.c.l.b16 %v922
        %v1046 = vunpack.c.l.b16 %v923
        %v1047 = vunpack.c.l.b16 %v924
        %v1048 = vunpack.c.l.b16 %v925
        %v1049 = vunpack.c.l.b16 %v926
        %v1050 = vunpack.c.l.b16 %v927
        %v1051 = vunpack.c.l.b16 %v928
        %v1052 = vunpack.c.l.b16 %v929
        %v1053 = vunpack.c.l.b16 %v930
        %v1054 = vunpack.c.l.b16 %v931
        %v1055 = vunpack.c.l.b16 %v932
        %v1056 = vunpack.c.l.b16 %v933
        %v1057 = vunpack.c.l.b16 %v934
        %v1058 = vunpack.c.l.b16 %v935
        %v1059 = vunpack.c.l.b16 %v936
        %v1060 = vunpack.c.l.b16 %v937
        %v1061 = vunpack.c.l.b16 %v938
        %v1062 = vunpack.c.l.b16 %v939
        %v1063 = vunpack.c.l.b16 %v940
        %v1064 = vunpack.c.l.b16 %v941
        %v1065 = vunpack.c.l.b16 %v942
        %v1066 = vunpack.c.l.b16 %v943
        %v1067 = vunpack.c.l.b16 %v944
        %v1068 = vunpack.c.l.b16 %v945
        %v1069 = vunpack.c.l.b16 %v946
        %v1070 = vunpack.c.l.b16 %v947
        %v1071 = vunpack.c.l.b16 %v948
        %v1072 = vunpack.c.l.b16 %v949
        %v1073 = vpack.c.b16 %v1014, %v1013
        %v1074 = vpack.c.b16 %v1016, %v1015
        %v1075 = vpack.c.b16 %v1018, %v1017
        %v1076 = vpack.c.b16 %v1020, %v1019
        %v1077 = vpack.c.b16 %v1022, %v1021
        %v1078 = vpack.c.b16 %v1024, %v1023
        %v1079 = vpack.c.b16 %v1026, %v1025
        %v1080 = vpack.c.b16 %v1028, %v1027
        %v1081 = vpack.c.b16 %v1030, %v1029
        %v1082 = vpack.c.b16 %v1032, %v1031
        %v1083 = vpack.c.b16 %v1034, %v1033
        %v1084 = vpack.c.b16 %v1036, %v1035
        %v1085 = vpack.c.b16 %v1038, %v1037
        %v1086 = vpack.c.b16 %v1040, %v1039
        %v1087 = vpack.c.b16 %v1042, %v1041
        %v1088 = vpack.c.b16 %v1044, %v1043
        %v1089 = vpack.c.b16 %v1046, %v1045
        %v1090 = vpack.c.b16 %v1048, %v1047
        %v1091 = vpack.c.b16 %v1050, %v1049
        %v1092 = vpack.c.b16 %v1052, %v1051
        %v1093 = vpack.c.b16 %v1054, %v1053
        %v1094 = vpack.c.b16 %v1056, %v1055
        %v1095 = vpack.c.b16 %v1058, %v1057
        %v1096 = vpack.c.b16 %v1060, %v1059
        %v1097 = vpack.c.b16 %v1062, %v1061
        %v1098 = vpack.c.b16 %v1064, %v1063
        %v1099 = vpack.c.b16 %v1066, %v1065
        %v1100 = vpack.c.b16 %v1068, %v1067
        %v1101 = vpack.c.b16 %v1070, %v1069
        %v1102 = vpack.c.b16 %v1072, %v1071
        %vm1103 = vcmask 392192
        %v1105 = vsel %vm1103, %v1073, 0
        %v1108 = vsel %vm1103, %v1074, 0
        %v1111 = vsel %vm1103, %v1075, 0
        %v1114 = vsel %vm1103, %v1076, 0
        %v1117 = vsel %vm1103, %v1077, 0
        %v1120 = vsel %vm1103, %v1078, 0
        %v1123 = vsel %vm1103, %v1079, 0
        %v1126 = vsel %vm1103, %v1080, 0
        %v1129 = vsel %vm1103, %v1081, 0
        %v1132 = vsel %vm1103, %v1082, 0
        %v1135 = vsel %vm1103, %v1083, 0
        %v1138 = vsel %vm1103, %v1084, 0
        %v1141 = vsel %vm1103, %v1085, 0
        %v1144 = vsel %vm1103, %v1086, 0
        %v1147 = vsel %vm1103, %v1087, 0
        %v1150 = vsel %vm1103, %v1088, 0
        %v1153 = vsel %vm1103, %v1089, 0
        %v1156 = vsel %vm1103, %v1090, 0
        %v1159 = vsel %vm1103, %v1091, 0
        %v1162 = vsel %vm1103, %v1092, 0
        %v1165 = vsel %vm1103, %v1093, 0
        %v1168 = vsel %vm1103, %v1094, 0
        %v1171 = vsel %vm1103, %v1095, 0
        %v1174 = vsel %vm1103, %v1096, 0
        %v1177 = vsel %vm1103, %v1097, 0
        %v1180 = vsel %vm1103, %v1098, 0
        %v1183 = vsel %vm1103, %v1099, 0
        %v1186 = vsel %vm1103, %v1100, 0
        %v1189 = vsel %vm1103, %v1101, 0
        %v1192 = vsel %vm1103, %v1102, 0
        %1194 = vmatprep.subr.bf16.mxu0 0
        %1195 = vmatpush1.bf16.msra.mxu0 %v950
        %1196 = vmatprep.subr.bf16.mxu0 0
        %1197 = vmatpush1.bf16.msra.mxu0 %v951
        %1198 = vmatprep.subr.bf16.mxu0 0
        %1199 = vmatpush1.bf16.msra.mxu0 %v952
        %1200 = vmatprep.subr.bf16.mxu0 0
        %1201 = vmatpush1.bf16.msra.mxu0 0
        %1202 = vmatprep.subr.bf16.mxu0 0
        %1203 = vmatpush1.bf16.msra.mxu0 0
        %1204 = vmatprep.subr.bf16.mxu0 0
        %1205 = vmatpush1.bf16.msra.mxu0 0
        %1206 = vmatprep.subr.bf16.mxu0 0
        %1207 = vmatpush1.bf16.msra.mxu0 0
        %1208 = vmatprep.subr.bf16.mxu0 0
        %1209 = vmatpush1.bf16.msra.mxu0 0
        %1210 = vmatprep.subr.bf16.mxu0 0
        %1211 = vmatpush1.bf16.msra.mxu0 0
        %1212 = vmatprep.subr.bf16.mxu0 0
        %1213 = vmatpush1.bf16.msra.mxu0 0
        %1214 = vmatprep.subr.bf16.mxu0 0
        %1215 = vmatpush1.bf16.msra.mxu0 0
        %1216 = vmatprep.subr.bf16.mxu0 0
        %1217 = vmatpush1.bf16.msra.mxu0 0
        %1218 = vmatprep.subr.bf16.mxu0 0
        %1219 = vmatpush1.bf16.msra.mxu0 0
        %1220 = vmatprep.subr.bf16.mxu0 0
        %1221 = vmatpush1.bf16.msra.mxu0 0
        %1222 = vmatprep.subr.bf16.mxu0 0
        %1223 = vmatpush1.bf16.msra.mxu0 0
        %1224 = vmatprep.subr.bf16.mxu0 0
        %1225 = vmatpush1.bf16.msra.mxu0 0
        %1226 = vmatprep.mubr.bf16.mxu0 0
        %1227 = vmatmul.mubr.bf16.gmra.mrb[0].mxu0 %v1105
        %v1228 = vpop.f32.mrb[0].mxu0
        %v1229 = vadd.f32 0.0, %v1228
        %v1230 = vpop.f32.mrb[0].mxu0
        %v1231 = vpop.f32.mrb[0].mxu0
        %v1232 = vadd.f32 0.0, %v1231
        %v1233 = vpop.f32.mrb[0].mxu0
        %1234 = vmatprep.mubr.bf16.mxu0 0
        %1235 = vmatmul.mubr.bf16.gmra.mrb[0].mxu0 %v1108
        %v1236 = vpop.f32.mrb[0].mxu0
        %v1237 = vadd.f32 0.0, %v1236
        %v1238 = vpop.f32.mrb[0].mxu0
        %v1239 = vpop.f32.mrb[0].mxu0
        %v1240 = vadd.f32 0.0, %v1239
        %v1241 = vpop.f32.mrb[0].mxu0
        %1242 = vmatprep.mubr.bf16.mxu0 0
        %1243 = vmatmul.mubr.bf16.gmra.mrb[0].mxu0 %v1111
        %v1244 = vpop.f32.mrb[0].mxu0
        %v1245 = vadd.f32 0.0, %v1244
        %v1246 = vpop.f32.mrb[0].mxu0
        %v1247 = vpop.f32.mrb[0].mxu0
        %v1248 = vadd.f32 0.0, %v1247
        %v1249 = vpop.f32.mrb[0].mxu0
        %1250 = vmatprep.mubr.bf16.mxu0 0
        %1251 = vmatmul.mubr.bf16.gmra.mrb[0].mxu0 %v1114
        %v1252 = vpop.f32.mrb[0].mxu0
        %v1253 = vadd.f32 0.0, %v1252
        %v1254 = vpop.f32.mrb[0].mxu0
        %v1255 = vpop.f32.mrb[0].mxu0
        %v1256 = vadd.f32 0.0, %v1255
        %v1257 = vpop.f32.mrb[0].mxu0
        %1258 = vmatprep.mubr.bf16.mxu0 0
        %1259 = vmatmul.mubr.bf16.gmra.mrb[0].mxu0 %v1117
        %v1260 = vpop.f32.mrb[0].mxu0
        %v1261 = vadd.f32 0.0, %v1260
        %v1262 = vpop.f32.mrb[0].mxu0
        %v1263 = vpop.f32.mrb[0].mxu0
        %v1264 = vadd.f32 0.0, %v1263
        %v1265 = vpop.f32.mrb[0].mxu0
        %1266 = vmatprep.mubr.bf16.mxu0 0
        %1267 = vmatmul.mubr.bf16.gmra.mrb[0].mxu0 %v1120
        %v1268 = vpop.f32.mrb[0].mxu0
        %v1269 = vadd.f32 0.0, %v1268
        %v1270 = vpop.f32.mrb[0].mxu0
        %v1271 = vpop.f32.mrb[0].mxu0
        %v1272 = vadd.f32 0.0, %v1271
        %v1273 = vpop.f32.mrb[0].mxu0
        %1274 = vmatprep.mubr.bf16.mxu0 0
        %1275 = vmatmul.mubr.bf16.gmra.mrb[0].mxu0 %v1123
        %v1276 = vpop.f32.mrb[0].mxu0
        %v1277 = vadd.f32 0.0, %v1276
        %v1278 = vpop.f32.mrb[0].mxu0
        %v1279 = vpop.f32.mrb[0].mxu0
        %v1280 = vadd.f32 0.0, %v1279
        %v1281 = vpop.f32.mrb[0].mxu0
        %1282 = vmatprep.mubr.bf16.mxu0 0
        %1283 = vmatmul.mubr.bf16.gmra.mrb[0].mxu0 %v1126
        %v1284 = vpop.f32.mrb[0].mxu0
        %v1285 = vadd.f32 0.0, %v1284
        %v1286 = vpop.f32.mrb[0].mxu0
        %v1287 = vpop.f32.mrb[0].mxu0
        %v1288 = vadd.f32 0.0, %v1287
        %v1289 = vpop.f32.mrb[0].mxu0
        %1290 = vmatprep.mubr.bf16.mxu0 0
        %1291 = vmatmul.mubr.bf16.gmra.mrb[0].mxu0 %v1129
        %v1292 = vpop.f32.mrb[0].mxu0
        %v1293 = vadd.f32 0.0, %v1292
        %v1294 = vpop.f32.mrb[0].mxu0
        %v1295 = vpop.f32.mrb[0].mxu0
        %v1296 = vadd.f32 0.0, %v1295
        %v1297 = vpop.f32.mrb[0].mxu0
        %1298 = vmatprep.mubr.bf16.mxu0 0
        %1299 = vmatmul.mubr.bf16.gmra.mrb[0].mxu0 %v1132
        %v1300 = vpop.f32.mrb[0].mxu0
        %v1301 = vadd.f32 0.0, %v1300
        %v1302 = vpop.f32.mrb[0].mxu0
        %v1303 = vpop.f32.mrb[0].mxu0
        %v1304 = vadd.f32 0.0, %v1303
        %v1305 = vpop.f32.mrb[0].mxu0
        %1306 = vmatprep.mubr.bf16.mxu0 0
        %1307 = vmatmul.mubr.bf16.gmra.mrb[0].mxu0 %v1135
        %v1308 = vpop.f32.mrb[0].mxu0
        %v1309 = vadd.f32 0.0, %v1308
        %v1310 = vpop.f32.mrb[0].mxu0
        %v1311 = vpop.f32.mrb[0].mxu0
        %v1312 = vadd.f32 0.0, %v1311
        %v1313 = vpop.f32.mrb[0].mxu0
        %1314 = vmatprep.mubr.bf16.mxu0 0
        %1315 = vmatmul.mubr.bf16.gmra.mrb[0].mxu0 %v1138
        %v1316 = vpop.f32.mrb[0].mxu0
        %v1317 = vadd.f32 0.0, %v1316
        %v1318 = vpop.f32.mrb[0].mxu0
        %v1319 = vpop.f32.mrb[0].mxu0
        %v1320 = vadd.f32 0.0, %v1319
        %v1321 = vpop.f32.mrb[0].mxu0
        %1322 = vmatprep.mubr.bf16.mxu0 0
        %1323 = vmatmul.mubr.bf16.gmra.mrb[0].mxu0 %v1141
        %v1324 = vpop.f32.mrb[0].mxu0
        %v1325 = vadd.f32 0.0, %v1324
        %v1326 = vpop.f32.mrb[0].mxu0
        %v1327 = vpop.f32.mrb[0].mxu0
        %v1328 = vadd.f32 0.0, %v1327
        %v1329 = vpop.f32.mrb[0].mxu0
        %1330 = vmatprep.mubr.bf16.mxu0 0
        %1331 = vmatmul.mubr.bf16.gmra.mrb[0].mxu0 %v1144
        %v1332 = vpop.f32.mrb[0].mxu0
        %v1333 = vadd.f32 0.0, %v1332
        %v1334 = vpop.f32.mrb[0].mxu0
        %v1335 = vpop.f32.mrb[0].mxu0
        %v1336 = vadd.f32 0.0, %v1335
        %v1337 = vpop.f32.mrb[0].mxu0
        %1338 = vmatprep.mubr.bf16.mxu0 0
        %1339 = vmatmul.mubr.bf16.gmra.mrb[0].mxu0 %v1147
        %v1340 = vpop.f32.mrb[0].mxu0
        %v1341 = vadd.f32 0.0, %v1340
        %v1342 = vpop.f32.mrb[0].mxu0
        %v1343 = vpop.f32.mrb[0].mxu0
        %v1344 = vadd.f32 0.0, %v1343
        %v1345 = vpop.f32.mrb[0].mxu0
        %1346 = vmatprep.mubr.bf16.mxu0 0
        %1347 = vmatmul.mubr.bf16.gmra.mrb[0].mxu0 %v1150
        %v1348 = vpop.f32.mrb[0].mxu0
        %v1349 = vadd.f32 0.0, %v1348
        %v1350 = vpop.f32.mrb[0].mxu0
        %v1351 = vpop.f32.mrb[0].mxu0
        %v1352 = vadd.f32 0.0, %v1351
        %v1353 = vpop.f32.mrb[0].mxu0
        %1354 = vmatprep.mubr.bf16.mxu0 0
        %1355 = vmatmul.mubr.bf16.gmra.mrb[0].mxu0 %v1153
        %v1356 = vpop.f32.mrb[0].mxu0
        %v1357 = vadd.f32 0.0, %v1356
        %v1358 = vpop.f32.mrb[0].mxu0
        %v1359 = vpop.f32.mrb[0].mxu0
        %v1360 = vadd.f32 0.0, %v1359
        %v1361 = vpop.f32.mrb[0].mxu0
        %1362 = vmatprep.mubr.bf16.mxu0 0
        %1363 = vmatmul.mubr.bf16.gmra.mrb[0].mxu0 %v1156
        %v1364 = vpop.f32.mrb[0].mxu0
        %v1365 = vadd.f32 0.0, %v1364
        %v1366 = vpop.f32.mrb[0].mxu0
        %v1367 = vpop.f32.mrb[0].mxu0
        %v1368 = vadd.f32 0.0, %v1367
        %v1369 = vpop.f32.mrb[0].mxu0
        %1370 = vmatprep.mubr.bf16.mxu0 0
        %1371 = vmatmul.mubr.bf16.gmra.mrb[0].mxu0 %v1159
        %v1372 = vpop.f32.mrb[0].mxu0
        %v1373 = vadd.f32 0.0, %v1372
        %v1374 = vpop.f32.mrb[0].mxu0
        %v1375 = vpop.f32.mrb[0].mxu0
        %v1376 = vadd.f32 0.0, %v1375
        %v1377 = vpop.f32.mrb[0].mxu0
        %1378 = vmatprep.mubr.bf16.mxu0 0
        %1379 = vmatmul.mubr.bf16.gmra.mrb[0].mxu0 %v1162
        %v1380 = vpop.f32.mrb[0].mxu0
        %v1381 = vadd.f32 0.0, %v1380
        %v1382 = vpop.f32.mrb[0].mxu0
        %v1383 = vpop.f32.mrb[0].mxu0
        %v1384 = vadd.f32 0.0, %v1383
        %v1385 = vpop.f32.mrb[0].mxu0
        %1386 = vmatprep.mubr.bf16.mxu0 0
        %1387 = vmatmul.mubr.bf16.gmra.mrb[0].mxu0 %v1165
        %v1388 = vpop.f32.mrb[0].mxu0
        %v1389 = vadd.f32 0.0, %v1388
        %v1390 = vpop.f32.mrb[0].mxu0
        %v1391 = vpop.f32.mrb[0].mxu0
        %v1392 = vadd.f32 0.0, %v1391
        %v1393 = vpop.f32.mrb[0].mxu0
        %1394 = vmatprep.mubr.bf16.mxu0 0
        %1395 = vmatmul.mubr.bf16.gmra.mrb[0].mxu0 %v1168
        %v1396 = vpop.f32.mrb[0].mxu0
        %v1397 = vadd.f32 0.0, %v1396
        %v1398 = vpop.f32.mrb[0].mxu0
        %v1399 = vpop.f32.mrb[0].mxu0
        %v1400 = vadd.f32 0.0, %v1399
        %v1401 = vpop.f32.mrb[0].mxu0
        %1402 = vmatprep.mubr.bf16.mxu0 0
        %1403 = vmatmul.mubr.bf16.gmra.mrb[0].mxu0 %v1171
        %v1404 = vpop.f32.mrb[0].mxu0
        %v1405 = vadd.f32 0.0, %v1404
        %v1406 = vpop.f32.mrb[0].mxu0
        %v1407 = vpop.f32.mrb[0].mxu0
        %v1408 = vadd.f32 0.0, %v1407
        %v1409 = vpop.f32.mrb[0].mxu0
        %1410 = vmatprep.mubr.bf16.mxu0 0
        %1411 = vmatmul.mubr.bf16.gmra.mrb[0].mxu0 %v1174
        %v1412 = vpop.f32.mrb[0].mxu0
        %v1413 = vadd.f32 0.0, %v1412
        %v1414 = vpop.f32.mrb[0].mxu0
        %v1415 = vpop.f32.mrb[0].mxu0
        %v1416 = vadd.f32 0.0, %v1415
        %v1417 = vpop.f32.mrb[0].mxu0
        %1418 = vmatprep.mubr.bf16.mxu0 0
        %1419 = vmatmul.mubr.bf16.gmra.mrb[0].mxu0 %v1177
        %v1420 = vpop.f32.mrb[0].mxu0
        %v1421 = vadd.f32 0.0, %v1420
        %v1422 = vpop.f32.mrb[0].mxu0
        %v1423 = vpop.f32.mrb[0].mxu0
        %v1424 = vadd.f32 0.0, %v1423
        %v1425 = vpop.f32.mrb[0].mxu0
        %1426 = vmatprep.mubr.bf16.mxu0 0
        %1427 = vmatmul.mubr.bf16.gmra.mrb[0].mxu0 %v1180
        %v1428 = vpop.f32.mrb[0].mxu0
        %v1429 = vadd.f32 0.0, %v1428
        %v1430 = vpop.f32.mrb[0].mxu0
        %v1431 = vpop.f32.mrb[0].mxu0
        %v1432 = vadd.f32 0.0, %v1431
        %v1433 = vpop.f32.mrb[0].mxu0
        %1434 = vmatprep.mubr.bf16.mxu0 0
        %1435 = vmatmul.mubr.bf16.gmra.mrb[0].mxu0 %v1183
        %v1436 = vpop.f32.mrb[0].mxu0
        %v1437 = vadd.f32 0.0, %v1436
        %v1438 = vpop.f32.mrb[0].mxu0
        %v1439 = vpop.f32.mrb[0].mxu0
        %v1440 = vadd.f32 0.0, %v1439
        %v1441 = vpop.f32.mrb[0].mxu0
        %1442 = vmatprep.mubr.bf16.mxu0 0
        %1443 = vmatmul.mubr.bf16.gmra.mrb[0].mxu0 %v1186
        %v1444 = vpop.f32.mrb[0].mxu0
        %v1445 = vadd.f32 0.0, %v1444
        %v1446 = vpop.f32.mrb[0].mxu0
        %v1447 = vpop.f32.mrb[0].mxu0
        %v1448 = vadd.f32 0.0, %v1447
        %v1449 = vpop.f32.mrb[0].mxu0
        %1450 = vmatprep.mubr.bf16.mxu0 0
        %1451 = vmatmul.mubr.bf16.gmra.mrb[0].mxu0 %v1189
        %v1452 = vpop.f32.mrb[0].mxu0
        %v1453 = vadd.f32 0.0, %v1452
        %v1454 = vpop.f32.mrb[0].mxu0
        %v1455 = vpop.f32.mrb[0].mxu0
        %v1456 = vadd.f32 0.0, %v1455
        %v1457 = vpop.f32.mrb[0].mxu0
        %1458 = vmatprep.mubr.bf16.mxu0 0
        %1459 = vmatmul.mubr.bf16.gmra.mrb[0].mxu0 %v1192
        %v1460 = vpop.f32.mrb[0].mxu0
        %v1461 = vadd.f32 0.0, %v1460
        %v1462 = vpop.f32.mrb[0].mxu0
        %v1463 = vpop.f32.mrb[0].mxu0
        %v1464 = vadd.f32 0.0, %v1463
        %v1465 = vpop.f32.mrb[0].mxu0
        %1466 = vdwg.mxu0
        %v1467 = vld [vmem:[%s587] sm:$0xff]
        %v1468 = vld [vmem:[%s587 + $0x8] sm:$0xff]
        %v1469 = vld [vmem:[%s587 + $0x10] sm:$0xff]
        %v1470 = vld [vmem:[%s587 + $0x18] sm:$0xff]
        %v1471 = vld [vmem:[%s587 + $0x20] sm:$0xff]
        %v1472 = vld [vmem:[%s587 + $0x28] sm:$0xff]
        %v1473 = vld [vmem:[#allocation6] sm:$0xff]
        %v1474 = vld [vmem:[#allocation6 + $0x8] sm:$0xff]
        %v1475 = vld [vmem:[#allocation6 + $0x10] sm:$0xff]
        %v1476 = vld [vmem:[#allocation6 + $0x18] sm:$0xff]
        %v1477 = vld [vmem:[#allocation6 + $0x20] sm:$0xff]
        %v1478 = vld [vmem:[#allocation6 + $0x28] sm:$0xff]
        %v1479 = vld [vmem:[#allocation6 + $0x30] sm:$0xff]
        %v1480 = vld [vmem:[#allocation6 + $0x38] sm:$0xff]
        %v1481 = vld [vmem:[#allocation6 + $0x40] sm:$0xff]
        %v1482 = vld [vmem:[#allocation6 + $0x48] sm:$0xff]
        %v1483 = vld [vmem:[#allocation6 + $0x50] sm:$0xff]
        %v1484 = vld [vmem:[#allocation6 + $0x58] sm:$0xff]
        %v1485 = vld [vmem:[#allocation6 + $0x60] sm:$0xff]
        %v1486 = vld [vmem:[#allocation6 + $0x68] sm:$0xff]
        %v1487 = vld [vmem:[#allocation6 + $0x70] sm:$0xff]
        %v1488 = vld [vmem:[#allocation6 + $0x78] sm:$0xff]
        %1489 = vmatprep.subr.mxu0 0.0
        %1490 = vmatpush1.msra.mxu0 %v1473
        %1491 = vmatprep.subr.mxu0 0.0
        %1492 = vmatpush1.msra.mxu0 %v1474
        %1493 = vmatprep.subr.mxu0 0.0
        %1494 = vmatpush1.msra.mxu0 %v1475
        %1495 = vmatprep.subr.mxu0 0.0
        %1496 = vmatpush1.msra.mxu0 %v1476
        %1497 = vmatprep.subr.mxu0 0.0
        %1498 = vmatpush1.msra.mxu0 %v1477
        %1499 = vmatprep.subr.mxu0 0.0
        %1500 = vmatpush1.msra.mxu0 %v1478
        %1501 = vmatprep.subr.mxu0 0.0
        %1502 = vmatpush1.msra.mxu0 %v1479
        %1503 = vmatprep.subr.mxu0 0.0
        %1504 = vmatpush1.msra.mxu0 %v1480
        %1505 = vmatprep.subr.mxu0 0.0
        %1506 = vmatpush1.msra.mxu0 %v1481
        %1507 = vmatprep.subr.mxu0 0.0
        %1508 = vmatpush1.msra.mxu0 %v1482
        %1509 = vmatprep.subr.mxu0 0.0
        %1510 = vmatpush1.msra.mxu0 %v1483
        %1511 = vmatprep.subr.mxu0 0.0
        %1512 = vmatpush1.msra.mxu0 %v1484
        %1513 = vmatprep.subr.mxu0 0.0
        %1514 = vmatpush1.msra.mxu0 %v1485
        %1515 = vmatprep.subr.mxu0 0.0
        %1516 = vmatpush1.msra.mxu0 %v1486
        %1517 = vmatprep.subr.mxu0 0.0
        %1518 = vmatpush1.msra.mxu0 %v1487
        %1519 = vmatprep.subr.mxu0 0.0
        %1520 = vmatpush1.msra.mxu0 %v1488
        %1521 = vmatprep.subr.mxu0 0.0
        %1522 = vmatpush1.msra.mxu0 0.0
        %1523 = vmatprep.subr.mxu0 0.0
        %1524 = vmatpush1.msra.mxu0 0.0
        %1525 = vmatprep.subr.mxu0 0.0
        %1526 = vmatpush1.msra.mxu0 0.0
        %1527 = vmatprep.subr.mxu0 0.0
        %1528 = vmatpush1.msra.mxu0 0.0
        %1529 = vmatprep.subr.mxu0 0.0
        %1530 = vmatpush1.msra.mxu0 0.0
        %1531 = vmatprep.subr.mxu0 0.0
        %1532 = vmatpush1.msra.mxu0 0.0
        %1533 = vmatprep.subr.mxu0 0.0
        %1534 = vmatpush1.msra.mxu0 0.0
        %1535 = vmatprep.subr.mxu0 0.0
        %1536 = vmatpush1.msra.mxu0 0.0
        %1537 = vmatprep.subr.mxu0 0.0
        %1538 = vmatpush1.msra.mxu0 0.0
        %1539 = vmatprep.subr.mxu0 0.0
        %1540 = vmatpush1.msra.mxu0 0.0
        %1541 = vmatprep.subr.mxu0 0.0
        %1542 = vmatpush1.msra.mxu0 0.0
        %1543 = vmatprep.subr.mxu0 0.0
        %1544 = vmatpush1.msra.mxu0 0.0
        %1545 = vmatprep.subr.mxu0 0.0
        %1546 = vmatpush1.msra.mxu0 0.0
        %1547 = vmatprep.subr.mxu0 0.0
        %1548 = vmatpush1.msra.mxu0 0.0
        %1549 = vmatprep.subr.mxu0 0.0
        %1550 = vmatpush1.msra.mxu0 0.0
        %1551 = vmatprep.subr.mxu0 0.0
        %1552 = vmatpush1.msra.mxu0 0.0
        %1553 = vmatprep.mubr.f32.mxu0 0.0
        %1554 = vmatmul.mubr.f32.gmra.mrb[0].mxu0 %v1229
        %v1555 = vpop.f32.mrb[0].mxu0
        %v1556 = vadd.f32 0.0, %v1555
        %v1557 = vpop.f32.mrb[0].mxu0
        %1558 = vmatprep.mubr.f32.mxu0 0.0
        %1559 = vmatmul.mubr.f32.gmra.mrb[0].mxu0 %v1232
        %v1560 = vpop.f32.mrb[0].mxu0
        %v1561 = vadd.f32 0.0, %v1560
        %v1562 = vpop.f32.mrb[0].mxu0
        %1563 = vmatprep.mubr.f32.mxu0 0.0
        %1564 = vmatmul.mubr.f32.gmra.mrb[0].mxu0 %v1237
        %v1565 = vpop.f32.mrb[0].mxu0
        %v1566 = vadd.f32 0.0, %v1565
        %v1567 = vpop.f32.mrb[0].mxu0
        %1568 = vmatprep.mubr.f32.mxu0 0.0
        %1569 = vmatmul.mubr.f32.gmra.mrb[0].mxu0 %v1240
        %v1570 = vpop.f32.mrb[0].mxu0
        %v1571 = vadd.f32 0.0, %v1570
        %v1572 = vpop.f32.mrb[0].mxu0
        %1573 = vmatprep.mubr.f32.mxu0 0.0
        %1574 = vmatmul.mubr.f32.gmra.mrb[0].mxu0 %v1245
        %v1575 = vpop.f32.mrb[0].mxu0
        %v1576 = vadd.f32 0.0, %v1575
        %v1577 = vpop.f32.mrb[0].mxu0
        %1578 = vmatprep.mubr.f32.mxu0 0.0
        %1579 = vmatmul.mubr.f32.gmra.mrb[0].mxu0 %v1248
        %v1580 = vpop.f32.mrb[0].mxu0
        %v1581 = vadd.f32 0.0, %v1580
        %v1582 = vpop.f32.mrb[0].mxu0
        %1583 = vdwg.mxu0
        %v1584 = vadd.f32 %v1467, %v1556
        %v1585 = vadd.f32 %v1468, %v1561
        %v1586 = vadd.f32 %v1469, %v1566
        %v1587 = vadd.f32 %v1470, %v1571
        %v1588 = vadd.f32 %v1471, %v1576
        %v1589 = vadd.f32 %v1472, %v1581
        %s1590 = scalar_lea.vmem [#allocation6], 128
        %v1591 = vld [vmem:[%s1590] sm:$0xff]
        %v1592 = vld [vmem:[%s1590 + $0x8] sm:$0xff]
        %v1593 = vld [vmem:[%s1590 + $0x10] sm:$0xff]
        %v1594 = vld [vmem:[%s1590 + $0x18] sm:$0xff]
        %v1595 = vld [vmem:[%s1590 + $0x20] sm:$0xff]
        %v1596 = vld [vmem:[%s1590 + $0x28] sm:$0xff]
        %v1597 = vld [vmem:[%s1590 + $0x30] sm:$0xff]
        %v1598 = vld [vmem:[%s1590 + $0x38] sm:$0xff]
        %v1599 = vld [vmem:[%s1590 + $0x40] sm:$0xff]
        %v1600 = vld [vmem:[%s1590 + $0x48] sm:$0xff]
        %v1601 = vld [vmem:[%s1590 + $0x50] sm:$0xff]
        %v1602 = vld [vmem:[%s1590 + $0x58] sm:$0xff]
        %v1603 = vld [vmem:[%s1590 + $0x60] sm:$0xff]
        %v1604 = vld [vmem:[%s1590 + $0x68] sm:$0xff]
        %v1605 = vld [vmem:[%s1590 + $0x70] sm:$0xff]
        %v1606 = vld [vmem:[%s1590 + $0x78] sm:$0xff]
        %1607 = vmatprep.subr.mxu0 0.0
        %1608 = vmatpush1.msra.mxu0 %v1591
        %1609 = vmatprep.subr.mxu0 0.0
        %1610 = vmatpush1.msra.mxu0 %v1592
        %1611 = vmatprep.subr.mxu0 0.0
        %1612 = vmatpush1.msra.mxu0 %v1593
        %1613 = vmatprep.subr.mxu0 0.0
        %1614 = vmatpush1.msra.mxu0 %v1594
        %1615 = vmatprep.subr.mxu0 0.0
        %1616 = vmatpush1.msra.mxu0 %v1595
        %1617 = vmatprep.subr.mxu0 0.0
        %1618 = vmatpush1.msra.mxu0 %v1596
        %1619 = vmatprep.subr.mxu0 0.0
        %1620 = vmatpush1.msra.mxu0 %v1597
        %1621 = vmatprep.subr.mxu0 0.0
        %1622 = vmatpush1.msra.mxu0 %v1598
        %1623 = vmatprep.subr.mxu0 0.0
        %1624 = vmatpush1.msra.mxu0 %v1599
        %1625 = vmatprep.subr.mxu0 0.0
        %1626 = vmatpush1.msra.mxu0 %v1600
        %1627 = vmatprep.subr.mxu0 0.0
        %1628 = vmatpush1.msra.mxu0 %v1601
        %1629 = vmatprep.subr.mxu0 0.0
        %1630 = vmatpush1.msra.mxu0 %v1602
        %1631 = vmatprep.subr.mxu0 0.0
        %1632 = vmatpush1.msra.mxu0 %v1603
        %1633 = vmatprep.subr.mxu0 0.0
        %1634 = vmatpush1.msra.mxu0 %v1604
        %1635 = vmatprep.subr.mxu0 0.0
        %1636 = vmatpush1.msra.mxu0 %v1605
        %1637 = vmatprep.subr.mxu0 0.0
        %1638 = vmatpush1.msra.mxu0 %v1606
        %1639 = vmatprep.subr.mxu0 0.0
        %1640 = vmatpush1.msra.mxu0 0.0
        %1641 = vmatprep.subr.mxu0 0.0
        %1642 = vmatpush1.msra.mxu0 0.0
        %1643 = vmatprep.subr.mxu0 0.0
        %1644 = vmatpush1.msra.mxu0 0.0
        %1645 = vmatprep.subr.mxu0 0.0
        %1646 = vmatpush1.msra.mxu0 0.0
        %1647 = vmatprep.subr.mxu0 0.0
        %1648 = vmatpush1.msra.mxu0 0.0
        %1649 = vmatprep.subr.mxu0 0.0
        %1650 = vmatpush1.msra.mxu0 0.0
        %1651 = vmatprep.subr.mxu0 0.0
        %1652 = vmatpush1.msra.mxu0 0.0
        %1653 = vmatprep.subr.mxu0 0.0
        %1654 = vmatpush1.msra.mxu0 0.0
        %1655 = vmatprep.subr.mxu0 0.0
        %1656 = vmatpush1.msra.mxu0 0.0
        %1657 = vmatprep.subr.mxu0 0.0
        %1658 = vmatpush1.msra.mxu0 0.0
        %1659 = vmatprep.subr.mxu0 0.0
        %1660 = vmatpush1.msra.mxu0 0.0
        %1661 = vmatprep.subr.mxu0 0.0
        %1662 = vmatpush1.msra.mxu0 0.0
        %1663 = vmatprep.subr.mxu0 0.0
        %1664 = vmatpush1.msra.mxu0 0.0
        %1665 = vmatprep.subr.mxu0 0.0
        %1666 = vmatpush1.msra.mxu0 0.0
        %1667 = vmatprep.subr.mxu0 0.0
        %1668 = vmatpush1.msra.mxu0 0.0
        %1669 = vmatprep.subr.mxu0 0.0
        %1670 = vmatpush1.msra.mxu0 0.0
        %1671 = vmatprep.mubr.f32.mxu0 0.0
        %1672 = vmatmul.mubr.f32.gmra.mrb[0].mxu0 %v1253
        %v1673 = vpop.f32.mrb[0].mxu0
        %v1674 = vadd.f32 0.0, %v1673
        %v1675 = vpop.f32.mrb[0].mxu0
        %1676 = vmatprep.mubr.f32.mxu0 0.0
        %1677 = vmatmul.mubr.f32.gmra.mrb[0].mxu0 %v1256
        %v1678 = vpop.f32.mrb[0].mxu0
        %v1679 = vadd.f32 0.0, %v1678
        %v1680 = vpop.f32.mrb[0].mxu0
        %1681 = vmatprep.mubr.f32.mxu0 0.0
        %1682 = vmatmul.mubr.f32.gmra.mrb[0].mxu0 %v1261
        %v1683 = vpop.f32.mrb[0].mxu0
        %v1684 = vadd.f32 0.0, %v1683
        %v1685 = vpop.f32.mrb[0].mxu0
        %1686 = vmatprep.mubr.f32.mxu0 0.0
        %1687 = vmatmul.mubr.f32.gmra.mrb[0].mxu0 %v1264
        %v1688 = vpop.f32.mrb[0].mxu0
        %v1689 = vadd.f32 0.0, %v1688
        %v1690 = vpop.f32.mrb[0].mxu0
        %1691 = vmatprep.mubr.f32.mxu0 0.0
        %1692 = vmatmul.mubr.f32.gmra.mrb[0].mxu0 %v1269
        %v1693 = vpop.f32.mrb[0].mxu0
        %v1694 = vadd.f32 0.0, %v1693
        %v1695 = vpop.f32.mrb[0].mxu0
        %1696 = vmatprep.mubr.f32.mxu0 0.0
        %1697 = vmatmul.mubr.f32.gmra.mrb[0].mxu0 %v1272
        %v1698 = vpop.f32.mrb[0].mxu0
        %v1699 = vadd.f32 0.0, %v1698
        %v1700 = vpop.f32.mrb[0].mxu0
        %1701 = vdwg.mxu0
        %v1702 = vadd.f32 %v1584, %v1674
        %v1703 = vadd.f32 %v1585, %v1679
        %v1704 = vadd.f32 %v1586, %v1684
        %v1705 = vadd.f32 %v1587, %v1689
        %v1706 = vadd.f32 %v1588, %v1694
        %v1707 = vadd.f32 %v1589, %v1699
        %s1708 = scalar_lea.vmem [#allocation6], 256
        %v1709 = vld [vmem:[%s1708] sm:$0xff]
        %v1710 = vld [vmem:[%s1708 + $0x8] sm:$0xff]
        %v1711 = vld [vmem:[%s1708 + $0x10] sm:$0xff]
        %v1712 = vld [vmem:[%s1708 + $0x18] sm:$0xff]
        %v1713 = vld [vmem:[%s1708 + $0x20] sm:$0xff]
        %v1714 = vld [vmem:[%s1708 + $0x28] sm:$0xff]
        %v1715 = vld [vmem:[%s1708 + $0x30] sm:$0xff]
        %v1716 = vld [vmem:[%s1708 + $0x38] sm:$0xff]
        %v1717 = vld [vmem:[%s1708 + $0x40] sm:$0xff]
        %v1718 = vld [vmem:[%s1708 + $0x48] sm:$0xff]
        %v1719 = vld [vmem:[%s1708 + $0x50] sm:$0xff]
        %v1720 = vld [vmem:[%s1708 + $0x58] sm:$0xff]
        %v1721 = vld [vmem:[%s1708 + $0x60] sm:$0xff]
        %v1722 = vld [vmem:[%s1708 + $0x68] sm:$0xff]
        %v1723 = vld [vmem:[%s1708 + $0x70] sm:$0xff]
        %v1724 = vld [vmem:[%s1708 + $0x78] sm:$0xff]
        %1725 = vmatprep.subr.mxu0 0.0
        %1726 = vmatpush1.msra.mxu0 %v1709
        %1727 = vmatprep.subr.mxu0 0.0
        %1728 = vmatpush1.msra.mxu0 %v1710
        %1729 = vmatprep.subr.mxu0 0.0
        %1730 = vmatpush1.msra.mxu0 %v1711
        %1731 = vmatprep.subr.mxu0 0.0
        %1732 = vmatpush1.msra.mxu0 %v1712
        %1733 = vmatprep.subr.mxu0 0.0
        %1734 = vmatpush1.msra.mxu0 %v1713
        %1735 = vmatprep.subr.mxu0 0.0
        %1736 = vmatpush1.msra.mxu0 %v1714
        %1737 = vmatprep.subr.mxu0 0.0
        %1738 = vmatpush1.msra.mxu0 %v1715
        %1739 = vmatprep.subr.mxu0 0.0
        %1740 = vmatpush1.msra.mxu0 %v1716
        %1741 = vmatprep.subr.mxu0 0.0
        %1742 = vmatpush1.msra.mxu0 %v1717
        %1743 = vmatprep.subr.mxu0 0.0
        %1744 = vmatpush1.msra.mxu0 %v1718
        %1745 = vmatprep.subr.mxu0 0.0
        %1746 = vmatpush1.msra.mxu0 %v1719
        %1747 = vmatprep.subr.mxu0 0.0
        %1748 = vmatpush1.msra.mxu0 %v1720
        %1749 = vmatprep.subr.mxu0 0.0
        %1750 = vmatpush1.msra.mxu0 %v1721
        %1751 = vmatprep.subr.mxu0 0.0
        %1752 = vmatpush1.msra.mxu0 %v1722
        %1753 = vmatprep.subr.mxu0 0.0
        %1754 = vmatpush1.msra.mxu0 %v1723
        %1755 = vmatprep.subr.mxu0 0.0
        %1756 = vmatpush1.msra.mxu0 %v1724
        %1757 = vmatprep.subr.mxu0 0.0
        %1758 = vmatpush1.msra.mxu0 0.0
        %1759 = vmatprep.subr.mxu0 0.0
        %1760 = vmatpush1.msra.mxu0 0.0
        %1761 = vmatprep.subr.mxu0 0.0
        %1762 = vmatpush1.msra.mxu0 0.0
        %1763 = vmatprep.subr.mxu0 0.0
        %1764 = vmatpush1.msra.mxu0 0.0
        %1765 = vmatprep.subr.mxu0 0.0
        %1766 = vmatpush1.msra.mxu0 0.0
        %1767 = vmatprep.subr.mxu0 0.0
        %1768 = vmatpush1.msra.mxu0 0.0
        %1769 = vmatprep.subr.mxu0 0.0
        %1770 = vmatpush1.msra.mxu0 0.0
        %1771 = vmatprep.subr.mxu0 0.0
        %1772 = vmatpush1.msra.mxu0 0.0
        %1773 = vmatprep.subr.mxu0 0.0
        %1774 = vmatpush1.msra.mxu0 0.0
        %1775 = vmatprep.subr.mxu0 0.0
        %1776 = vmatpush1.msra.mxu0 0.0
        %1777 = vmatprep.subr.mxu0 0.0
        %1778 = vmatpush1.msra.mxu0 0.0
        %1779 = vmatprep.subr.mxu0 0.0
        %1780 = vmatpush1.msra.mxu0 0.0
        %1781 = vmatprep.subr.mxu0 0.0
        %1782 = vmatpush1.msra.mxu0 0.0
        %1783 = vmatprep.subr.mxu0 0.0
        %1784 = vmatpush1.msra.mxu0 0.0
        %1785 = vmatprep.subr.mxu0 0.0
        %1786 = vmatpush1.msra.mxu0 0.0
        %1787 = vmatprep.subr.mxu0 0.0
        %1788 = vmatpush1.msra.mxu0 0.0
        %1789 = vmatprep.mubr.f32.mxu0 0.0
        %1790 = vmatmul.mubr.f32.gmra.mrb[0].mxu0 %v1277
        %v1791 = vpop.f32.mrb[0].mxu0
        %v1792 = vadd.f32 0.0, %v1791
        %v1793 = vpop.f32.mrb[0].mxu0
        %1794 = vmatprep.mubr.f32.mxu0 0.0
        %1795 = vmatmul.mubr.f32.gmra.mrb[0].mxu0 %v1280
        %v1796 = vpop.f32.mrb[0].mxu0
        %v1797 = vadd.f32 0.0, %v1796
        %v1798 = vpop.f32.mrb[0].mxu0
        %1799 = vmatprep.mubr.f32.mxu0 0.0
        %1800 = vmatmul.mubr.f32.gmra.mrb[0].mxu0 %v1285
        %v1801 = vpop.f32.mrb[0].mxu0
        %v1802 = vadd.f32 0.0, %v1801
        %v1803 = vpop.f32.mrb[0].mxu0
        %1804 = vmatprep.mubr.f32.mxu0 0.0
        %1805 = vmatmul.mubr.f32.gmra.mrb[0].mxu0 %v1288
        %v1806 = vpop.f32.mrb[0].mxu0
        %v1807 = vadd.f32 0.0, %v1806
        %v1808 = vpop.f32.mrb[0].mxu0
        %1809 = vmatprep.mubr.f32.mxu0 0.0
        %1810 = vmatmul.mubr.f32.gmra.mrb[0].mxu0 %v1293
        %v1811 = vpop.f32.mrb[0].mxu0
        %v1812 = vadd.f32 0.0, %v1811
        %v1813 = vpop.f32.mrb[0].mxu0
        %1814 = vmatprep.mubr.f32.mxu0 0.0
        %1815 = vmatmul.mubr.f32.gmra.mrb[0].mxu0 %v1296
        %v1816 = vpop.f32.mrb[0].mxu0
        %v1817 = vadd.f32 0.0, %v1816
        %v1818 = vpop.f32.mrb[0].mxu0
        %1819 = vdwg.mxu0
        %v1820 = vadd.f32 %v1702, %v1792
        %v1821 = vadd.f32 %v1703, %v1797
        %v1822 = vadd.f32 %v1704, %v1802
        %v1823 = vadd.f32 %v1705, %v1807
        %v1824 = vadd.f32 %v1706, %v1812
        %v1825 = vadd.f32 %v1707, %v1817
        %s1826 = scalar_lea.vmem [#allocation6], 384
        %v1827 = vld [vmem:[%s1826] sm:$0xff]
        %v1828 = vld [vmem:[%s1826 + $0x8] sm:$0xff]
        %v1829 = vld [vmem:[%s1826 + $0x10] sm:$0xff]
        %v1830 = vld [vmem:[%s1826 + $0x18] sm:$0xff]
        %v1831 = vld [vmem:[%s1826 + $0x20] sm:$0xff]
        %v1832 = vld [vmem:[%s1826 + $0x28] sm:$0xff]
        %v1833 = vld [vmem:[%s1826 + $0x30] sm:$0xff]
        %v1834 = vld [vmem:[%s1826 + $0x38] sm:$0xff]
        %v1835 = vld [vmem:[%s1826 + $0x40] sm:$0xff]
        %v1836 = vld [vmem:[%s1826 + $0x48] sm:$0xff]
        %v1837 = vld [vmem:[%s1826 + $0x50] sm:$0xff]
        %v1838 = vld [vmem:[%s1826 + $0x58] sm:$0xff]
        %v1839 = vld [vmem:[%s1826 + $0x60] sm:$0xff]
        %v1840 = vld [vmem:[%s1826 + $0x68] sm:$0xff]
        %v1841 = vld [vmem:[%s1826 + $0x70] sm:$0xff]
        %v1842 = vld [vmem:[%s1826 + $0x78] sm:$0xff]
        %1843 = vmatprep.subr.mxu0 0.0
        %1844 = vmatpush1.msra.mxu0 %v1827
        %1845 = vmatprep.subr.mxu0 0.0
        %1846 = vmatpush1.msra.mxu0 %v1828
        %1847 = vmatprep.subr.mxu0 0.0
        %1848 = vmatpush1.msra.mxu0 %v1829
        %1849 = vmatprep.subr.mxu0 0.0
        %1850 = vmatpush1.msra.mxu0 %v1830
        %1851 = vmatprep.subr.mxu0 0.0
        %1852 = vmatpush1.msra.mxu0 %v1831
        %1853 = vmatprep.subr.mxu0 0.0
        %1854 = vmatpush1.msra.mxu0 %v1832
        %1855 = vmatprep.subr.mxu0 0.0
        %1856 = vmatpush1.msra.mxu0 %v1833
        %1857 = vmatprep.subr.mxu0 0.0
        %1858 = vmatpush1.msra.mxu0 %v1834
        %1859 = vmatprep.subr.mxu0 0.0
        %1860 = vmatpush1.msra.mxu0 %v1835
        %1861 = vmatprep.subr.mxu0 0.0
        %1862 = vmatpush1.msra.mxu0 %v1836
        %1863 = vmatprep.subr.mxu0 0.0
        %1864 = vmatpush1.msra.mxu0 %v1837
        %1865 = vmatprep.subr.mxu0 0.0
        %1866 = vmatpush1.msra.mxu0 %v1838
        %1867 = vmatprep.subr.mxu0 0.0
        %1868 = vmatpush1.msra.mxu0 %v1839
        %1869 = vmatprep.subr.mxu0 0.0
        %1870 = vmatpush1.msra.mxu0 %v1840
        %1871 = vmatprep.subr.mxu0 0.0
        %1872 = vmatpush1.msra.mxu0 %v1841
        %1873 = vmatprep.subr.mxu0 0.0
        %1874 = vmatpush1.msra.mxu0 %v1842
        %1875 = vmatprep.subr.mxu0 0.0
        %1876 = vmatpush1.msra.mxu0 0.0
        %1877 = vmatprep.subr.mxu0 0.0
        %1878 = vmatpush1.msra.mxu0 0.0
        %1879 = vmatprep.subr.mxu0 0.0
        %1880 = vmatpush1.msra.mxu0 0.0
        %1881 = vmatprep.subr.mxu0 0.0
        %1882 = vmatpush1.msra.mxu0 0.0
        %1883 = vmatprep.subr.mxu0 0.0
        %1884 = vmatpush1.msra.mxu0 0.0
        %1885 = vmatprep.subr.mxu0 0.0
        %1886 = vmatpush1.msra.mxu0 0.0
        %1887 = vmatprep.subr.mxu0 0.0
        %1888 = vmatpush1.msra.mxu0 0.0
        %1889 = vmatprep.subr.mxu0 0.0
        %1890 = vmatpush1.msra.mxu0 0.0
        %1891 = vmatprep.subr.mxu0 0.0
        %1892 = vmatpush1.msra.mxu0 0.0
        %1893 = vmatprep.subr.mxu0 0.0
        %1894 = vmatpush1.msra.mxu0 0.0
        %1895 = vmatprep.subr.mxu0 0.0
        %1896 = vmatpush1.msra.mxu0 0.0
        %1897 = vmatprep.subr.mxu0 0.0
        %1898 = vmatpush1.msra.mxu0 0.0
        %1899 = vmatprep.subr.mxu0 0.0
        %1900 = vmatpush1.msra.mxu0 0.0
        %1901 = vmatprep.subr.mxu0 0.0
        %1902 = vmatpush1.msra.mxu0 0.0
        %1903 = vmatprep.subr.mxu0 0.0
        %1904 = vmatpush1.msra.mxu0 0.0
        %1905 = vmatprep.subr.mxu0 0.0
        %1906 = vmatpush1.msra.mxu0 0.0
        %1907 = vmatprep.mubr.f32.mxu0 0.0
        %1908 = vmatmul.mubr.f32.gmra.mrb[0].mxu0 %v1301
        %v1909 = vpop.f32.mrb[0].mxu0
        %v1910 = vadd.f32 0.0, %v1909
        %v1911 = vpop.f32.mrb[0].mxu0
        %1912 = vmatprep.mubr.f32.mxu0 0.0
        %1913 = vmatmul.mubr.f32.gmra.mrb[0].mxu0 %v1304
        %v1914 = vpop.f32.mrb[0].mxu0
        %v1915 = vadd.f32 0.0, %v1914
        %v1916 = vpop.f32.mrb[0].mxu0
        %1917 = vmatprep.mubr.f32.mxu0 0.0
        %1918 = vmatmul.mubr.f32.gmra.mrb[0].mxu0 %v1309
        %v1919 = vpop.f32.mrb[0].mxu0
        %v1920 = vadd.f32 0.0, %v1919
        %v1921 = vpop.f32.mrb[0].mxu0
        %1922 = vmatprep.mubr.f32.mxu0 0.0
        %1923 = vmatmul.mubr.f32.gmra.mrb[0].mxu0 %v1312
        %v1924 = vpop.f32.mrb[0].mxu0
        %v1925 = vadd.f32 0.0, %v1924
        %v1926 = vpop.f32.mrb[0].mxu0
        %1927 = vmatprep.mubr.f32.mxu0 0.0
        %1928 = vmatmul.mubr.f32.gmra.mrb[0].mxu0 %v1317
        %v1929 = vpop.f32.mrb[0].mxu0
        %v1930 = vadd.f32 0.0, %v1929
        %v1931 = vpop.f32.mrb[0].mxu0
        %1932 = vmatprep.mubr.f32.mxu0 0.0
        %1933 = vmatmul.mubr.f32.gmra.mrb[0].mxu0 %v1320
        %v1934 = vpop.f32.mrb[0].mxu0
        %v1935 = vadd.f32 0.0, %v1934
        %v1936 = vpop.f32.mrb[0].mxu0
        %1937 = vdwg.mxu0
        %v1938 = vadd.f32 %v1820, %v1910
        %v1939 = vadd.f32 %v1821, %v1915
        %v1940 = vadd.f32 %v1822, %v1920
        %v1941 = vadd.f32 %v1823, %v1925
        %v1942 = vadd.f32 %v1824, %v1930
        %v1943 = vadd.f32 %v1825, %v1935
        %s1944 = scalar_lea.vmem [#allocation6], 512
        %v1945 = vld [vmem:[%s1944] sm:$0xff]
        %v1946 = vld [vmem:[%s1944 + $0x8] sm:$0xff]
        %v1947 = vld [vmem:[%s1944 + $0x10] sm:$0xff]
        %v1948 = vld [vmem:[%s1944 + $0x18] sm:$0xff]
        %v1949 = vld [vmem:[%s1944 + $0x20] sm:$0xff]
        %v1950 = vld [vmem:[%s1944 + $0x28] sm:$0xff]
        %v1951 = vld [vmem:[%s1944 + $0x30] sm:$0xff]
        %v1952 = vld [vmem:[%s1944 + $0x38] sm:$0xff]
        %v1953 = vld [vmem:[%s1944 + $0x40] sm:$0xff]
        %v1954 = vld [vmem:[%s1944 + $0x48] sm:$0xff]
        %v1955 = vld [vmem:[%s1944 + $0x50] sm:$0xff]
        %v1956 = vld [vmem:[%s1944 + $0x58] sm:$0xff]
        %v1957 = vld [vmem:[%s1944 + $0x60] sm:$0xff]
        %v1958 = vld [vmem:[%s1944 + $0x68] sm:$0xff]
        %v1959 = vld [vmem:[%s1944 + $0x70] sm:$0xff]
        %v1960 = vld [vmem:[%s1944 + $0x78] sm:$0xff]
        %1961 = vmatprep.subr.mxu0 0.0
        %1962 = vmatpush1.msra.mxu0 %v1945
        %1963 = vmatprep.subr.mxu0 0.0
        %1964 = vmatpush1.msra.mxu0 %v1946
        %1965 = vmatprep.subr.mxu0 0.0
        %1966 = vmatpush1.msra.mxu0 %v1947
        %1967 = vmatprep.subr.mxu0 0.0
        %1968 = vmatpush1.msra.mxu0 %v1948
        %1969 = vmatprep.subr.mxu0 0.0
        %1970 = vmatpush1.msra.mxu0 %v1949
        %1971 = vmatprep.subr.mxu0 0.0
        %1972 = vmatpush1.msra.mxu0 %v1950
        %1973 = vmatprep.subr.mxu0 0.0
        %1974 = vmatpush1.msra.mxu0 %v1951
        %1975 = vmatprep.subr.mxu0 0.0
        %1976 = vmatpush1.msra.mxu0 %v1952
        %1977 = vmatprep.subr.mxu0 0.0
        %1978 = vmatpush1.msra.mxu0 %v1953
        %1979 = vmatprep.subr.mxu0 0.0
        %1980 = vmatpush1.msra.mxu0 %v1954
        %1981 = vmatprep.subr.mxu0 0.0
        %1982 = vmatpush1.msra.mxu0 %v1955
        %1983 = vmatprep.subr.mxu0 0.0
        %1984 = vmatpush1.msra.mxu0 %v1956
        %1985 = vmatprep.subr.mxu0 0.0
        %1986 = vmatpush1.msra.mxu0 %v1957
        %1987 = vmatprep.subr.mxu0 0.0
        %1988 = vmatpush1.msra.mxu0 %v1958
        %1989 = vmatprep.subr.mxu0 0.0
        %1990 = vmatpush1.msra.mxu0 %v1959
        %1991 = vmatprep.subr.mxu0 0.0
        %1992 = vmatpush1.msra.mxu0 %v1960
        %1993 = vmatprep.subr.mxu0 0.0
        %1994 = vmatpush1.msra.mxu0 0.0
        %1995 = vmatprep.subr.mxu0 0.0
        %1996 = vmatpush1.msra.mxu0 0.0
        %1997 = vmatprep.subr.mxu0 0.0
        %1998 = vmatpush1.msra.mxu0 0.0
        %1999 = vmatprep.subr.mxu0 0.0
        %2000 = vmatpush1.msra.mxu0 0.0
        %2001 = vmatprep.subr.mxu0 0.0
        %2002 = vmatpush1.msra.mxu0 0.0
        %2003 = vmatprep.subr.mxu0 0.0
        %2004 = vmatpush1.msra.mxu0 0.0
        %2005 = vmatprep.subr.mxu0 0.0
        %2006 = vmatpush1.msra.mxu0 0.0
        %2007 = vmatprep.subr.mxu0 0.0
        %2008 = vmatpush1.msra.mxu0 0.0
        %2009 = vmatprep.subr.mxu0 0.0
        %2010 = vmatpush1.msra.mxu0 0.0
        %2011 = vmatprep.subr.mxu0 0.0
        %2012 = vmatpush1.msra.mxu0 0.0
        %2013 = vmatprep.subr.mxu0 0.0
        %2014 = vmatpush1.msra.mxu0 0.0
        %2015 = vmatprep.subr.mxu0 0.0
        %2016 = vmatpush1.msra.mxu0 0.0
        %2017 = vmatprep.subr.mxu0 0.0
        %2018 = vmatpush1.msra.mxu0 0.0
        %2019 = vmatprep.subr.mxu0 0.0
        %2020 = vmatpush1.msra.mxu0 0.0
        %2021 = vmatprep.subr.mxu0 0.0
        %2022 = vmatpush1.msra.mxu0 0.0
        %2023 = vmatprep.subr.mxu0 0.0
        %2024 = vmatpush1.msra.mxu0 0.0
        %2025 = vmatprep.mubr.f32.mxu0 0.0
        %2026 = vmatmul.mubr.f32.gmra.mrb[0].mxu0 %v1325
        %v2027 = vpop.f32.mrb[0].mxu0
        %v2028 = vadd.f32 0.0, %v2027
        %v2029 = vpop.f32.mrb[0].mxu0
        %2030 = vmatprep.mubr.f32.mxu0 0.0
        %2031 = vmatmul.mubr.f32.gmra.mrb[0].mxu0 %v1328
        %v2032 = vpop.f32.mrb[0].mxu0
        %v2033 = vadd.f32 0.0, %v2032
        %v2034 = vpop.f32.mrb[0].mxu0
        %2035 = vmatprep.mubr.f32.mxu0 0.0
        %2036 = vmatmul.mubr.f32.gmra.mrb[0].mxu0 %v1333
        %v2037 = vpop.f32.mrb[0].mxu0
        %v2038 = vadd.f32 0.0, %v2037
        %v2039 = vpop.f32.mrb[0].mxu0
        %2040 = vmatprep.mubr.f32.mxu0 0.0
        %2041 = vmatmul.mubr.f32.gmra.mrb[0].mxu0 %v1336
        %v2042 = vpop.f32.mrb[0].mxu0
        %v2043 = vadd.f32 0.0, %v2042
        %v2044 = vpop.f32.mrb[0].mxu0
        %2045 = vmatprep.mubr.f32.mxu0 0.0
        %2046 = vmatmul.mubr.f32.gmra.mrb[0].mxu0 %v1341
        %v2047 = vpop.f32.mrb[0].mxu0
        %v2048 = vadd.f32 0.0, %v2047
        %v2049 = vpop.f32.mrb[0].mxu0
        %2050 = vmatprep.mubr.f32.mxu0 0.0
        %2051 = vmatmul.mubr.f32.gmra.mrb[0].mxu0 %v1344
        %v2052 = vpop.f32.mrb[0].mxu0
        %v2053 = vadd.f32 0.0, %v2052
        %v2054 = vpop.f32.mrb[0].mxu0
        %2055 = vdwg.mxu0
        %v2056 = vadd.f32 %v1938, %v2028
        %v2057 = vadd.f32 %v1939, %v2033
        %v2058 = vadd.f32 %v1940, %v2038
        %v2059 = vadd.f32 %v1941, %v2043
        %v2060 = vadd.f32 %v1942, %v2048
        %v2061 = vadd.f32 %v1943, %v2053
        %s2062 = scalar_lea.vmem [#allocation6], 640
        %v2063 = vld [vmem:[%s2062] sm:$0xff]
        %v2064 = vld [vmem:[%s2062 + $0x8] sm:$0xff]
        %v2065 = vld [vmem:[%s2062 + $0x10] sm:$0xff]
        %v2066 = vld [vmem:[%s2062 + $0x18] sm:$0xff]
        %v2067 = vld [vmem:[%s2062 + $0x20] sm:$0xff]
        %v2068 = vld [vmem:[%s2062 + $0x28] sm:$0xff]
        %v2069 = vld [vmem:[%s2062 + $0x30] sm:$0xff]
        %v2070 = vld [vmem:[%s2062 + $0x38] sm:$0xff]
        %v2071 = vld [vmem:[%s2062 + $0x40] sm:$0xff]
        %v2072 = vld [vmem:[%s2062 + $0x48] sm:$0xff]
        %v2073 = vld [vmem:[%s2062 + $0x50] sm:$0xff]
        %v2074 = vld [vmem:[%s2062 + $0x58] sm:$0xff]
        %v2075 = vld [vmem:[%s2062 + $0x60] sm:$0xff]
        %v2076 = vld [vmem:[%s2062 + $0x68] sm:$0xff]
        %v2077 = vld [vmem:[%s2062 + $0x70] sm:$0xff]
        %v2078 = vld [vmem:[%s2062 + $0x78] sm:$0xff]
        %2079 = vmatprep.subr.mxu0 0.0
        %2080 = vmatpush1.msra.mxu0 %v2063
        %2081 = vmatprep.subr.mxu0 0.0
        %2082 = vmatpush1.msra.mxu0 %v2064
        %2083 = vmatprep.subr.mxu0 0.0
        %2084 = vmatpush1.msra.mxu0 %v2065
        %2085 = vmatprep.subr.mxu0 0.0
        %2086 = vmatpush1.msra.mxu0 %v2066
        %2087 = vmatprep.subr.mxu0 0.0
        %2088 = vmatpush1.msra.mxu0 %v2067
        %2089 = vmatprep.subr.mxu0 0.0
        %2090 = vmatpush1.msra.mxu0 %v2068
        %2091 = vmatprep.subr.mxu0 0.0
        %2092 = vmatpush1.msra.mxu0 %v2069
        %2093 = vmatprep.subr.mxu0 0.0
        %2094 = vmatpush1.msra.mxu0 %v2070
        %2095 = vmatprep.subr.mxu0 0.0
        %2096 = vmatpush1.msra.mxu0 %v2071
        %2097 = vmatprep.subr.mxu0 0.0
        %2098 = vmatpush1.msra.mxu0 %v2072
        %2099 = vmatprep.subr.mxu0 0.0
        %2100 = vmatpush1.msra.mxu0 %v2073
        %2101 = vmatprep.subr.mxu0 0.0
        %2102 = vmatpush1.msra.mxu0 %v2074
        %2103 = vmatprep.subr.mxu0 0.0
        %2104 = vmatpush1.msra.mxu0 %v2075
        %2105 = vmatprep.subr.mxu0 0.0
        %2106 = vmatpush1.msra.mxu0 %v2076
        %2107 = vmatprep.subr.mxu0 0.0
        %2108 = vmatpush1.msra.mxu0 %v2077
        %2109 = vmatprep.subr.mxu0 0.0
        %2110 = vmatpush1.msra.mxu0 %v2078
        %2111 = vmatprep.subr.mxu0 0.0
        %2112 = vmatpush1.msra.mxu0 0.0
        %2113 = vmatprep.subr.mxu0 0.0
        %2114 = vmatpush1.msra.mxu0 0.0
        %2115 = vmatprep.subr.mxu0 0.0
        %2116 = vmatpush1.msra.mxu0 0.0
        %2117 = vmatprep.subr.mxu0 0.0
        %2118 = vmatpush1.msra.mxu0 0.0
        %2119 = vmatprep.subr.mxu0 0.0
        %2120 = vmatpush1.msra.mxu0 0.0
        %2121 = vmatprep.subr.mxu0 0.0
        %2122 = vmatpush1.msra.mxu0 0.0
        %2123 = vmatprep.subr.mxu0 0.0
        %2124 = vmatpush1.msra.mxu0 0.0
        %2125 = vmatprep.subr.mxu0 0.0
        %2126 = vmatpush1.msra.mxu0 0.0
        %2127 = vmatprep.subr.mxu0 0.0
        %2128 = vmatpush1.msra.mxu0 0.0
        %2129 = vmatprep.subr.mxu0 0.0
        %2130 = vmatpush1.msra.mxu0 0.0
        %2131 = vmatprep.subr.mxu0 0.0
        %2132 = vmatpush1.msra.mxu0 0.0
        %2133 = vmatprep.subr.mxu0 0.0
        %2134 = vmatpush1.msra.mxu0 0.0
        %2135 = vmatprep.subr.mxu0 0.0
        %2136 = vmatpush1.msra.mxu0 0.0
        %2137 = vmatprep.subr.mxu0 0.0
        %2138 = vmatpush1.msra.mxu0 0.0
        %2139 = vmatprep.subr.mxu0 0.0
        %2140 = vmatpush1.msra.mxu0 0.0
        %2141 = vmatprep.subr.mxu0 0.0
        %2142 = vmatpush1.msra.mxu0 0.0
        %2143 = vmatprep.mubr.f32.mxu0 0.0
        %2144 = vmatmul.mubr.f32.gmra.mrb[0].mxu0 %v1349
        %v2145 = vpop.f32.mrb[0].mxu0
        %v2146 = vadd.f32 0.0, %v2145
        %v2147 = vpop.f32.mrb[0].mxu0
        %2148 = vmatprep.mubr.f32.mxu0 0.0
        %2149 = vmatmul.mubr.f32.gmra.mrb[0].mxu0 %v1352
        %v2150 = vpop.f32.mrb[0].mxu0
        %v2151 = vadd.f32 0.0, %v2150
        %v2152 = vpop.f32.mrb[0].mxu0
        %2153 = vmatprep.mubr.f32.mxu0 0.0
        %2154 = vmatmul.mubr.f32.gmra.mrb[0].mxu0 %v1357
        %v2155 = vpop.f32.mrb[0].mxu0
        %v2156 = vadd.f32 0.0, %v2155
        %v2157 = vpop.f32.mrb[0].mxu0
        %2158 = vmatprep.mubr.f32.mxu0 0.0
        %2159 = vmatmul.mubr.f32.gmra.mrb[0].mxu0 %v1360
        %v2160 = vpop.f32.mrb[0].mxu0
        %v2161 = vadd.f32 0.0, %v2160
        %v2162 = vpop.f32.mrb[0].mxu0
        %2163 = vmatprep.mubr.f32.mxu0 0.0
        %2164 = vmatmul.mubr.f32.gmra.mrb[0].mxu0 %v1365
        %v2165 = vpop.f32.mrb[0].mxu0
        %v2166 = vadd.f32 0.0, %v2165
        %v2167 = vpop.f32.mrb[0].mxu0
        %2168 = vmatprep.mubr.f32.mxu0 0.0
        %2169 = vmatmul.mubr.f32.gmra.mrb[0].mxu0 %v1368
        %v2170 = vpop.f32.mrb[0].mxu0
        %v2171 = vadd.f32 0.0, %v2170
        %v2172 = vpop.f32.mrb[0].mxu0
        %2173 = vdwg.mxu0
        %v2174 = vadd.f32 %v2056, %v2146
        %v2175 = vadd.f32 %v2057, %v2151
        %v2176 = vadd.f32 %v2058, %v2156
        %v2177 = vadd.f32 %v2059, %v2161
        %v2178 = vadd.f32 %v2060, %v2166
        %v2179 = vadd.f32 %v2061, %v2171
        %s2180 = scalar_lea.vmem [#allocation6], 768
        %v2181 = vld [vmem:[%s2180] sm:$0xff]
        %v2182 = vld [vmem:[%s2180 + $0x8] sm:$0xff]
        %v2183 = vld [vmem:[%s2180 + $0x10] sm:$0xff]
        %v2184 = vld [vmem:[%s2180 + $0x18] sm:$0xff]
        %v2185 = vld [vmem:[%s2180 + $0x20] sm:$0xff]
        %v2186 = vld [vmem:[%s2180 + $0x28] sm:$0xff]
        %v2187 = vld [vmem:[%s2180 + $0x30] sm:$0xff]
        %v2188 = vld [vmem:[%s2180 + $0x38] sm:$0xff]
        %v2189 = vld [vmem:[%s2180 + $0x40] sm:$0xff]
        %v2190 = vld [vmem:[%s2180 + $0x48] sm:$0xff]
        %v2191 = vld [vmem:[%s2180 + $0x50] sm:$0xff]
        %v2192 = vld [vmem:[%s2180 + $0x58] sm:$0xff]
        %v2193 = vld [vmem:[%s2180 + $0x60] sm:$0xff]
        %v2194 = vld [vmem:[%s2180 + $0x68] sm:$0xff]
        %v2195 = vld [vmem:[%s2180 + $0x70] sm:$0xff]
        %v2196 = vld [vmem:[%s2180 + $0x78] sm:$0xff]
        %2197 = vmatprep.subr.mxu0 0.0
        %2198 = vmatpush1.msra.mxu0 %v2181
        %2199 = vmatprep.subr.mxu0 0.0
        %2200 = vmatpush1.msra.mxu0 %v2182
        %2201 = vmatprep.subr.mxu0 0.0
        %2202 = vmatpush1.msra.mxu0 %v2183
        %2203 = vmatprep.subr.mxu0 0.0
        %2204 = vmatpush1.msra.mxu0 %v2184
        %2205 = vmatprep.subr.mxu0 0.0
        %2206 = vmatpush1.msra.mxu0 %v2185
        %2207 = vmatprep.subr.mxu0 0.0
        %2208 = vmatpush1.msra.mxu0 %v2186
        %2209 = vmatprep.subr.mxu0 0.0
        %2210 = vmatpush1.msra.mxu0 %v2187
        %2211 = vmatprep.subr.mxu0 0.0
        %2212 = vmatpush1.msra.mxu0 %v2188
        %2213 = vmatprep.subr.mxu0 0.0
        %2214 = vmatpush1.msra.mxu0 %v2189
        %2215 = vmatprep.subr.mxu0 0.0
        %2216 = vmatpush1.msra.mxu0 %v2190
        %2217 = vmatprep.subr.mxu0 0.0
        %2218 = vmatpush1.msra.mxu0 %v2191
        %2219 = vmatprep.subr.mxu0 0.0
        %2220 = vmatpush1.msra.mxu0 %v2192
        %2221 = vmatprep.subr.mxu0 0.0
        %2222 = vmatpush1.msra.mxu0 %v2193
        %2223 = vmatprep.subr.mxu0 0.0
        %2224 = vmatpush1.msra.mxu0 %v2194
        %2225 = vmatprep.subr.mxu0 0.0
        %2226 = vmatpush1.msra.mxu0 %v2195
        %2227 = vmatprep.subr.mxu0 0.0
        %2228 = vmatpush1.msra.mxu0 %v2196
        %2229 = vmatprep.subr.mxu0 0.0
        %2230 = vmatpush1.msra.mxu0 0.0
        %2231 = vmatprep.subr.mxu0 0.0
        %2232 = vmatpush1.msra.mxu0 0.0
        %2233 = vmatprep.subr.mxu0 0.0
        %2234 = vmatpush1.msra.mxu0 0.0
        %2235 = vmatprep.subr.mxu0 0.0
        %2236 = vmatpush1.msra.mxu0 0.0
        %2237 = vmatprep.subr.mxu0 0.0
        %2238 = vmatpush1.msra.mxu0 0.0
        %2239 = vmatprep.subr.mxu0 0.0
        %2240 = vmatpush1.msra.mxu0 0.0
        %2241 = vmatprep.subr.mxu0 0.0
        %2242 = vmatpush1.msra.mxu0 0.0
        %2243 = vmatprep.subr.mxu0 0.0
        %2244 = vmatpush1.msra.mxu0 0.0
        %2245 = vmatprep.subr.mxu0 0.0
        %2246 = vmatpush1.msra.mxu0 0.0
        %2247 = vmatprep.subr.mxu0 0.0
        %2248 = vmatpush1.msra.mxu0 0.0
        %2249 = vmatprep.subr.mxu0 0.0
        %2250 = vmatpush1.msra.mxu0 0.0
        %2251 = vmatprep.subr.mxu0 0.0
        %2252 = vmatpush1.msra.mxu0 0.0
        %2253 = vmatprep.subr.mxu0 0.0
        %2254 = vmatpush1.msra.mxu0 0.0
        %2255 = vmatprep.subr.mxu0 0.0
        %2256 = vmatpush1.msra.mxu0 0.0
        %2257 = vmatprep.subr.mxu0 0.0
        %2258 = vmatpush1.msra.mxu0 0.0
        %2259 = vmatprep.subr.mxu0 0.0
        %2260 = vmatpush1.msra.mxu0 0.0
        %2261 = vmatprep.mubr.f32.mxu0 0.0
        %2262 = vmatmul.mubr.f32.gmra.mrb[0].mxu0 %v1373
        %v2263 = vpop.f32.mrb[0].mxu0
        %v2264 = vadd.f32 0.0, %v2263
        %v2265 = vpop.f32.mrb[0].mxu0
        %2266 = vmatprep.mubr.f32.mxu0 0.0
        %2267 = vmatmul.mubr.f32.gmra.mrb[0].mxu0 %v1376
        %v2268 = vpop.f32.mrb[0].mxu0
        %v2269 = vadd.f32 0.0, %v2268
        %v2270 = vpop.f32.mrb[0].mxu0
        %2271 = vmatprep.mubr.f32.mxu0 0.0
        %2272 = vmatmul.mubr.f32.gmra.mrb[0].mxu0 %v1381
        %v2273 = vpop.f32.mrb[0].mxu0
        %v2274 = vadd.f32 0.0, %v2273
        %v2275 = vpop.f32.mrb[0].mxu0
        %2276 = vmatprep.mubr.f32.mxu0 0.0
        %2277 = vmatmul.mubr.f32.gmra.mrb[0].mxu0 %v1384
        %v2278 = vpop.f32.mrb[0].mxu0
        %v2279 = vadd.f32 0.0, %v2278
        %v2280 = vpop.f32.mrb[0].mxu0
        %2281 = vmatprep.mubr.f32.mxu0 0.0
        %2282 = vmatmul.mubr.f32.gmra.mrb[0].mxu0 %v1389
        %v2283 = vpop.f32.mrb[0].mxu0
        %v2284 = vadd.f32 0.0, %v2283
        %v2285 = vpop.f32.mrb[0].mxu0
        %2286 = vmatprep.mubr.f32.mxu0 0.0
        %2287 = vmatmul.mubr.f32.gmra.mrb[0].mxu0 %v1392
        %v2288 = vpop.f32.mrb[0].mxu0
        %v2289 = vadd.f32 0.0, %v2288
        %v2290 = vpop.f32.mrb[0].mxu0
        %2291 = vdwg.mxu0
        %v2292 = vadd.f32 %v2174, %v2264
        %v2293 = vadd.f32 %v2175, %v2269
        %v2294 = vadd.f32 %v2176, %v2274
        %v2295 = vadd.f32 %v2177, %v2279
        %v2296 = vadd.f32 %v2178, %v2284
        %v2297 = vadd.f32 %v2179, %v2289
        %s2298 = scalar_lea.vmem [#allocation6], 896
        %v2299 = vld [vmem:[%s2298] sm:$0xff]
        %v2300 = vld [vmem:[%s2298 + $0x8] sm:$0xff]
        %v2301 = vld [vmem:[%s2298 + $0x10] sm:$0xff]
        %v2302 = vld [vmem:[%s2298 + $0x18] sm:$0xff]
        %v2303 = vld [vmem:[%s2298 + $0x20] sm:$0xff]
        %v2304 = vld [vmem:[%s2298 + $0x28] sm:$0xff]
        %v2305 = vld [vmem:[%s2298 + $0x30] sm:$0xff]
        %v2306 = vld [vmem:[%s2298 + $0x38] sm:$0xff]
        %v2307 = vld [vmem:[%s2298 + $0x40] sm:$0xff]
        %v2308 = vld [vmem:[%s2298 + $0x48] sm:$0xff]
        %v2309 = vld [vmem:[%s2298 + $0x50] sm:$0xff]
        %v2310 = vld [vmem:[%s2298 + $0x58] sm:$0xff]
        %v2311 = vld [vmem:[%s2298 + $0x60] sm:$0xff]
        %v2312 = vld [vmem:[%s2298 + $0x68] sm:$0xff]
        %v2313 = vld [vmem:[%s2298 + $0x70] sm:$0xff]
        %v2314 = vld [vmem:[%s2298 + $0x78] sm:$0xff]
        %2315 = vmatprep.subr.mxu0 0.0
        %2316 = vmatpush1.msra.mxu0 %v2299
        %2317 = vmatprep.subr.mxu0 0.0
        %2318 = vmatpush1.msra.mxu0 %v2300
        %2319 = vmatprep.subr.mxu0 0.0
        %2320 = vmatpush1.msra.mxu0 %v2301
        %2321 = vmatprep.subr.mxu0 0.0
        %2322 = vmatpush1.msra.mxu0 %v2302
        %2323 = vmatprep.subr.mxu0 0.0
        %2324 = vmatpush1.msra.mxu0 %v2303
        %2325 = vmatprep.subr.mxu0 0.0
        %2326 = vmatpush1.msra.mxu0 %v2304
        %2327 = vmatprep.subr.mxu0 0.0
        %2328 = vmatpush1.msra.mxu0 %v2305
        %2329 = vmatprep.subr.mxu0 0.0
        %2330 = vmatpush1.msra.mxu0 %v2306
        %2331 = vmatprep.subr.mxu0 0.0
        %2332 = vmatpush1.msra.mxu0 %v2307
        %2333 = vmatprep.subr.mxu0 0.0
        %2334 = vmatpush1.msra.mxu0 %v2308
        %2335 = vmatprep.subr.mxu0 0.0
        %2336 = vmatpush1.msra.mxu0 %v2309
        %2337 = vmatprep.subr.mxu0 0.0
        %2338 = vmatpush1.msra.mxu0 %v2310
        %2339 = vmatprep.subr.mxu0 0.0
        %2340 = vmatpush1.msra.mxu0 %v2311
        %2341 = vmatprep.subr.mxu0 0.0
        %2342 = vmatpush1.msra.mxu0 %v2312
        %2343 = vmatprep.subr.mxu0 0.0
        %2344 = vmatpush1.msra.mxu0 %v2313
        %2345 = vmatprep.subr.mxu0 0.0
        %2346 = vmatpush1.msra.mxu0 %v2314
        %2347 = vmatprep.subr.mxu0 0.0
        %2348 = vmatpush1.msra.mxu0 0.0
        %2349 = vmatprep.subr.mxu0 0.0
        %2350 = vmatpush1.msra.mxu0 0.0
        %2351 = vmatprep.subr.mxu0 0.0
        %2352 = vmatpush1.msra.mxu0 0.0
        %2353 = vmatprep.subr.mxu0 0.0
        %2354 = vmatpush1.msra.mxu0 0.0
        %2355 = vmatprep.subr.mxu0 0.0
        %2356 = vmatpush1.msra.mxu0 0.0
        %2357 = vmatprep.subr.mxu0 0.0
        %2358 = vmatpush1.msra.mxu0 0.0
        %2359 = vmatprep.subr.mxu0 0.0
        %2360 = vmatpush1.msra.mxu0 0.0
        %2361 = vmatprep.subr.mxu0 0.0
        %2362 = vmatpush1.msra.mxu0 0.0
        %2363 = vmatprep.subr.mxu0 0.0
        %2364 = vmatpush1.msra.mxu0 0.0
        %2365 = vmatprep.subr.mxu0 0.0
        %2366 = vmatpush1.msra.mxu0 0.0
        %2367 = vmatprep.subr.mxu0 0.0
        %2368 = vmatpush1.msra.mxu0 0.0
        %2369 = vmatprep.subr.mxu0 0.0
        %2370 = vmatpush1.msra.mxu0 0.0
        %2371 = vmatprep.subr.mxu0 0.0
        %2372 = vmatpush1.msra.mxu0 0.0
        %2373 = vmatprep.subr.mxu0 0.0
        %2374 = vmatpush1.msra.mxu0 0.0
        %2375 = vmatprep.subr.mxu0 0.0
        %2376 = vmatpush1.msra.mxu0 0.0
        %2377 = vmatprep.subr.mxu0 0.0
        %2378 = vmatpush1.msra.mxu0 0.0
        %2379 = vmatprep.mubr.f32.mxu0 0.0
        %2380 = vmatmul.mubr.f32.gmra.mrb[0].mxu0 %v1397
        %v2381 = vpop.f32.mrb[0].mxu0
        %v2382 = vadd.f32 0.0, %v2381
        %v2383 = vpop.f32.mrb[0].mxu0
        %2384 = vmatprep.mubr.f32.mxu0 0.0
        %2385 = vmatmul.mubr.f32.gmra.mrb[0].mxu0 %v1400
        %v2386 = vpop.f32.mrb[0].mxu0
        %v2387 = vadd.f32 0.0, %v2386
        %v2388 = vpop.f32.mrb[0].mxu0
        %2389 = vmatprep.mubr.f32.mxu0 0.0
        %2390 = vmatmul.mubr.f32.gmra.mrb[0].mxu0 %v1405
        %v2391 = vpop.f32.mrb[0].mxu0
        %v2392 = vadd.f32 0.0, %v2391
        %v2393 = vpop.f32.mrb[0].mxu0
        %2394 = vmatprep.mubr.f32.mxu0 0.0
        %2395 = vmatmul.mubr.f32.gmra.mrb[0].mxu0 %v1408
        %v2396 = vpop.f32.mrb[0].mxu0
        %v2397 = vadd.f32 0.0, %v2396
        %v2398 = vpop.f32.mrb[0].mxu0
        %2399 = vmatprep.mubr.f32.mxu0 0.0
        %2400 = vmatmul.mubr.f32.gmra.mrb[0].mxu0 %v1413
        %v2401 = vpop.f32.mrb[0].mxu0
        %v2402 = vadd.f32 0.0, %v2401
        %v2403 = vpop.f32.mrb[0].mxu0
        %2404 = vmatprep.mubr.f32.mxu0 0.0
        %2405 = vmatmul.mubr.f32.gmra.mrb[0].mxu0 %v1416
        %v2406 = vpop.f32.mrb[0].mxu0
        %v2407 = vadd.f32 0.0, %v2406
        %v2408 = vpop.f32.mrb[0].mxu0
        %2409 = vdwg.mxu0
        %v2410 = vadd.f32 %v2292, %v2382
        %v2411 = vadd.f32 %v2293, %v2387
        %v2412 = vadd.f32 %v2294, %v2392
        %v2413 = vadd.f32 %v2295, %v2397
        %v2414 = vadd.f32 %v2296, %v2402
        %v2415 = vadd.f32 %v2297, %v2407
        %s2416 = scalar_lea.vmem [#allocation6], 1024
        %v2417 = vld [vmem:[%s2416] sm:$0xff]
        %v2418 = vld [vmem:[%s2416 + $0x8] sm:$0xff]
        %v2419 = vld [vmem:[%s2416 + $0x10] sm:$0xff]
        %v2420 = vld [vmem:[%s2416 + $0x18] sm:$0xff]
        %v2421 = vld [vmem:[%s2416 + $0x20] sm:$0xff]
        %v2422 = vld [vmem:[%s2416 + $0x28] sm:$0xff]
        %v2423 = vld [vmem:[%s2416 + $0x30] sm:$0xff]
        %v2424 = vld [vmem:[%s2416 + $0x38] sm:$0xff]
        %v2425 = vld [vmem:[%s2416 + $0x40] sm:$0xff]
        %v2426 = vld [vmem:[%s2416 + $0x48] sm:$0xff]
        %v2427 = vld [vmem:[%s2416 + $0x50] sm:$0xff]
        %v2428 = vld [vmem:[%s2416 + $0x58] sm:$0xff]
        %v2429 = vld [vmem:[%s2416 + $0x60] sm:$0xff]
        %v2430 = vld [vmem:[%s2416 + $0x68] sm:$0xff]
        %v2431 = vld [vmem:[%s2416 + $0x70] sm:$0xff]
        %v2432 = vld [vmem:[%s2416 + $0x78] sm:$0xff]
        %2433 = vmatprep.subr.mxu0 0.0
        %2434 = vmatpush1.msra.mxu0 %v2417
        %2435 = vmatprep.subr.mxu0 0.0
        %2436 = vmatpush1.msra.mxu0 %v2418
        %2437 = vmatprep.subr.mxu0 0.0
        %2438 = vmatpush1.msra.mxu0 %v2419
        %2439 = vmatprep.subr.mxu0 0.0
        %2440 = vmatpush1.msra.mxu0 %v2420
        %2441 = vmatprep.subr.mxu0 0.0
        %2442 = vmatpush1.msra.mxu0 %v2421
        %2443 = vmatprep.subr.mxu0 0.0
        %2444 = vmatpush1.msra.mxu0 %v2422
        %2445 = vmatprep.subr.mxu0 0.0
        %2446 = vmatpush1.msra.mxu0 %v2423
        %2447 = vmatprep.subr.mxu0 0.0
        %2448 = vmatpush1.msra.mxu0 %v2424
        %2449 = vmatprep.subr.mxu0 0.0
        %2450 = vmatpush1.msra.mxu0 %v2425
        %2451 = vmatprep.subr.mxu0 0.0
        %2452 = vmatpush1.msra.mxu0 %v2426
        %2453 = vmatprep.subr.mxu0 0.0
        %2454 = vmatpush1.msra.mxu0 %v2427
        %2455 = vmatprep.subr.mxu0 0.0
        %2456 = vmatpush1.msra.mxu0 %v2428
        %2457 = vmatprep.subr.mxu0 0.0
        %2458 = vmatpush1.msra.mxu0 %v2429
        %2459 = vmatprep.subr.mxu0 0.0
        %2460 = vmatpush1.msra.mxu0 %v2430
        %2461 = vmatprep.subr.mxu0 0.0
        %2462 = vmatpush1.msra.mxu0 %v2431
        %2463 = vmatprep.subr.mxu0 0.0
        %2464 = vmatpush1.msra.mxu0 %v2432
        %2465 = vmatprep.subr.mxu0 0.0
        %2466 = vmatpush1.msra.mxu0 0.0
        %2467 = vmatprep.subr.mxu0 0.0
        %2468 = vmatpush1.msra.mxu0 0.0
        %2469 = vmatprep.subr.mxu0 0.0
        %2470 = vmatpush1.msra.mxu0 0.0
        %2471 = vmatprep.subr.mxu0 0.0
        %2472 = vmatpush1.msra.mxu0 0.0
        %2473 = vmatprep.subr.mxu0 0.0
        %2474 = vmatpush1.msra.mxu0 0.0
        %2475 = vmatprep.subr.mxu0 0.0
        %2476 = vmatpush1.msra.mxu0 0.0
        %2477 = vmatprep.subr.mxu0 0.0
        %2478 = vmatpush1.msra.mxu0 0.0
        %2479 = vmatprep.subr.mxu0 0.0
        %2480 = vmatpush1.msra.mxu0 0.0
        %2481 = vmatprep.subr.mxu0 0.0
        %2482 = vmatpush1.msra.mxu0 0.0
        %2483 = vmatprep.subr.mxu0 0.0
        %2484 = vmatpush1.msra.mxu0 0.0
        %2485 = vmatprep.subr.mxu0 0.0
        %2486 = vmatpush1.msra.mxu0 0.0
        %2487 = vmatprep.subr.mxu0 0.0
        %2488 = vmatpush1.msra.mxu0 0.0
        %2489 = vmatprep.subr.mxu0 0.0
        %2490 = vmatpush1.msra.mxu0 0.0
        %2491 = vmatprep.subr.mxu0 0.0
        %2492 = vmatpush1.msra.mxu0 0.0
        %2493 = vmatprep.subr.mxu0 0.0
        %2494 = vmatpush1.msra.mxu0 0.0
        %2495 = vmatprep.subr.mxu0 0.0
        %2496 = vmatpush1.msra.mxu0 0.0
        %2497 = vmatprep.mubr.f32.mxu0 0.0
        %2498 = vmatmul.mubr.f32.gmra.mrb[0].mxu0 %v1421
        %v2499 = vpop.f32.mrb[0].mxu0
        %v2500 = vadd.f32 0.0, %v2499
        %v2501 = vpop.f32.mrb[0].mxu0
        %2502 = vmatprep.mubr.f32.mxu0 0.0
        %2503 = vmatmul.mubr.f32.gmra.mrb[0].mxu0 %v1424
        %v2504 = vpop.f32.mrb[0].mxu0
        %v2505 = vadd.f32 0.0, %v2504
        %v2506 = vpop.f32.mrb[0].mxu0
        %2507 = vmatprep.mubr.f32.mxu0 0.0
        %2508 = vmatmul.mubr.f32.gmra.mrb[0].mxu0 %v1429
        %v2509 = vpop.f32.mrb[0].mxu0
        %v2510 = vadd.f32 0.0, %v2509
        %v2511 = vpop.f32.mrb[0].mxu0
        %2512 = vmatprep.mubr.f32.mxu0 0.0
        %2513 = vmatmul.mubr.f32.gmra.mrb[0].mxu0 %v1432
        %v2514 = vpop.f32.mrb[0].mxu0
        %v2515 = vadd.f32 0.0, %v2514
        %v2516 = vpop.f32.mrb[0].mxu0
        %2517 = vmatprep.mubr.f32.mxu0 0.0
        %2518 = vmatmul.mubr.f32.gmra.mrb[0].mxu0 %v1437
        %v2519 = vpop.f32.mrb[0].mxu0
        %v2520 = vadd.f32 0.0, %v2519
        %v2521 = vpop.f32.mrb[0].mxu0
        %2522 = vmatprep.mubr.f32.mxu0 0.0
        %2523 = vmatmul.mubr.f32.gmra.mrb[0].mxu0 %v1440
        %v2524 = vpop.f32.mrb[0].mxu0
        %v2525 = vadd.f32 0.0, %v2524
        %v2526 = vpop.f32.mrb[0].mxu0
        %2527 = vdwg.mxu0
        %v2528 = vadd.f32 %v2410, %v2500
        %v2529 = vadd.f32 %v2411, %v2505
        %v2530 = vadd.f32 %v2412, %v2510
        %v2531 = vadd.f32 %v2413, %v2515
        %v2532 = vadd.f32 %v2414, %v2520
        %v2533 = vadd.f32 %v2415, %v2525
        %s2534 = scalar_lea.vmem [#allocation6], 1152
        %v2535 = vld [vmem:[%s2534] sm:$0xff]
        %v2536 = vld [vmem:[%s2534 + $0x8] sm:$0xff]
        %v2537 = vld [vmem:[%s2534 + $0x10] sm:$0xff]
        %v2538 = vld [vmem:[%s2534 + $0x18] sm:$0xff]
        %v2539 = vld [vmem:[%s2534 + $0x20] sm:$0xff]
        %v2540 = vld [vmem:[%s2534 + $0x28] sm:$0xff]
        %v2541 = vld [vmem:[%s2534 + $0x30] sm:$0xff]
        %v2542 = vld [vmem:[%s2534 + $0x38] sm:$0xff]
        %v2543 = vld [vmem:[%s2534 + $0x40] sm:$0xff]
        %v2544 = vld [vmem:[%s2534 + $0x48] sm:$0xff]
        %v2545 = vld [vmem:[%s2534 + $0x50] sm:$0xff]
        %v2546 = vld [vmem:[%s2534 + $0x58] sm:$0xff]
        %v2547 = vld [vmem:[%s2534 + $0x60] sm:$0xff]
        %v2548 = vld [vmem:[%s2534 + $0x68] sm:$0xff]
        %v2549 = vld [vmem:[%s2534 + $0x70] sm:$0xff]
        %v2550 = vld [vmem:[%s2534 + $0x78] sm:$0xff]
        %2551 = vmatprep.subr.mxu0 0.0
        %2552 = vmatpush1.msra.mxu0 %v2535
        %2553 = vmatprep.subr.mxu0 0.0
        %2554 = vmatpush1.msra.mxu0 %v2536
        %2555 = vmatprep.subr.mxu0 0.0
        %2556 = vmatpush1.msra.mxu0 %v2537
        %2557 = vmatprep.subr.mxu0 0.0
        %2558 = vmatpush1.msra.mxu0 %v2538
        %2559 = vmatprep.subr.mxu0 0.0
        %2560 = vmatpush1.msra.mxu0 %v2539
        %2561 = vmatprep.subr.mxu0 0.0
        %2562 = vmatpush1.msra.mxu0 %v2540
        %2563 = vmatprep.subr.mxu0 0.0
        %2564 = vmatpush1.msra.mxu0 %v2541
        %2565 = vmatprep.subr.mxu0 0.0
        %2566 = vmatpush1.msra.mxu0 %v2542
        %2567 = vmatprep.subr.mxu0 0.0
        %2568 = vmatpush1.msra.mxu0 %v2543
        %2569 = vmatprep.subr.mxu0 0.0
        %2570 = vmatpush1.msra.mxu0 %v2544
        %2571 = vmatprep.subr.mxu0 0.0
        %2572 = vmatpush1.msra.mxu0 %v2545
        %2573 = vmatprep.subr.mxu0 0.0
        %2574 = vmatpush1.msra.mxu0 %v2546
        %2575 = vmatprep.subr.mxu0 0.0
        %2576 = vmatpush1.msra.mxu0 %v2547
        %2577 = vmatprep.subr.mxu0 0.0
        %2578 = vmatpush1.msra.mxu0 %v2548
        %2579 = vmatprep.subr.mxu0 0.0
        %2580 = vmatpush1.msra.mxu0 %v2549
        %2581 = vmatprep.subr.mxu0 0.0
        %2582 = vmatpush1.msra.mxu0 %v2550
        %2583 = vmatprep.subr.mxu0 0.0
        %2584 = vmatpush1.msra.mxu0 0.0
        %2585 = vmatprep.subr.mxu0 0.0
        %2586 = vmatpush1.msra.mxu0 0.0
        %2587 = vmatprep.subr.mxu0 0.0
        %2588 = vmatpush1.msra.mxu0 0.0
        %2589 = vmatprep.subr.mxu0 0.0
        %2590 = vmatpush1.msra.mxu0 0.0
        %2591 = vmatprep.subr.mxu0 0.0
        %2592 = vmatpush1.msra.mxu0 0.0
        %2593 = vmatprep.subr.mxu0 0.0
        %2594 = vmatpush1.msra.mxu0 0.0
        %2595 = vmatprep.subr.mxu0 0.0
        %2596 = vmatpush1.msra.mxu0 0.0
        %2597 = vmatprep.subr.mxu0 0.0
        %2598 = vmatpush1.msra.mxu0 0.0
        %2599 = vmatprep.subr.mxu0 0.0
        %2600 = vmatpush1.msra.mxu0 0.0
        %2601 = vmatprep.subr.mxu0 0.0
        %2602 = vmatpush1.msra.mxu0 0.0
        %2603 = vmatprep.subr.mxu0 0.0
        %2604 = vmatpush1.msra.mxu0 0.0
        %2605 = vmatprep.subr.mxu0 0.0
        %2606 = vmatpush1.msra.mxu0 0.0
        %2607 = vmatprep.subr.mxu0 0.0
        %2608 = vmatpush1.msra.mxu0 0.0
        %2609 = vmatprep.subr.mxu0 0.0
        %2610 = vmatpush1.msra.mxu0 0.0
        %2611 = vmatprep.subr.mxu0 0.0
        %2612 = vmatpush1.msra.mxu0 0.0
        %2613 = vmatprep.subr.mxu0 0.0
        %2614 = vmatpush1.msra.mxu0 0.0
        %2615 = vmatprep.mubr.f32.mxu0 0.0
        %2616 = vmatmul.mubr.f32.gmra.mrb[0].mxu0 %v1445
        %v2617 = vpop.f32.mrb[0].mxu0
        %v2618 = vadd.f32 0.0, %v2617
        %v2619 = vpop.f32.mrb[0].mxu0
        %2620 = vmatprep.mubr.f32.mxu0 0.0
        %2621 = vmatmul.mubr.f32.gmra.mrb[0].mxu0 %v1448
        %v2622 = vpop.f32.mrb[0].mxu0
        %v2623 = vadd.f32 0.0, %v2622
        %v2624 = vpop.f32.mrb[0].mxu0
        %2625 = vmatprep.mubr.f32.mxu0 0.0
        %2626 = vmatmul.mubr.f32.gmra.mrb[0].mxu0 %v1453
        %v2627 = vpop.f32.mrb[0].mxu0
        %v2628 = vadd.f32 0.0, %v2627
        %v2629 = vpop.f32.mrb[0].mxu0
        %2630 = vmatprep.mubr.f32.mxu0 0.0
        %2631 = vmatmul.mubr.f32.gmra.mrb[0].mxu0 %v1456
        %v2632 = vpop.f32.mrb[0].mxu0
        %v2633 = vadd.f32 0.0, %v2632
        %v2634 = vpop.f32.mrb[0].mxu0
        %2635 = vmatprep.mubr.f32.mxu0 0.0
        %2636 = vmatmul.mubr.f32.gmra.mrb[0].mxu0 %v1461
        %v2637 = vpop.f32.mrb[0].mxu0
        %v2638 = vadd.f32 0.0, %v2637
        %v2639 = vpop.f32.mrb[0].mxu0
        %2640 = vmatprep.mubr.f32.mxu0 0.0
        %2641 = vmatmul.mubr.f32.gmra.mrb[0].mxu0 %v1464
        %v2642 = vpop.f32.mrb[0].mxu0
        %v2643 = vadd.f32 0.0, %v2642
        %v2644 = vpop.f32.mrb[0].mxu0
        %2645 = vdwg.mxu0
        %v2646 = vadd.f32 %v2528, %v2618
        %v2647 = vadd.f32 %v2529, %v2623
        %v2648 = vadd.f32 %v2530, %v2628
        %v2649 = vadd.f32 %v2531, %v2633
        %v2650 = vadd.f32 %v2532, %v2638
        %v2651 = vadd.f32 %v2533, %v2643
        %v2652 = vlaneseq
        %v2653 = vshrl.u32 %v2652, 7
        %v2654 = vadd.s32 %v2653, 8
        %v2655 = vadd.s32 %v2653, 16
        %v2656 = vadd.s32 %v2653, 24
        %v2657 = vadd.s32 %v2653, 32
        %v2658 = vadd.s32 %v2653, 40
        %vm2659 = vcmp.ge.s32.totalorder %v2653, 0
        %vm2660 = vcmp.ge.s32.totalorder %v2654, 0
        %vm2661 = vcmp.ge.s32.totalorder %v2655, 0
        %vm2662 = vcmp.ge.s32.totalorder %v2656, 0
        %vm2663 = vcmp.ge.s32.totalorder %v2657, 0
        %vm2664 = vcmp.ge.s32.totalorder %v2658, 0
        %vm2665 = vcmp.lt.s32.totalorder %v2653, 16
        %vm2666 = vcmp.lt.s32.totalorder %v2654, 16
        %vm2667 = vcmp.lt.s32.totalorder %v2655, 16
        %vm2668 = vcmp.lt.s32.totalorder %v2656, 16
        %vm2669 = vcmp.lt.s32.totalorder %v2657, 16
        %vm2670 = vcmp.lt.s32.totalorder %v2658, 16
        %vm2671 = vmand %vm2659, %vm2665
        %vm2672 = vmand %vm2660, %vm2666
        %vm2673 = vmand %vm2661, %vm2667
        %vm2674 = vmand %vm2662, %vm2668
        %vm2675 = vmand %vm2663, %vm2669
        %vm2676 = vmand %vm2664, %vm2670
        %v2677 = vsel %vm2671, 1, 0
        %v2678 = vsel %vm2672, 1, 0
        %v2679 = vsel %vm2673, 1, 0
        %v2680 = vsel %vm2674, 1, 0
        %v2681 = vsel %vm2675, 1, 0
        %v2682 = vsel %vm2676, 1, 0
        %v2683 = vcvt.s32.f32 %v2677
        %v2684 = vcvt.s32.f32 %v2678
        %v2685 = vcvt.s32.f32 %v2679
        %v2686 = vcvt.s32.f32 %v2680
        %v2687 = vcvt.s32.f32 %v2681
        %v2688 = vcvt.s32.f32 %v2682
        %v2689 = vmul.f32 %v2646, %v2683
        %v2690 = vmul.f32 %v2647, %v2684
        %v2691 = vmul.f32 %v2648, %v2685
        %v2692 = vmul.f32 %v2649, %v2686
        %v2693 = vmul.f32 %v2650, %v2687
        %v2694 = vmul.f32 %v2651, %v2688
        %vm2695 = vcmp.ge.s32.totalorder %v2653, 16
        %vm2696 = vcmp.ge.s32.totalorder %v2654, 16
        %vm2697 = vcmp.ge.s32.totalorder %v2655, 16
        %vm2698 = vcmp.ge.s32.totalorder %v2656, 16
        %vm2699 = vcmp.ge.s32.totalorder %v2657, 16
        %vm2700 = vcmp.ge.s32.totalorder %v2658, 16
        %vm2701 = vcmp.lt.s32.totalorder %v2653, 40
        %vm2702 = vcmp.lt.s32.totalorder %v2654, 40
        %vm2703 = vcmp.lt.s32.totalorder %v2655, 40
        %vm2704 = vcmp.lt.s32.totalorder %v2656, 40
        %vm2705 = vcmp.lt.s32.totalorder %v2657, 40
        %vm2706 = vcmp.lt.s32.totalorder %v2658, 40
        %vm2707 = vmand %vm2695, %vm2701
        %vm2708 = vmand %vm2696, %vm2702
        %vm2709 = vmand %vm2697, %vm2703
        %vm2710 = vmand %vm2698, %vm2704
        %vm2711 = vmand %vm2699, %vm2705
        %vm2712 = vmand %vm2700, %vm2706
        %v2713 = vsel %vm2707, 1, 0
        %v2714 = vsel %vm2708, 1, 0
        %v2715 = vsel %vm2709, 1, 0
        %v2716 = vsel %vm2710, 1, 0
        %v2717 = vsel %vm2711, 1, 0
        %v2718 = vsel %vm2712, 1, 0
        %v2719 = vcvt.s32.f32 %v2713
        %v2720 = vcvt.s32.f32 %v2714
        %v2721 = vcvt.s32.f32 %v2715
        %v2722 = vcvt.s32.f32 %v2716
        %v2723 = vcvt.s32.f32 %v2717
        %v2724 = vcvt.s32.f32 %v2718
        %v2725 = vmul.f32 %v2646, %v2719
        %v2726 = vmul.f32 %v2647, %v2720
        %v2727 = vmul.f32 %v2648, %v2721
        %v2728 = vmul.f32 %v2649, %v2722
        %v2729 = vmul.f32 %v2650, %v2723
        %v2730 = vmul.f32 %v2651, %v2724
        %vm2731 = vcmp.ge.s32.totalorder %v2653, 40
        %vm2732 = vcmp.ge.s32.totalorder %v2654, 40
        %vm2733 = vcmp.ge.s32.totalorder %v2655, 40
        %vm2734 = vcmp.ge.s32.totalorder %v2656, 40
        %vm2735 = vcmp.ge.s32.totalorder %v2657, 40
        %vm2736 = vcmp.ge.s32.totalorder %v2658, 40
        %vm2737 = vcmp.lt.s32.totalorder %v2653, 48
        %vm2738 = vcmp.lt.s32.totalorder %v2654, 48
        %vm2739 = vcmp.lt.s32.totalorder %v2655, 48
        %vm2740 = vcmp.lt.s32.totalorder %v2656, 48
        %vm2741 = vcmp.lt.s32.totalorder %v2657, 48
        %vm2742 = vcmp.lt.s32.totalorder %v2658, 48
        %vm2743 = vmand %vm2731, %vm2737
        %vm2744 = vmand %vm2732, %vm2738
        %vm2745 = vmand %vm2733, %vm2739
        %vm2746 = vmand %vm2734, %vm2740
        %vm2747 = vmand %vm2735, %vm2741
        %vm2748 = vmand %vm2736, %vm2742
        %v2749 = vsel %vm2743, 1, 0
        %v2750 = vsel %vm2744, 1, 0
        %v2751 = vsel %vm2745, 1, 0
        %v2752 = vsel %vm2746, 1, 0
        %v2753 = vsel %vm2747, 1, 0
        %v2754 = vsel %vm2748, 1, 0
        %v2755 = vcvt.s32.f32 %v2749
        %v2756 = vcvt.s32.f32 %v2750
        %v2757 = vcvt.s32.f32 %v2751
        %v2758 = vcvt.s32.f32 %v2752
        %v2759 = vcvt.s32.f32 %v2753
        %v2760 = vcvt.s32.f32 %v2754
        %v2761 = vmul.f32 %v2646, %v2755
        %v2762 = vmul.f32 %v2647, %v2756
        %v2763 = vmul.f32 %v2648, %v2757
        %v2764 = vmul.f32 %v2649, %v2758
        %v2765 = vmul.f32 %v2650, %v2759
        %v2766 = vmul.f32 %v2651, %v2760
        %v2767 = vpack.c.bf16 %v2690, %v2689
        %v2768 = vpack.c.bf16 %v2726, %v2725
        %v2769 = vpack.c.bf16 %v2762, %v2761
        %v2770 = vpack.c.bf16 %v2692, %v2691
        %v2771 = vpack.c.bf16 %v2728, %v2727
        %v2772 = vpack.c.bf16 %v2764, %v2763
        %v2773 = vpack.c.bf16 %v2694, %v2693
        %v2774 = vpack.c.bf16 %v2730, %v2729
        %v2775 = vpack.c.bf16 %v2766, %v2765
        %v2776 = vld [vmem:[%s592] sm:$0xf]
        %v2777 = vld [vmem:[%s592 + $0x4] sm:$0xf]
        %v2778 = vld [vmem:[%s592 + $0x8] sm:$0xf]
        %v2779 = vld [vmem:[%s592 + $0xc] sm:$0xf]
        %v2780 = vld [vmem:[%s592 + $0x10] sm:$0xf]
        %v2781 = vld [vmem:[%s592 + $0x14] sm:$0xf]
        %v2782 = vld [vmem:[%s592 + $0x18] sm:$0xf]
        %v2783 = vld [vmem:[%s592 + $0x1c] sm:$0xf]
        %v2784 = vld [vmem:[%s592 + $0x20] sm:$0xf]
        %v2785 = vld [vmem:[%s592 + $0x24] sm:$0xf]
        %v2786 = vld [vmem:[%s592 + $0x28] sm:$0xf]
        %v2787 = vld [vmem:[%s592 + $0x2c] sm:$0xf]
        %v2788 = vld [vmem:[%s592 + $0x30] sm:$0xf]
        %v2789 = vld [vmem:[%s592 + $0x34] sm:$0xf]
        %v2790 = vld [vmem:[%s592 + $0x38] sm:$0xf]
        %v2791 = vld [vmem:[%s592 + $0x3c] sm:$0xf]
        %v2792 = vld [vmem:[%s592 + $0x40] sm:$0xf]
        %v2793 = vld [vmem:[%s592 + $0x44] sm:$0xf]
        %v2794 = vld [vmem:[%s592 + $0x48] sm:$0xf]
        %v2795 = vld [vmem:[%s592 + $0x4c] sm:$0xf]
        %v2796 = vld [vmem:[%s592 + $0x50] sm:$0xf]
        %v2797 = vld [vmem:[%s592 + $0x54] sm:$0xf]
        %v2798 = vld [vmem:[%s592 + $0x58] sm:$0xf]
        %v2799 = vld [vmem:[%s592 + $0x5c] sm:$0xf]
        %v2800 = vld [vmem:[%s592 + $0x60] sm:$0xf]
        %v2801 = vld [vmem:[%s592 + $0x64] sm:$0xf]
        %v2802 = vld [vmem:[%s592 + $0x68] sm:$0xf]
        %v2803 = vld [vmem:[%s592 + $0x6c] sm:$0xf]
        %v2804 = vld [vmem:[%s592 + $0x70] sm:$0xf]
        %v2805 = vld [vmem:[%s592 + $0x74] sm:$0xf]
        %v2806 = vld [vmem:[%s592 + $0x78] sm:$0xf]
        %v2807 = vld [vmem:[%s592 + $0x7c] sm:$0xf]
        %v2808 = vld [vmem:[%s592 + $0x80] sm:$0xf]
        %v2809 = vld [vmem:[%s592 + $0x84] sm:$0xf]
        %v2810 = vld [vmem:[%s592 + $0x88] sm:$0xf]
        %v2811 = vld [vmem:[%s592 + $0x8c] sm:$0xf]
        %v2812 = vld [vmem:[%s592 + $0x90] sm:$0xf]
        %v2813 = vld [vmem:[%s592 + $0x94] sm:$0xf]
        %v2814 = vld [vmem:[%s592 + $0x98] sm:$0xf]
        %v2815 = vld [vmem:[%s592 + $0x9c] sm:$0xf]
        %v2816 = vld [vmem:[%s592 + $0xa0] sm:$0xf]
        %v2817 = vld [vmem:[%s592 + $0xa4] sm:$0xf]
        %v2818 = vld [vmem:[%s592 + $0xa8] sm:$0xf]
        %v2819 = vld [vmem:[%s592 + $0xac] sm:$0xf]
        %v2820 = vld [vmem:[%s592 + $0xb0] sm:$0xf]
        %v2821 = vld [vmem:[%s592 + $0xb4] sm:$0xf]
        %v2822 = vld [vmem:[%s592 + $0xb8] sm:$0xf]
        %v2823 = vld [vmem:[%s592 + $0xbc] sm:$0xf]
        %v2824 = vld [vmem:[%s597] sm:$0xff]
        %v2825 = vld [vmem:[%s597 + $0x8] sm:$0xff]
        %v2826 = vld [vmem:[%s597 + $0x10] sm:$0xff]
        %v2827 = vld [vmem:[%s597 + $0x18] sm:$0xff]
        %v2828 = vld [vmem:[%s597 + $0x20] sm:$0xff]
        %v2829 = vld [vmem:[%s597 + $0x28] sm:$0xff]
        %v2878 = vunpack.c.l.b16 %v2776
        %v2879 = vunpack.c.l.b16 %v2777
        %v2880 = vunpack.c.l.b16 %v2778
        %v2881 = vunpack.c.l.b16 %v2779
        %v2882 = vunpack.c.l.b16 %v2780
        %v2883 = vunpack.c.l.b16 %v2781
        %v2884 = vunpack.c.l.b16 %v2782
        %v2885 = vunpack.c.l.b16 %v2783
        %v2886 = vunpack.c.l.b16 %v2784
        %v2887 = vunpack.c.l.b16 %v2785
        %v2888 = vunpack.c.l.b16 %v2786
        %v2889 = vunpack.c.l.b16 %v2787
        %v2890 = vunpack.c.l.b16 %v2788
        %v2891 = vunpack.c.l.b16 %v2789
        %v2892 = vunpack.c.l.b16 %v2790
        %v2893 = vunpack.c.l.b16 %v2791
        %v2894 = vunpack.c.l.b16 %v2792
        %v2895 = vunpack.c.l.b16 %v2793
        %v2896 = vunpack.c.l.b16 %v2794
        %v2897 = vunpack.c.l.b16 %v2795
        %v2898 = vunpack.c.l.b16 %v2796
        %v2899 = vunpack.c.l.b16 %v2797
        %v2900 = vunpack.c.l.b16 %v2798
        %v2901 = vunpack.c.l.b16 %v2799
        %v2902 = vunpack.c.l.b16 %v2800
        %v2903 = vunpack.c.l.b16 %v2801
        %v2904 = vunpack.c.l.b16 %v2802
        %v2905 = vunpack.c.l.b16 %v2803
        %v2906 = vunpack.c.l.b16 %v2804
        %v2907 = vunpack.c.l.b16 %v2805
        %v2908 = vunpack.c.l.b16 %v2806
        %v2909 = vunpack.c.l.b16 %v2807
        %v2910 = vunpack.c.l.b16 %v2808
        %v2911 = vunpack.c.l.b16 %v2809
        %v2912 = vunpack.c.l.b16 %v2810
        %v2913 = vunpack.c.l.b16 %v2811
        %v2914 = vunpack.c.l.b16 %v2812
        %v2915 = vunpack.c.l.b16 %v2813
        %v2916 = vunpack.c.l.b16 %v2814
        %v2917 = vunpack.c.l.b16 %v2815
        %v2918 = vunpack.c.l.b16 %v2816
        %v2919 = vunpack.c.l.b16 %v2817
        %v2920 = vunpack.c.l.b16 %v2818
        %v2921 = vunpack.c.l.b16 %v2819
        %v2922 = vunpack.c.l.b16 %v2820
        %v2923 = vunpack.c.l.b16 %v2821
        %v2924 = vunpack.c.l.b16 %v2822
        %v2925 = vunpack.c.l.b16 %v2823
        %v2926 = vpack.c.b16 %v2879, %v2878
        %v2927 = vpack.c.b16 %v2881, %v2880
        %v2928 = vpack.c.b16 %v2883, %v2882
        %v2929 = vpack.c.b16 %v2885, %v2884
        %v2930 = vpack.c.b16 %v2887, %v2886
        %v2931 = vpack.c.b16 %v2889, %v2888
        %v2932 = vpack.c.b16 %v2891, %v2890
        %v2933 = vpack.c.b16 %v2893, %v2892
        %v2934 = vpack.c.b16 %v2895, %v2894
        %v2935 = vpack.c.b16 %v2897, %v2896
        %v2936 = vpack.c.b16 %v2899, %v2898
        %v2937 = vpack.c.b16 %v2901, %v2900
        %v2938 = vpack.c.b16 %v2903, %v2902
        %v2939 = vpack.c.b16 %v2905, %v2904
        %v2940 = vpack.c.b16 %v2907, %v2906
        %v2941 = vpack.c.b16 %v2909, %v2908
        %v2942 = vpack.c.b16 %v2911, %v2910
        %v2943 = vpack.c.b16 %v2913, %v2912
        %v2944 = vpack.c.b16 %v2915, %v2914
        %v2945 = vpack.c.b16 %v2917, %v2916
        %v2946 = vpack.c.b16 %v2919, %v2918
        %v2947 = vpack.c.b16 %v2921, %v2920
        %v2948 = vpack.c.b16 %v2923, %v2922
        %v2949 = vpack.c.b16 %v2925, %v2924
        %2974 = vmatprep.subr.bf16.mxu0 0
        %2975 = vmatpush1.bf16.msra.mxu0 %v2926
        %2976 = vmatprep.subr.bf16.mxu0 0
        %2977 = vmatpush1.bf16.msra.mxu0 %v2927
        %2978 = vmatprep.subr.bf16.mxu0 0
        %2979 = vmatpush1.bf16.msra.mxu0 %v2928
        %2980 = vmatprep.subr.bf16.mxu0 0
        %2981 = vmatpush1.bf16.msra.mxu0 %v2929
        %2982 = vmatprep.subr.bf16.mxu0 0
        %2983 = vmatpush1.bf16.msra.mxu0 %v2930
        %2984 = vmatprep.subr.bf16.mxu0 0
        %2985 = vmatpush1.bf16.msra.mxu0 %v2931
        %2986 = vmatprep.subr.bf16.mxu0 0
        %2987 = vmatpush1.bf16.msra.mxu0 %v2932
        %2988 = vmatprep.subr.bf16.mxu0 0
        %2989 = vmatpush1.bf16.msra.mxu0 %v2933
        %2990 = vmatprep.subr.bf16.mxu0 0
        %2991 = vmatpush1.bf16.msra.mxu0 %v2934
        %2992 = vmatprep.subr.bf16.mxu0 0
        %2993 = vmatpush1.bf16.msra.mxu0 %v2935
        %2994 = vmatprep.subr.bf16.mxu0 0
        %2995 = vmatpush1.bf16.msra.mxu0 %v2936
        %2996 = vmatprep.subr.bf16.mxu0 0
        %2997 = vmatpush1.bf16.msra.mxu0 %v2937
        %2998 = vmatprep.subr.bf16.mxu0 0
        %2999 = vmatpush1.bf16.msra.mxu0 %v2938
        %3000 = vmatprep.subr.bf16.mxu0 0
        %3001 = vmatpush1.bf16.msra.mxu0 %v2939
        %3002 = vmatprep.subr.bf16.mxu0 0
        %3003 = vmatpush1.bf16.msra.mxu0 %v2940
        %3004 = vmatprep.subr.bf16.mxu0 0
        %3005 = vmatpush1.bf16.msra.mxu0 %v2941
        %3006 = vmatprep.mubr.bf16.mxu0 %v2768
        %3007 = vmatmul.mubr.bf16.gmra.mrb[0].mxu0 %v2767
        %v3008 = vpop.f32.mrb[0].mxu0
        %v3009 = vadd.f32 %v2824, %v3008
        %v3010 = vpop.f32.mrb[0].mxu0
        %v3011 = vpop.f32.mrb[0].mxu0
        %v3012 = vadd.f32 %v2825, %v3011
        %v3013 = vpop.f32.mrb[0].mxu0
        %3014 = vmatprep.mubr.bf16.mxu0 %v2771
        %3015 = vmatmul.mubr.bf16.gmra.mrb[0].mxu0 %v2770
        %v3016 = vpop.f32.mrb[0].mxu0
        %v3017 = vadd.f32 %v2826, %v3016
        %v3018 = vpop.f32.mrb[0].mxu0
        %v3019 = vpop.f32.mrb[0].mxu0
        %v3020 = vadd.f32 %v2827, %v3019
        %v3021 = vpop.f32.mrb[0].mxu0
        %3022 = vmatprep.mubr.bf16.mxu0 %v2774
        %3023 = vmatmul.mubr.bf16.gmra.mrb[0].mxu0 %v2773
        %v3024 = vpop.f32.mrb[0].mxu0
        %v3025 = vadd.f32 %v2828, %v3024
        %v3026 = vpop.f32.mrb[0].mxu0
        %v3027 = vpop.f32.mrb[0].mxu0
        %v3028 = vadd.f32 %v2829, %v3027
        %v3029 = vpop.f32.mrb[0].mxu0
        %3030 = vdwg.mxu0
        %3031 = vmatprep.subr.bf16.mxu0 0
        %3032 = vmatpush1.bf16.msra.mxu0 %v2942
        %3033 = vmatprep.subr.bf16.mxu0 0
        %3034 = vmatpush1.bf16.msra.mxu0 %v2943
        %3035 = vmatprep.subr.bf16.mxu0 0
        %3036 = vmatpush1.bf16.msra.mxu0 %v2944
        %3037 = vmatprep.subr.bf16.mxu0 0
        %3038 = vmatpush1.bf16.msra.mxu0 %v2945
        %3039 = vmatprep.subr.bf16.mxu0 0
        %3040 = vmatpush1.bf16.msra.mxu0 %v2946
        %3041 = vmatprep.subr.bf16.mxu0 0
        %3042 = vmatpush1.bf16.msra.mxu0 %v2947
        %3043 = vmatprep.subr.bf16.mxu0 0
        %3044 = vmatpush1.bf16.msra.mxu0 %v2948
        %3045 = vmatprep.subr.bf16.mxu0 0
        %3046 = vmatpush1.bf16.msra.mxu0 %v2949
        %3047 = vmatprep.subr.bf16.mxu0 0
        %3048 = vmatpush1.bf16.msra.mxu0 0
        %3049 = vmatprep.subr.bf16.mxu0 0
        %3050 = vmatpush1.bf16.msra.mxu0 0
        %3051 = vmatprep.subr.bf16.mxu0 0
        %3052 = vmatpush1.bf16.msra.mxu0 0
        %3053 = vmatprep.subr.bf16.mxu0 0
        %3054 = vmatpush1.bf16.msra.mxu0 0
        %3055 = vmatprep.subr.bf16.mxu0 0
        %3056 = vmatpush1.bf16.msra.mxu0 0
        %3057 = vmatprep.subr.bf16.mxu0 0
        %3058 = vmatpush1.bf16.msra.mxu0 0
        %3059 = vmatprep.subr.bf16.mxu0 0
        %3060 = vmatpush1.bf16.msra.mxu0 0
        %3061 = vmatprep.subr.bf16.mxu0 0
        %3062 = vmatpush1.bf16.msra.mxu0 0
        %3063 = vmatprep.mubr.bf16.mxu0 0
        %3064 = vmatmul.mubr.bf16.gmra.mrb[0].mxu0 %v2769
        %v3065 = vpop.f32.mrb[0].mxu0
        %v3066 = vadd.f32 %v3009, %v3065
        %v3067 = vpop.f32.mrb[0].mxu0
        %v3068 = vpop.f32.mrb[0].mxu0
        %v3069 = vadd.f32 %v3012, %v3068
        %v3070 = vpop.f32.mrb[0].mxu0
        %3071 = vmatprep.mubr.bf16.mxu0 0
        %3072 = vmatmul.mubr.bf16.gmra.mrb[0].mxu0 %v2772
        %v3073 = vpop.f32.mrb[0].mxu0
        %v3074 = vadd.f32 %v3017, %v3073
        %v3075 = vpop.f32.mrb[0].mxu0
        %v3076 = vpop.f32.mrb[0].mxu0
        %v3077 = vadd.f32 %v3020, %v3076
        %v3078 = vpop.f32.mrb[0].mxu0
        %3079 = vmatprep.mubr.bf16.mxu0 0
        %3080 = vmatmul.mubr.bf16.gmra.mrb[0].mxu0 %v2775
        %v3081 = vpop.f32.mrb[0].mxu0
        %v3082 = vadd.f32 %v3025, %v3081
        %v3083 = vpop.f32.mrb[0].mxu0
        %v3084 = vpop.f32.mrb[0].mxu0
        %v3085 = vadd.f32 %v3028, %v3084
        %v3086 = vpop.f32.mrb[0].mxu0
        %3087 = vdwg.mxu0
        %v3088 = vmax.f32 %v3066, 0.0
        %v3089 = vmax.f32 %v3069, 0.0
        %v3090 = vmax.f32 %v3074, 0.0
        %v3091 = vmax.f32 %v3077, 0.0
        %v3092 = vmax.f32 %v3082, 0.0
        %v3093 = vmax.f32 %v3085, 0.0
        %3094 = vadd.xlane.f32.xlu0 %v3088
        %v3095 = vpop.xlane.xlu0 %3094
        %3096 = vadd.xlane.f32.xlu0 %v3089
        %v3097 = vpop.xlane.xlu0 %3096
        %3098 = vadd.xlane.f32.xlu0 %v3090
        %v3099 = vpop.xlane.xlu0 %3098
        %3100 = vadd.xlane.f32.xlu0 %v3091
        %v3101 = vpop.xlane.xlu0 %3100
        %3102 = vadd.xlane.f32.xlu0 %v3092
        %v3103 = vpop.xlane.xlu0 %3102
        %3104 = vadd.xlane.f32.xlu0 %v3093
        %v3105 = vpop.xlane.xlu0 %3104
        %v3106 = vrcp.pop 128.0
        %v3107 = vmul.f32 %v3095, %v3106
        %v3108 = vmul.f32 %v3097, %v3106
        %v3109 = vmul.f32 %v3099, %v3106
        %v3110 = vmul.f32 %v3101, %v3106
        %v3111 = vmul.f32 %v3103, %v3106
        %v3112 = vmul.f32 %v3105, %v3106
        %v3113 = vsub.f32 %v3088, %v3107
        %v3114 = vsub.f32 %v3089, %v3108
        %v3115 = vsub.f32 %v3090, %v3109
        %v3116 = vsub.f32 %v3091, %v3110
        %v3117 = vsub.f32 %v3092, %v3111
        %v3118 = vsub.f32 %v3093, %v3112
        %v3119 = vmul.f32 %v3113, %v3113
        %v3120 = vmul.f32 %v3114, %v3114
        %v3121 = vmul.f32 %v3115, %v3115
        %v3122 = vmul.f32 %v3116, %v3116
        %v3123 = vmul.f32 %v3117, %v3117
        %v3124 = vmul.f32 %v3118, %v3118
        %3125 = vadd.xlane.f32.xlu0 %v3119
        %v3126 = vpop.xlane.xlu0 %3125
        %3127 = vadd.xlane.f32.xlu0 %v3120
        %v3128 = vpop.xlane.xlu0 %3127
        %3129 = vadd.xlane.f32.xlu0 %v3121
        %v3130 = vpop.xlane.xlu0 %3129
        %3131 = vadd.xlane.f32.xlu0 %v3122
        %v3132 = vpop.xlane.xlu0 %3131
        %3133 = vadd.xlane.f32.xlu0 %v3123
        %v3134 = vpop.xlane.xlu0 %3133
        %3135 = vadd.xlane.f32.xlu0 %v3124
        %v3136 = vpop.xlane.xlu0 %3135
        %v3137 = vmul.f32 %v3126, %v3106
        %v3138 = vmul.f32 %v3128, %v3106
        %v3139 = vmul.f32 %v3130, %v3106
        %v3140 = vmul.f32 %v3132, %v3106
        %v3141 = vmul.f32 %v3134, %v3106
        %v3142 = vmul.f32 %v3136, %v3106
        %v3143 = vadd.f32 %v3137, 1e-05
        %v3144 = vadd.f32 %v3138, 1e-05
        %v3145 = vadd.f32 %v3139, 1e-05
        %v3146 = vadd.f32 %v3140, 1e-05
        %v3147 = vadd.f32 %v3141, 1e-05
        %v3148 = vadd.f32 %v3142, 1e-05
        %v3149 = vrsqrt.pop %v3143
        %v3150 = vrsqrt.pop %v3144
        %v3151 = vrsqrt.pop %v3145
        %v3152 = vrsqrt.pop %v3146
        %v3153 = vrsqrt.pop %v3147
        %v3154 = vrsqrt.pop %v3148
        %v3155 = vmul.f32 %v3113, %v3149
        %v3156 = vmul.f32 %v3114, %v3150
        %v3157 = vmul.f32 %v3115, %v3151
        %v3158 = vmul.f32 %v3116, %v3152
        %v3159 = vmul.f32 %v3117, %v3153
        %v3160 = vmul.f32 %v3118, %v3154
        %v3161 = vld [vmem:[%s492] sm:$0xff]
        %v3162 = vld [vmem:[%s492 + $0x8] sm:$0xff]
        %v3163 = vld [vmem:[%s492 + $0x10] sm:$0xff]
        %v3164 = vld [vmem:[%s492 + $0x18] sm:$0xff]
        %v3165 = vld [vmem:[%s492 + $0x20] sm:$0xff]
        %v3166 = vld [vmem:[%s492 + $0x28] sm:$0xff]
        %v3167 = vmul.f32 %v3155, %v3161
        %v3168 = vmul.f32 %v3156, %v3162
        %v3169 = vmul.f32 %v3157, %v3163
        %v3170 = vmul.f32 %v3158, %v3164
        %v3171 = vmul.f32 %v3159, %v3165
        %v3172 = vmul.f32 %v3160, %v3166
        %v3173 = vld [vmem:[%s501] sm:$0xff]
        %v3174 = vld [vmem:[%s501 + $0x8] sm:$0xff]
        %v3175 = vld [vmem:[%s501 + $0x10] sm:$0xff]
        %v3176 = vld [vmem:[%s501 + $0x18] sm:$0xff]
        %v3177 = vld [vmem:[%s501 + $0x20] sm:$0xff]
        %v3178 = vld [vmem:[%s501 + $0x28] sm:$0xff]
        %v3179 = vadd.f32 %v3167, %v3173
        %v3180 = vadd.f32 %v3168, %v3174
        %v3181 = vadd.f32 %v3169, %v3175
        %v3182 = vadd.f32 %v3170, %v3176
        %v3183 = vadd.f32 %v3171, %v3177
        %v3184 = vadd.f32 %v3172, %v3178
        %v3185 = vld [vmem:[%s3] sm:$0xff]
        %v3186 = vld [vmem:[%s3 + $0x8] sm:$0xff]
        %v3187 = vld [vmem:[%s3 + $0x10] sm:$0xff]
        %v3188 = vld [vmem:[%s3 + $0x18] sm:$0xff]
        %v3189 = vld [vmem:[%s3 + $0x20] sm:$0xff]
        %v3190 = vld [vmem:[%s3 + $0x28] sm:$0xff]
        %v3191 = vld [vmem:[%s3 + $0x30] sm:$0xff]
        %v3192 = vld [vmem:[%s3 + $0x38] sm:$0xff]
        %v3193 = vld [vmem:[%s3 + $0x40] sm:$0xff]
        %v3194 = vld [vmem:[%s3 + $0x48] sm:$0xff]
        %v3195 = vld [vmem:[%s3 + $0x50] sm:$0xff]
        %v3196 = vld [vmem:[%s3 + $0x58] sm:$0xff]
        %v3198 = vsel %vm1103, %v3185, 0
        %v3201 = vsel %vm1103, %v3186, 0
        %v3204 = vsel %vm1103, %v3187, 0
        %v3207 = vsel %vm1103, %v3188, 0
        %v3210 = vsel %vm1103, %v3189, 0
        %v3213 = vsel %vm1103, %v3190, 0
        %v3216 = vsel %vm1103, %v3191, 0
        %v3219 = vsel %vm1103, %v3192, 0
        %v3222 = vsel %vm1103, %v3193, 0
        %v3225 = vsel %vm1103, %v3194, 0
        %v3228 = vsel %vm1103, %v3195, 0
        %v3231 = vsel %vm1103, %v3196, 0
        %3233 = vmatprep.subr.mxu0 0.0
        %3234 = vmatpush1.msra.mxu0 %v3179
        %3235 = vmatprep.subr.mxu0 0.0
        %3236 = vmatpush1.msra.mxu0 %v3180
        %3237 = vmatprep.subr.mxu0 0.0
        %3238 = vmatpush1.msra.mxu0 %v3181
        %3239 = vmatprep.subr.mxu0 0.0
        %3240 = vmatpush1.msra.mxu0 %v3182
        %3241 = vmatprep.subr.mxu0 0.0
        %3242 = vmatpush1.msra.mxu0 %v3183
        %3243 = vmatprep.subr.mxu0 0.0
        %3244 = vmatpush1.msra.mxu0 %v3184
        %3245 = vmatprep.subr.mxu0 0.0
        %3246 = vmatpush1.msra.mxu0 0.0
        %3247 = vmatprep.subr.mxu0 0.0
        %3248 = vmatpush1.msra.mxu0 0.0
        %3249 = vmatprep.subr.mxu0 0.0
        %3250 = vmatpush1.msra.mxu0 0.0
        %3251 = vmatprep.subr.mxu0 0.0
        %3252 = vmatpush1.msra.mxu0 0.0
        %3253 = vmatprep.subr.mxu0 0.0
        %3254 = vmatpush1.msra.mxu0 0.0
        %3255 = vmatprep.subr.mxu0 0.0
        %3256 = vmatpush1.msra.mxu0 0.0
        %3257 = vmatprep.subr.mxu0 0.0
        %3258 = vmatpush1.msra.mxu0 0.0
        %3259 = vmatprep.subr.mxu0 0.0
        %3260 = vmatpush1.msra.mxu0 0.0
        %3261 = vmatprep.subr.mxu0 0.0
        %3262 = vmatpush1.msra.mxu0 0.0
        %3263 = vmatprep.subr.mxu0 0.0
        %3264 = vmatpush1.msra.mxu0 0.0
        %3265 = vmatprep.subr.mxu0 0.0
        %3266 = vmatpush1.msra.mxu0 0.0
        %3267 = vmatprep.subr.mxu0 0.0
        %3268 = vmatpush1.msra.mxu0 0.0
        %3269 = vmatprep.subr.mxu0 0.0
        %3270 = vmatpush1.msra.mxu0 0.0
        %3271 = vmatprep.subr.mxu0 0.0
        %3272 = vmatpush1.msra.mxu0 0.0
        %3273 = vmatprep.subr.mxu0 0.0
        %3274 = vmatpush1.msra.mxu0 0.0
        %3275 = vmatprep.subr.mxu0 0.0
        %3276 = vmatpush1.msra.mxu0 0.0
        %3277 = vmatprep.subr.mxu0 0.0
        %3278 = vmatpush1.msra.mxu0 0.0
        %3279 = vmatprep.subr.mxu0 0.0
        %3280 = vmatpush1.msra.mxu0 0.0
        %3281 = vmatprep.subr.mxu0 0.0
        %3282 = vmatpush1.msra.mxu0 0.0
        %3283 = vmatprep.subr.mxu0 0.0
        %3284 = vmatpush1.msra.mxu0 0.0
        %3285 = vmatprep.subr.mxu0 0.0
        %3286 = vmatpush1.msra.mxu0 0.0
        %3287 = vmatprep.subr.mxu0 0.0
        %3288 = vmatpush1.msra.mxu0 0.0
        %3289 = vmatprep.subr.mxu0 0.0
        %3290 = vmatpush1.msra.mxu0 0.0
        %3291 = vmatprep.subr.mxu0 0.0
        %3292 = vmatpush1.msra.mxu0 0.0
        %3293 = vmatprep.subr.mxu0 0.0
        %3294 = vmatpush1.msra.mxu0 0.0
        %3295 = vmatprep.subr.mxu0 0.0
        %3296 = vmatpush1.msra.mxu0 0.0
        %3297 = vmatprep.mubr.f32.mxu0 0.0
        %3298 = vmatmul.mubr.f32.gmra.mrb[0].mxu0 %v3198
        %v3299 = vpop.f32.mrb[0].mxu0
        %v3300 = vadd.f32 0.0, %v3299
        %v3301 = vpop.f32.mrb[0].mxu0
        %3302 = vmatprep.mubr.f32.mxu0 0.0
        %3303 = vmatmul.mubr.f32.gmra.mrb[0].mxu0 %v3201
        %v3304 = vpop.f32.mrb[0].mxu0
        %v3305 = vadd.f32 0.0, %v3304
        %v3306 = vpop.f32.mrb[0].mxu0
        %3307 = vmatprep.mubr.f32.mxu0 0.0
        %3308 = vmatmul.mubr.f32.gmra.mrb[0].mxu0 %v3204
        %v3309 = vpop.f32.mrb[0].mxu0
        %v3310 = vadd.f32 0.0, %v3309
        %v3311 = vpop.f32.mrb[0].mxu0
        %3312 = vmatprep.mubr.f32.mxu0 0.0
        %3313 = vmatmul.mubr.f32.gmra.mrb[0].mxu0 %v3207
        %v3314 = vpop.f32.mrb[0].mxu0
        %v3315 = vadd.f32 0.0, %v3314
        %v3316 = vpop.f32.mrb[0].mxu0
        %3317 = vmatprep.mubr.f32.mxu0 0.0
        %3318 = vmatmul.mubr.f32.gmra.mrb[0].mxu0 %v3210
        %v3319 = vpop.f32.mrb[0].mxu0
        %v3320 = vadd.f32 0.0, %v3319
        %v3321 = vpop.f32.mrb[0].mxu0
        %3322 = vmatprep.mubr.f32.mxu0 0.0
        %3323 = vmatmul.mubr.f32.gmra.mrb[0].mxu0 %v3213
        %v3324 = vpop.f32.mrb[0].mxu0
        %v3325 = vadd.f32 0.0, %v3324
        %v3326 = vpop.f32.mrb[0].mxu0
        %3327 = vmatprep.mubr.f32.mxu0 0.0
        %3328 = vmatmul.mubr.f32.gmra.mrb[0].mxu0 %v3216
        %v3329 = vpop.f32.mrb[0].mxu0
        %v3330 = vadd.f32 0.0, %v3329
        %v3331 = vpop.f32.mrb[0].mxu0
        %3332 = vmatprep.mubr.f32.mxu0 0.0
        %3333 = vmatmul.mubr.f32.gmra.mrb[0].mxu0 %v3219
        %v3334 = vpop.f32.mrb[0].mxu0
        %v3335 = vadd.f32 0.0, %v3334
        %v3336 = vpop.f32.mrb[0].mxu0
        %3337 = vmatprep.mubr.f32.mxu0 0.0
        %3338 = vmatmul.mubr.f32.gmra.mrb[0].mxu0 %v3222
        %v3339 = vpop.f32.mrb[0].mxu0
        %v3340 = vadd.f32 0.0, %v3339
        %v3341 = vpop.f32.mrb[0].mxu0
        %3342 = vmatprep.mubr.f32.mxu0 0.0
        %3343 = vmatmul.mubr.f32.gmra.mrb[0].mxu0 %v3225
        %v3344 = vpop.f32.mrb[0].mxu0
        %v3345 = vadd.f32 0.0, %v3344
        %v3346 = vpop.f32.mrb[0].mxu0
        %3347 = vmatprep.mubr.f32.mxu0 0.0
        %3348 = vmatmul.mubr.f32.gmra.mrb[0].mxu0 %v3228
        %v3349 = vpop.f32.mrb[0].mxu0
        %v3350 = vadd.f32 0.0, %v3349
        %v3351 = vpop.f32.mrb[0].mxu0
        %3352 = vmatprep.mubr.f32.mxu0 0.0
        %3353 = vmatmul.mubr.f32.gmra.mrb[0].mxu0 %v3231
        %v3354 = vpop.f32.mrb[0].mxu0
        %v3355 = vadd.f32 0.0, %v3354
        %v3356 = vpop.f32.mrb[0].mxu0
        %3357 = vdwg.mxu0
        %v3358 = vadd.f32 %v627, %v3300
        %v3359 = vadd.f32 %v628, %v3305
        %v3360 = vadd.f32 %v629, %v3310
        %v3361 = vadd.f32 %v630, %v3315
        %v3362 = vadd.f32 %v631, %v3320
        %v3363 = vadd.f32 %v632, %v3325
        %v3364 = vadd.f32 %v633, %v3330
        %v3365 = vadd.f32 %v634, %v3335
        %v3366 = vadd.f32 %v635, %v3340
        %v3367 = vadd.f32 %v636, %v3345
        %v3368 = vadd.f32 %v637, %v3350
        %v3369 = vadd.f32 %v638, %v3355
        %3370 = vst [vmem:[#allocation2] sm:$0xff] %v3358
        %3371 = vst [vmem:[#allocation2 + $0x8] sm:$0xff] %v3359
        %3372 = vst [vmem:[#allocation2 + $0x10] sm:$0xff] %v3360
        %3373 = vst [vmem:[#allocation2 + $0x18] sm:$0xff] %v3361
        %3374 = vst [vmem:[#allocation2 + $0x20] sm:$0xff] %v3362
        %3375 = vst [vmem:[#allocation2 + $0x28] sm:$0xff] %v3363
        %3376 = vst [vmem:[#allocation2 + $0x30] sm:$0xff] %v3364
        %3377 = vst [vmem:[#allocation2 + $0x38] sm:$0xff] %v3365
        %3378 = vst [vmem:[#allocation2 + $0x40] sm:$0xff] %v3366
        %3379 = vst [vmem:[#allocation2 + $0x48] sm:$0xff] %v3367
        %3380 = vst [vmem:[#allocation2 + $0x50] sm:$0xff] %v3368
        %3381 = vst [vmem:[#allocation2 + $0x58] sm:$0xff] %v3369
        %p3382 = scmp.eq.s32.totalorder %s26, 1
        // Predicated region
        $region89: #{tpu_custom_call.1} parent=67 // pred_check
          %p3383 = pneg %p3382
        $region90: #{tpu_custom_call.1} parent=67 // pred_check_branch
          %3385 = sbr.rel (%p3383) target = $region92
        $region91: #{tpu_custom_call.1} parent=67 // pred_region
          %3386 = vst [vmem:[#allocation10] sm:$0xff] %v3358
          %3387 = vst [vmem:[#allocation10 + $0x8] sm:$0xff] %v3359
          %3388 = vst [vmem:[#allocation10 + $0x10] sm:$0xff] %v3360
          %3389 = vst [vmem:[#allocation10 + $0x18] sm:$0xff] %v3361
          %3390 = vst [vmem:[#allocation10 + $0x20] sm:$0xff] %v3362
          %3391 = vst [vmem:[#allocation10 + $0x28] sm:$0xff] %v3363
          %3392 = vst [vmem:[#allocation10 + $0x30] sm:$0xff] %v3364
          %3393 = vst [vmem:[#allocation10 + $0x38] sm:$0xff] %v3365
          %3394 = vst [vmem:[#allocation10 + $0x40] sm:$0xff] %v3366
          %3395 = vst [vmem:[#allocation10 + $0x48] sm:$0xff] %v3367
          %3396 = vst [vmem:[#allocation10 + $0x50] sm:$0xff] %v3368
          %3397 = vst [vmem:[#allocation10 + $0x58] sm:$0xff] %v3369
        $region92: #{tpu_custom_call.1} parent=67 // pred_fallthru
          _
        // Predicated region
        $region93: #{tpu_custom_call.1} parent=67 // pred_check
          %p3398 = pneg %p331
        $region94: #{tpu_custom_call.1} parent=67 // pred_check_branch
          %3400 = sbr.rel (%p3398) target = $region96
        $region95: #{tpu_custom_call.1} parent=67 // pred_region
          %s3402 = ssub.s32 1536, 1536
          %3403 = vsyncadd [#allocation5], %s3402
          %s3404 = sshll.u32 [#allocation10], 4
          %s3405 = int_to_ptr.vmem [resolvable:$true] %s3404
          %3410 = dma.vmem_to_hbm [thread:$0]  %s3405, 1536, %s12, [#allocation5], 128, 128, 8
        $region96: #{tpu_custom_call.1} parent=67 // pred_fallthru
          _
        // Predicated region
        $region97: #{tpu_custom_call.1} parent=67 // pred_check
          %p3411 = pneg %p331
        $region98: #{tpu_custom_call.1} parent=67 // pred_check_branch
          %3413 = sbr.rel (%p3411) target = $region100
        $region99: #{tpu_custom_call.1} parent=67 // pred_region
          %3414 = dma.done [#allocation5], 1536
        $region100: #{tpu_custom_call.1} parent=67 // pred_fallthru
          _
      $region68: #{tpu_custom_call.1} parent=5 // pred_fallthru
        _
      %p3415 = scmp.le.s32.totalorder 2, %s21
      // Predicated region
      $region101: #{tpu_custom_call.1} parent=5 // pred_check
        %p3416 = pneg %p3415
      $region102: #{tpu_custom_call.1} parent=5 // pred_check_branch
        %3418 = sbr.rel (%p3416) target = $region104
      $region103: #{tpu_custom_call.1} parent=5 // pred_region
        %s3419 = ssub.s32 %s21, 2
      $region104: #{tpu_custom_call.1} parent=5 // pred_fallthru
        _
    $region6: #{tpu_custom_call.1} parent=1 // loop_footer
      %s25 = sadd.s32 1, %s21
    $region7: #{tpu_custom_call.1} parent=1 // loop_footer_branch
      %20 = sbr.rel target = $region3
    $region8: #{tpu_custom_call.1} parent=1 // loop_exit
      _
    %3420 = vsyncpa [#allocation4], 1
    %s3421 = scalar_lea.sflag [#allocation4], 1
    %3422 = vsyncpa %s3421, 1
    %3423 = vsyncpa [#allocation7], 1
    %3424 = vsyncpa [#allocation5], 1
    %s3425 = scalar_lea.sflag [#allocation5], 1
    %3426 = vsyncpa %s3425, 1

</llo_original>
